<compile_context>
chip_gen: v6e
topology: v6e:2x2x1
jax: 0.10.0
libtpu: 0.0.40
codegen_flags: <defaults>
</compile_context>

<pallas_src>
import functools

import jax
import jax.numpy as jnp
from jax.experimental import pallas as pl
from jax.experimental.pallas import tpu as pltpu


# ---------------------------------------------------------------------------
# Kernels
# ---------------------------------------------------------------------------
def _lstm_recurrence_kernel(g_ref, whh_ref, hout_ref, h_scr, c_scr,
                            *, hidden_dim, block_t, unroll):
    """One grid step = `block_t` LSTM time steps for one batch chunk.

    g_ref   : (bt, bb, 4H) bf16  precomputed x@W_ih + (b_ih+b_hh), time chunk
    whh_ref : (H, 4H)      bf16  resident recurrent weight
    hout_ref: (bb, H)      bf16  h at the final time step (last chunk only)
    h_scr/c_scr : (bb, H)  f32   state carried across time chunks in VMEM
    """
    t_chunk = pl.program_id(1)

    @pl.when(t_chunk == 0)
    def _():
        h_scr[...] = jnp.zeros_like(h_scr)
        c_scr[...] = jnp.zeros_like(c_scr)

    H = hidden_dim
    whh = whh_ref[...]          # hoisted: loaded once per grid step

    def step(s, carry):
        h, c = carry            # f32 state
        # Only the data-dependent h @ W_hh^T sits on the serial critical path.
        # bf16 operands hit the native MXU path; accumulate in f32.  The
        # elementwise gate math is done in f32 (v5e VPU has no bf16 VALU).
        # (Optional further v5e/v6e win: pin W_hh via matmul_push_rhs once per
        # chunk instead of jnp.dot re-pushing weights each step.)
        gates = (g_ref[s].astype(jnp.float32)
                 + jnp.dot(h.astype(whh.dtype), whh,
                           preferred_element_type=jnp.float32))
        # PyTorch gate layout [i, f, g, o]; bias already folded into g_ref.
        i_g = jax.nn.sigmoid(gates[:, 0 * H:1 * H])
        f_g = jax.nn.sigmoid(gates[:, 1 * H:2 * H])
        g_g = jnp.tanh(gates[:, 2 * H:3 * H])
        o_g = jax.nn.sigmoid(gates[:, 3 * H:4 * H])
        c = f_g * c + i_g * g_g
        h = o_g * jnp.tanh(c)
        return (h, c)

    h, c = jax.lax.fori_loop(0, block_t, step,
                             (h_scr[...], c_scr[...]), unroll=unroll)
    h_scr[...] = h
    c_scr[...] = c

    @pl.when(t_chunk == pl.num_programs(1) - 1)
    def _():
        hout_ref[...] = h.astype(hout_ref.dtype)


def _fc_kernel(h_ref, w_ref, b_ref, out_ref):
    """Lane-dense FC tile: (B,H)bf16 @ (H,bv)bf16 + (1,bv)f32 -> (B,bv)f32."""
    out_ref[...] = (
        jnp.dot(h_ref[...], w_ref[...], preferred_element_type=jnp.float32)
        + b_ref[...]
    ).astype(out_ref.dtype)


# ---------------------------------------------------------------------------
# Tiling helpers
# ---------------------------------------------------------------------------
def _vmem_budget_bytes():
    """~75% of physical per-core VMEM (~48 MiB on v7x, ~96 MiB on v5e/v6e)."""
    try:
        cap = int(pltpu.get_tpu_info().vmem_capacity_bytes)
    except Exception:
        cap = 128 << 20
    return (cap * 3) // 4


def _largest_divisor_leq(n, cap):
    cap = max(1, min(n, cap))
    for d in range(cap, 0, -1):
        if n % d == 0:
            return d
    return 1


# ---------------------------------------------------------------------------
# Wrapper
# ---------------------------------------------------------------------------
def lstm_next_token_predictor(input_ids, params, *, block_t=None, block_b=None,
                              block_v=None, compute_dtype=jnp.bfloat16):
    """input_ids: (B, T) int32 -> logits (B, vocab_size) float32."""
    emb = params["embedding"]                       # (V, E)  f32
    w_ih_t = params["w_ih_t"]                       # (E, 4H) f32 (XLA only)
    w_hh = params["w_hh_t"].astype(compute_dtype)   # (H, 4H) kernel-resident
    w_fc = params["w_fc_t"].astype(compute_dtype)   # (H, V)
    b_fc = params["b_fc"].astype(jnp.float32)       # (1, V)
    b_gates = (params["b_ih"] + params["b_hh"]).astype(jnp.float32)  # (1, 4H)

    B, T = input_ids.shape
    E = emb.shape[1]
    H = params["w_hh_t"].shape[0]
    V = params["w_fc_t"].shape[1]
    gdt = jnp.dtype(compute_dtype).itemsize
    bmin = max(8, 32 // gdt)        # min legal sublane tile (16 for bf16)

    # ---- Hoisted (non-recurrent) work in XLA: time-major gather + projection
    x_tm = emb[input_ids.T]                                   # (T, B, E) f32
    gates_tm = x_tm.reshape(T * B, E) @ w_ih_t + b_gates      # f32 accumulate
    gates_tm = gates_tm.astype(compute_dtype).reshape(T, B, 4 * H)

    # ---- Tile selection from the VMEM byte budget ---------------------------
    budget = _vmem_budget_bytes()

    def rec_bytes(bt_, bb_):
        return (2 * bt_ * bb_ * 4 * H * gdt     # gate stream (double-buffered)
                + 2 * H * 4 * H * gdt           # W_hh (conservative: 2 bufs)
                + 2 * bb_ * H * gdt             # h_last output block
                + 2 * bb_ * H * 4)              # h/c f32 scratch

    # Batch tile: as large as possible (fills the MXU M dim on the serial
    # critical path); multiple of the sublane tile unless it is the full B.
    bb_cap = block_b if block_b is not None else min(B, 256)
    bb_cands = [d for d in range(min(B, bb_cap), 0, -1)
                if B % d == 0 and (d % bmin == 0 or d == B)]
    if not bb_cands:
        bb_cands = [B]              # full-extent block is always tiling-legal
    bb = next((d for d in bb_cands if rec_bytes(1, d) <= budget), bb_cands[-1])
    # NOTE(v7x): choose block_b = B // 2 (when legal) so nb >= 2 and the
    # "parallel" batch axis shards across both TensorCores.

    # Time chunk: biggest divisor of T whose streamed gate chunk fits the
    # budget (amortizes ~0.35us/grid-step, lengthens the gate-stream DMA).
    bt_cap = block_t if block_t is not None else 128
    spare = budget - rec_bytes(0, bb)
    bt_max = max(1, spare // max(1, 2 * bb * 4 * H * gdt))
    bt = _largest_divisor_leq(T, min(bt_cap, bt_max))
    nb, nt = B // bb, T // bt
    unroll = bt if bt <= 16 else 8  # avoid code/vreg bloat at large bt*bb

    rec_vmem = int(min(budget, max(32 << 20, rec_bytes(bt, bb) + (8 << 20))))

    # ---- Recurrence: serial in time (inner "arbitrary"), parallel in batch --
    def run_recurrence(single_buffer_whh):
        if single_buffer_whh:
            whh_spec = pl.BlockSpec((H, 4 * H), lambda b, t: (0, 0),
                                    pipeline_mode=pl.Buffered(1))
        else:
            whh_spec = pl.BlockSpec((H, 4 * H), lambda b, t: (0, 0))
        return pl.pallas_call(
            functools.partial(_lstm_recurrence_kernel, hidden_dim=H,
                              block_t=bt, unroll=unroll),
            out_shape=jax.ShapeDtypeStruct((B, H), compute_dtype),
            grid_spec=pltpu.PrefetchScalarGridSpec(
                num_scalar_prefetch=0,
                grid=(nb, nt),
                in_specs=[
                    pl.BlockSpec((bt, bb, 4 * H), lambda b, t: (t, b, 0)),
                    whh_spec,
                ],
                out_specs=pl.BlockSpec((bb, H), lambda b, t: (b, 0)),
                scratch_shapes=[
                    pltpu.VMEM((bb, H), jnp.float32),   # h state
                    pltpu.VMEM((bb, H), jnp.float32),   # c state
                ],
            ),
            compiler_params=pltpu.CompilerParams(
                # Time MUST remain the innermost "arbitrary" axis: the h/c
                # scratch carries state across time chunks and is re-zeroed
                # only at t_chunk == 0.
                dimension_semantics=("parallel", "arbitrary"),
                vmem_limit_bytes=rec_vmem),
        )(gates_tm, w_hh)

    try:
        h_last = run_recurrence(True)    # grid-invariant W_hh single-buffered
    except Exception:                    # fallback if Buffered(1) unsupported
        h_last = run_recurrence(False)

    # ---- FC projection: lane-dense Pallas matmul tiled over the vocab axis --
    bv_cap = block_v if block_v is not None else 4096

    def fc_bytes(bv_):
        return (B * H * gdt                  # h (grid-invariant)
                + 2 * H * bv_ * gdt          # W_fc tile
                + 2 * bv_ * 4                # bias tile
                + 2 * B * bv_ * 4)           # logits tile

    bv_cands = [d for d in range(V, 0, -1)
                if V % d == 0 and (d % 128 == 0 or d == V)]
    ok = [d for d in bv_cands if d <= bv_cap and fc_bytes(d) <= budget]
    if not ok:
        ok = [d for d in bv_cands if fc_bytes(d) <= budget] or bv_cands[-1:]
    bv = ok[0]
    nv = V // bv
    fc_vmem = int(min(budget, max(32 << 20, fc_bytes(bv) + (8 << 20))))

    def run_fc(single_buffer_h):
        if single_buffer_h:
            h_spec = pl.BlockSpec((B, H), lambda j: (0, 0),
                                  pipeline_mode=pl.Buffered(1))
        else:
            h_spec = pl.BlockSpec((B, H), lambda j: (0, 0))
        return pl.pallas_call(
            _fc_kernel,
            out_shape=jax.ShapeDtypeStruct((B, V), jnp.float32),
            grid_spec=pltpu.PrefetchScalarGridSpec(
                num_scalar_prefetch=0,
                grid=(nv,),
                in_specs=[
                    h_spec,
                    pl.BlockSpec((H, bv), lambda j: (0, j)),
                    pl.BlockSpec((1, bv), lambda j: (0, j)),
                ],
                out_specs=pl.BlockSpec((B, bv), lambda j: (0, j)),
            ),
            compiler_params=pltpu.CompilerParams(
                dimension_semantics=("parallel",),
                vmem_limit_bytes=fc_vmem),
        )(h_last, w_fc, b_fc)

    try:
        logits = run_fc(True)
    except Exception:
        logits = run_fc(False)
    return logits


# ---------------------------------------------------------------------------
# Params / reference
# ---------------------------------------------------------------------------
def init_params(key, vocab_size, embedding_dim, hidden_dim):
    """Deterministic init matching PyTorch layer shapes/init schemes."""
    k_emb, k_wih, k_whh, k_bih, k_bhh, k_wfc, k_bfc = jax.random.split(key, 7)
    bound = 1.0 / jnp.sqrt(hidden_dim)
    return {
        # nn.Embedding: N(0, 1)
        "embedding": jax.random.normal(
            k_emb, (vocab_size, embedding_dim), jnp.float32),
        # nn.LSTM: U(-1/sqrt(H), 1/sqrt(H)); stored pre-transposed for x @ W.
        "w_ih_t": jax.random.uniform(
            k_wih, (embedding_dim, 4 * hidden_dim), jnp.float32, -bound, bound),
        "w_hh_t": jax.random.uniform(
            k_whh, (hidden_dim, 4 * hidden_dim), jnp.float32, -bound, bound),
        "b_ih": jax.random.uniform(
            k_bih, (1, 4 * hidden_dim), jnp.float32, -bound, bound),
        "b_hh": jax.random.uniform(
            k_bhh, (1, 4 * hidden_dim), jnp.float32, -bound, bound),
        # nn.Linear: U(-1/sqrt(in), 1/sqrt(in)); stored pre-transposed.
        "w_fc_t": jax.random.uniform(
            k_wfc, (hidden_dim, vocab_size), jnp.float32, -bound, bound),
        "b_fc": jax.random.uniform(
            k_bfc, (1, vocab_size), jnp.float32, -bound, bound),
    }


def reference_forward(input_ids, params):
    """Pure-JAX f32 reference (matches the PyTorch forward semantics)."""
    emb = params["embedding"][input_ids]            # (B, T, E)
    B, T, E = emb.shape
    H = params["w_hh_t"].shape[0]

    def step(carry, x_t):
        h, c = carry
        gates = (x_t @ params["w_ih_t"] + h @ params["w_hh_t"]
                 + params["b_ih"] + params["b_hh"])
        i_g = jax.nn.sigmoid(gates[:, 0 * H:1 * H])
        f_g = jax.nn.sigmoid(gates[:, 1 * H:2 * H])
        g_g = jnp.tanh(gates[:, 2 * H:3 * H])
        o_g = jax.nn.sigmoid(gates[:, 3 * H:4 * H])
        c_new = f_g * c + i_g * g_g
        h_new = o_g * jnp.tanh(c_new)
        return (h_new, c_new), None

    h0 = jnp.zeros((B, H), jnp.float32)
    c0 = jnp.zeros((B, H), jnp.float32)
    (h_last, _), _ = jax.lax.scan(step, (h0, c0),
                                  jnp.transpose(emb, (1, 0, 2)))
    return h_last @ params["w_fc_t"] + params["b_fc"]


if __name__ == "__main__":
    vocab_size = 256
    embedding_dim = 64
    hidden_dim = 128     # lane-aligned so gate slices are free vreg views
    batch = 32           # bf16-sublane-aligned; allows 2 batch chunks
    seq_len = 16

    key = jax.random.PRNGKey(0)
    k_params, k_ids = jax.random.split(key)
    params = init_params(k_params, vocab_size, embedding_dim, hidden_dim)
    input_ids = jax.random.randint(
        k_ids, (batch, seq_len), 0, vocab_size, dtype=jnp.int32)

    # Small demo overrides so every grid axis has >1 step (block_t=8 -> 2 time
    # chunks, block_b=16 -> 2 batch chunks, block_v=128 -> 2 vocab tiles).
    # Production use: leave block_* as None so tiles are derived from the
    # per-generation VMEM budget (bb up to 256, bt up to 128).
    logits = lstm_next_token_predictor(
        input_ids, params, block_t=8, block_b=16, block_v=128)
    logits = jax.block_until_ready(logits)

    ref = reference_forward(input_ids, params)
    assert logits.shape == (batch, vocab_size)
    max_err = float(jnp.max(jnp.abs(logits - ref)))
    # bf16 gate stream / weights vs f32 reference -> modest tolerance.
    assert jnp.allclose(logits, ref, atol=5e-2, rtol=5e-2), \
        f"mismatch vs reference (max abs err {max_err})"

    print("KERNEL_OK")
</pallas_src>

<mosaic_0001>
module attributes {stable_mosaic.version = 11 : i64} {
  func.func @_lstm_recurrence_kernel(%arg0: i32, %arg1: i32, %arg2: memref<8x16x512xbf16, #tpu.memory_space<vmem>>, %arg3: memref<128x512xbf16, #tpu.memory_space<vmem>>, %arg4: memref<16x128xbf16, #tpu.memory_space<vmem>>, %arg5: memref<16x128xf32, #tpu.memory_space<vmem>>, %arg6: memref<16x128xf32, #tpu.memory_space<vmem>>) attributes {dimension_semantics = [#tpu.dimension_semantics<parallel>, #tpu.dimension_semantics<arbitrary>], iteration_bounds = array<i64: 2, 2>, scalar_prefetch = 0 : i64, scratch_operands = 2 : i64, tpu.core_type = #tpu.core_type<tc>, window_params = [{transform_indices = @transform_0, window_bounds = array<i64: 8, 16, 512>}, {pipeline_mode = #tpu.pipeline_mode<synchronous>, transform_indices = @transform_1, window_bounds = array<i64: 128, 512>}, {transform_indices = @transform_2, window_bounds = array<i64: 16, 128>}]} {
    %c0_i32 = arith.constant 0 : i32
    %0 = arith.cmpi eq, %arg1, %c0_i32 : i32
    %1 = arith.extui %0 : i1 to i32
    %c0_i32_0 = arith.constant 0 : i32
    %2 = arith.cmpi ne, %1, %c0_i32_0 : i32
    scf.if %2 {
      %cst_60 = arith.constant 0.000000e+00 : f32
      %267 = vector.broadcast %cst_60 : f32 to vector<16x128xf32>
      %c0_61 = arith.constant 0 : index
      %c0_62 = arith.constant 0 : index
      %268 = vector.load %arg5[%c0_61, %c0_62] : memref<16x128xf32, #tpu.memory_space<vmem>>, vector<16x128xf32>
      tpu.vector_store %arg5[%c0_61, %c0_62], %267 {strides = array<i32>} : memref<16x128xf32, #tpu.memory_space<vmem>>, vector<16x128xf32>,
      %cst_63 = arith.constant 0.000000e+00 : f32
      %269 = vector.broadcast %cst_63 : f32 to vector<16x128xf32>
      %c0_64 = arith.constant 0 : index
      %c0_65 = arith.constant 0 : index
      %270 = vector.load %arg6[%c0_64, %c0_65] : memref<16x128xf32, #tpu.memory_space<vmem>>, vector<16x128xf32>
      tpu.vector_store %arg6[%c0_64, %c0_65], %269 {strides = array<i32>} : memref<16x128xf32, #tpu.memory_space<vmem>>, vector<16x128xf32>,
    } else {
    }
    %c0 = arith.constant 0 : index
    %c0_1 = arith.constant 0 : index
    %3 = vector.load %arg3[%c0, %c0_1] : memref<128x512xbf16, #tpu.memory_space<vmem>>, vector<128x512xbf16>
    %c0_2 = arith.constant 0 : index
    %c0_3 = arith.constant 0 : index
    %4 = vector.load %arg5[%c0_2, %c0_3] : memref<16x128xf32, #tpu.memory_space<vmem>>, vector<16x128xf32>
    %c0_4 = arith.constant 0 : index
    %c0_5 = arith.constant 0 : index
    %5 = vector.load %arg6[%c0_4, %c0_5] : memref<16x128xf32, #tpu.memory_space<vmem>>, vector<16x128xf32>
    %c0_i32_6 = arith.constant 0 : i32
    %6 = arith.index_cast %c0_i32_6 : i32 to index
    %c0_7 = arith.constant 0 : index
    %c0_8 = arith.constant 0 : index
    %7 = vector.load %arg2[%6, %c0_7, %c0_8] : memref<8x16x512xbf16, #tpu.memory_space<vmem>>, vector<1x16x512xbf16>
    %8 = vector.shape_cast %7 : vector<1x16x512xbf16> to vector<16x512xbf16>
    %9 = arith.extf %8 : vector<16x512xbf16> to vector<16x512xf32>
    %10 = arith.truncf %4 : vector<16x128xf32> to vector<16x128xbf16>
    %cst = arith.constant dense<0.000000e+00> : vector<16x512xf32>
    %11 = tpu.matmul %10, %3, %cst {dimension_numbers = #tpu.dot_dimension_numbers<[1], [0], [0], [1], [0, 0, 1, 1], [], []>} : vector<16x128xbf16>, vector<128x512xbf16>, vector<16x512xf32> -> vector<16x512xf32>
    %12 = arith.addf %9, %11 : vector<16x512xf32>
    %13 = vector.extract_strided_slice %12 {offsets = [0, 0], sizes = [16, 128], strides = [1, 1]} : vector<16x512xf32> to vector<16x128xf32>
    %14 = arith.negf %13 : vector<16x128xf32>
    %15 = math.exp %14 : vector<16x128xf32>
    %cst_9 = arith.constant 1.000000e+00 : f32
    %16 = vector.broadcast %cst_9 : f32 to vector<16x128xf32>
    %17 = arith.addf %16, %15 : vector<16x128xf32>
    %18 = arith.divf %16, %17 : vector<16x128xf32>
    %19 = vector.extract_strided_slice %12 {offsets = [0, 128], sizes = [16, 128], strides = [1, 1]} : vector<16x512xf32> to vector<16x128xf32>
    %20 = arith.negf %19 : vector<16x128xf32>
    %21 = math.exp %20 : vector<16x128xf32>
    %cst_10 = arith.constant 1.000000e+00 : f32
    %22 = vector.broadcast %cst_10 : f32 to vector<16x128xf32>
    %23 = arith.addf %22, %21 : vector<16x128xf32>
    %24 = arith.divf %22, %23 : vector<16x128xf32>
    %25 = vector.extract_strided_slice %12 {offsets = [0, 256], sizes = [16, 128], strides = [1, 1]} : vector<16x512xf32> to vector<16x128xf32>
    %26 = math.tanh %25 : vector<16x128xf32>
    %27 = vector.extract_strided_slice %12 {offsets = [0, 384], sizes = [16, 128], strides = [1, 1]} : vector<16x512xf32> to vector<16x128xf32>
    %28 = arith.negf %27 : vector<16x128xf32>
    %29 = math.exp %28 : vector<16x128xf32>
    %cst_11 = arith.constant 1.000000e+00 : f32
    %30 = vector.broadcast %cst_11 : f32 to vector<16x128xf32>
    %31 = arith.addf %30, %29 : vector<16x128xf32>
    %32 = arith.divf %30, %31 : vector<16x128xf32>
    %33 = arith.mulf %24, %5 : vector<16x128xf32>
    %34 = arith.mulf %18, %26 : vector<16x128xf32>
    %35 = arith.addf %33, %34 : vector<16x128xf32>
    %36 = math.tanh %35 : vector<16x128xf32>
    %37 = arith.mulf %32, %36 : vector<16x128xf32>
    %c1_i32 = arith.constant 1 : i32
    %38 = arith.index_cast %c1_i32 : i32 to index
    %c0_12 = arith.constant 0 : index
    %c0_13 = arith.constant 0 : index
    %39 = vector.load %arg2[%38, %c0_12, %c0_13] : memref<8x16x512xbf16, #tpu.memory_space<vmem>>, vector<1x16x512xbf16>
    %40 = vector.shape_cast %39 : vector<1x16x512xbf16> to vector<16x512xbf16>
    %41 = arith.extf %40 : vector<16x512xbf16> to vector<16x512xf32>
    %42 = arith.truncf %37 : vector<16x128xf32> to vector<16x128xbf16>
    %cst_14 = arith.constant dense<0.000000e+00> : vector<16x512xf32>
    %43 = tpu.matmul %42, %3, %cst_14 {dimension_numbers = #tpu.dot_dimension_numbers<[1], [0], [0], [1], [0, 0, 1, 1], [], []>} : vector<16x128xbf16>, vector<128x512xbf16>, vector<16x512xf32> -> vector<16x512xf32>
    %44 = arith.addf %41, %43 : vector<16x512xf32>
    %45 = vector.extract_strided_slice %44 {offsets = [0, 0], sizes = [16, 128], strides = [1, 1]} : vector<16x512xf32> to vector<16x128xf32>
    %46 = arith.negf %45 : vector<16x128xf32>
    %47 = math.exp %46 : vector<16x128xf32>
    %cst_15 = arith.constant 1.000000e+00 : f32
    %48 = vector.broadcast %cst_15 : f32 to vector<16x128xf32>
    %49 = arith.addf %48, %47 : vector<16x128xf32>
    %50 = arith.divf %48, %49 : vector<16x128xf32>
    %51 = vector.extract_strided_slice %44 {offsets = [0, 128], sizes = [16, 128], strides = [1, 1]} : vector<16x512xf32> to vector<16x128xf32>
    %52 = arith.negf %51 : vector<16x128xf32>
    %53 = math.exp %52 : vector<16x128xf32>
    %cst_16 = arith.constant 1.000000e+00 : f32
    %54 = vector.broadcast %cst_16 : f32 to vector<16x128xf32>
    %55 = arith.addf %54, %53 : vector<16x128xf32>
    %56 = arith.divf %54, %55 : vector<16x128xf32>
    %57 = vector.extract_strided_slice %44 {offsets = [0, 256], sizes = [16, 128], strides = [1, 1]} : vector<16x512xf32> to vector<16x128xf32>
    %58 = math.tanh %57 : vector<16x128xf32>
    %59 = vector.extract_strided_slice %44 {offsets = [0, 384], sizes = [16, 128], strides = [1, 1]} : vector<16x512xf32> to vector<16x128xf32>
    %60 = arith.negf %59 : vector<16x128xf32>
    %61 = math.exp %60 : vector<16x128xf32>
    %cst_17 = arith.constant 1.000000e+00 : f32
    %62 = vector.broadcast %cst_17 : f32 to vector<16x128xf32>
    %63 = arith.addf %62, %61 : vector<16x128xf32>
    %64 = arith.divf %62, %63 : vector<16x128xf32>
    %65 = arith.mulf %56, %35 : vector<16x128xf32>
    %66 = arith.mulf %50, %58 : vector<16x128xf32>
    %67 = arith.addf %65, %66 : vector<16x128xf32>
    %68 = math.tanh %67 : vector<16x128xf32>
    %69 = arith.mulf %64, %68 : vector<16x128xf32>
    %c2_i32 = arith.constant 2 : i32
    %70 = arith.index_cast %c2_i32 : i32 to index
    %c0_18 = arith.constant 0 : index
    %c0_19 = arith.constant 0 : index
    %71 = vector.load %arg2[%70, %c0_18, %c0_19] : memref<8x16x512xbf16, #tpu.memory_space<vmem>>, vector<1x16x512xbf16>
    %72 = vector.shape_cast %71 : vector<1x16x512xbf16> to vector<16x512xbf16>
    %73 = arith.extf %72 : vector<16x512xbf16> to vector<16x512xf32>
    %74 = arith.truncf %69 : vector<16x128xf32> to vector<16x128xbf16>
    %cst_20 = arith.constant dense<0.000000e+00> : vector<16x512xf32>
    %75 = tpu.matmul %74, %3, %cst_20 {dimension_numbers = #tpu.dot_dimension_numbers<[1], [0], [0], [1], [0, 0, 1, 1], [], []>} : vector<16x128xbf16>, vector<128x512xbf16>, vector<16x512xf32> -> vector<16x512xf32>
    %76 = arith.addf %73, %75 : vector<16x512xf32>
    %77 = vector.extract_strided_slice %76 {offsets = [0, 0], sizes = [16, 128], strides = [1, 1]} : vector<16x512xf32> to vector<16x128xf32>
    %78 = arith.negf %77 : vector<16x128xf32>
    %79 = math.exp %78 : vector<16x128xf32>
    %cst_21 = arith.constant 1.000000e+00 : f32
    %80 = vector.broadcast %cst_21 : f32 to vector<16x128xf32>
    %81 = arith.addf %80, %79 : vector<16x128xf32>
    %82 = arith.divf %80, %81 : vector<16x128xf32>
    %83 = vector.extract_strided_slice %76 {offsets = [0, 128], sizes = [16, 128], strides = [1, 1]} : vector<16x512xf32> to vector<16x128xf32>
    %84 = arith.negf %83 : vector<16x128xf32>
    %85 = math.exp %84 : vector<16x128xf32>
    %cst_22 = arith.constant 1.000000e+00 : f32
    %86 = vector.broadcast %cst_22 : f32 to vector<16x128xf32>
    %87 = arith.addf %86, %85 : vector<16x128xf32>
    %88 = arith.divf %86, %87 : vector<16x128xf32>
    %89 = vector.extract_strided_slice %76 {offsets = [0, 256], sizes = [16, 128], strides = [1, 1]} : vector<16x512xf32> to vector<16x128xf32>
    %90 = math.tanh %89 : vector<16x128xf32>
    %91 = vector.extract_strided_slice %76 {offsets = [0, 384], sizes = [16, 128], strides = [1, 1]} : vector<16x512xf32> to vector<16x128xf32>
    %92 = arith.negf %91 : vector<16x128xf32>
    %93 = math.exp %92 : vector<16x128xf32>
    %cst_23 = arith.constant 1.000000e+00 : f32
    %94 = vector.broadcast %cst_23 : f32 to vector<16x128xf32>
    %95 = arith.addf %94, %93 : vector<16x128xf32>
    %96 = arith.divf %94, %95 : vector<16x128xf32>
    %97 = arith.mulf %88, %67 : vector<16x128xf32>
    %98 = arith.mulf %82, %90 : vector<16x128xf32>
    %99 = arith.addf %97, %98 : vector<16x128xf32>
    %100 = math.tanh %99 : vector<16x128xf32>
    %101 = arith.mulf %96, %100 : vector<16x128xf32>
    %c3_i32 = arith.constant 3 : i32
    %102 = arith.index_cast %c3_i32 : i32 to index
    %c0_24 = arith.constant 0 : index
    %c0_25 = arith.constant 0 : index
    %103 = vector.load %arg2[%102, %c0_24, %c0_25] : memref<8x16x512xbf16, #tpu.memory_space<vmem>>, vector<1x16x512xbf16>
    %104 = vector.shape_cast %103 : vector<1x16x512xbf16> to vector<16x512xbf16>
    %105 = arith.extf %104 : vector<16x512xbf16> to vector<16x512xf32>
    %106 = arith.truncf %101 : vector<16x128xf32> to vector<16x128xbf16>
    %cst_26 = arith.constant dense<0.000000e+00> : vector<16x512xf32>
    %107 = tpu.matmul %106, %3, %cst_26 {dimension_numbers = #tpu.dot_dimension_numbers<[1], [0], [0], [1], [0, 0, 1, 1], [], []>} : vector<16x128xbf16>, vector<128x512xbf16>, vector<16x512xf32> -> vector<16x512xf32>
    %108 = arith.addf %105, %107 : vector<16x512xf32>
    %109 = vector.extract_strided_slice %108 {offsets = [0, 0], sizes = [16, 128], strides = [1, 1]} : vector<16x512xf32> to vector<16x128xf32>
    %110 = arith.negf %109 : vector<16x128xf32>
    %111 = math.exp %110 : vector<16x128xf32>
    %cst_27 = arith.constant 1.000000e+00 : f32
    %112 = vector.broadcast %cst_27 : f32 to vector<16x128xf32>
    %113 = arith.addf %112, %111 : vector<16x128xf32>
    %114 = arith.divf %112, %113 : vector<16x128xf32>
    %115 = vector.extract_strided_slice %108 {offsets = [0, 128], sizes = [16, 128], strides = [1, 1]} : vector<16x512xf32> to vector<16x128xf32>
    %116 = arith.negf %115 : vector<16x128xf32>
    %117 = math.exp %116 : vector<16x128xf32>
    %cst_28 = arith.constant 1.000000e+00 : f32
    %118 = vector.broadcast %cst_28 : f32 to vector<16x128xf32>
    %119 = arith.addf %118, %117 : vector<16x128xf32>
    %120 = arith.divf %118, %119 : vector<16x128xf32>
    %121 = vector.extract_strided_slice %108 {offsets = [0, 256], sizes = [16, 128], strides = [1, 1]} : vector<16x512xf32> to vector<16x128xf32>
    %122 = math.tanh %121 : vector<16x128xf32>
    %123 = vector.extract_strided_slice %108 {offsets = [0, 384], sizes = [16, 128], strides = [1, 1]} : vector<16x512xf32> to vector<16x128xf32>
    %124 = arith.negf %123 : vector<16x128xf32>
    %125 = math.exp %124 : vector<16x128xf32>
    %cst_29 = arith.constant 1.000000e+00 : f32
    %126 = vector.broadcast %cst_29 : f32 to vector<16x128xf32>
    %127 = arith.addf %126, %125 : vector<16x128xf32>
    %128 = arith.divf %126, %127 : vector<16x128xf32>
    %129 = arith.mulf %120, %99 : vector<16x128xf32>
    %130 = arith.mulf %114, %122 : vector<16x128xf32>
    %131 = arith.addf %129, %130 : vector<16x128xf32>
    %132 = math.tanh %131 : vector<16x128xf32>
    %133 = arith.mulf %128, %132 : vector<16x128xf32>
    %c4_i32 = arith.constant 4 : i32
    %134 = arith.index_cast %c4_i32 : i32 to index
    %c0_30 = arith.constant 0 : index
    %c0_31 = arith.constant 0 : index
    %135 = vector.load %arg2[%134, %c0_30, %c0_31] : memref<8x16x512xbf16, #tpu.memory_space<vmem>>, vector<1x16x512xbf16>
    %136 = vector.shape_cast %135 : vector<1x16x512xbf16> to vector<16x512xbf16>
    %137 = arith.extf %136 : vector<16x512xbf16> to vector<16x512xf32>
    %138 = arith.truncf %133 : vector<16x128xf32> to vector<16x128xbf16>
    %cst_32 = arith.constant dense<0.000000e+00> : vector<16x512xf32>
    %139 = tpu.matmul %138, %3, %cst_32 {dimension_numbers = #tpu.dot_dimension_numbers<[1], [0], [0], [1], [0, 0, 1, 1], [], []>} : vector<16x128xbf16>, vector<128x512xbf16>, vector<16x512xf32> -> vector<16x512xf32>
    %140 = arith.addf %137, %139 : vector<16x512xf32>
    %141 = vector.extract_strided_slice %140 {offsets = [0, 0], sizes = [16, 128], strides = [1, 1]} : vector<16x512xf32> to vector<16x128xf32>
    %142 = arith.negf %141 : vector<16x128xf32>
    %143 = math.exp %142 : vector<16x128xf32>
    %cst_33 = arith.constant 1.000000e+00 : f32
    %144 = vector.broadcast %cst_33 : f32 to vector<16x128xf32>
    %145 = arith.addf %144, %143 : vector<16x128xf32>
    %146 = arith.divf %144, %145 : vector<16x128xf32>
    %147 = vector.extract_strided_slice %140 {offsets = [0, 128], sizes = [16, 128], strides = [1, 1]} : vector<16x512xf32> to vector<16x128xf32>
    %148 = arith.negf %147 : vector<16x128xf32>
    %149 = math.exp %148 : vector<16x128xf32>
    %cst_34 = arith.constant 1.000000e+00 : f32
    %150 = vector.broadcast %cst_34 : f32 to vector<16x128xf32>
    %151 = arith.addf %150, %149 : vector<16x128xf32>
    %152 = arith.divf %150, %151 : vector<16x128xf32>
    %153 = vector.extract_strided_slice %140 {offsets = [0, 256], sizes = [16, 128], strides = [1, 1]} : vector<16x512xf32> to vector<16x128xf32>
    %154 = math.tanh %153 : vector<16x128xf32>
    %155 = vector.extract_strided_slice %140 {offsets = [0, 384], sizes = [16, 128], strides = [1, 1]} : vector<16x512xf32> to vector<16x128xf32>
    %156 = arith.negf %155 : vector<16x128xf32>
    %157 = math.exp %156 : vector<16x128xf32>
    %cst_35 = arith.constant 1.000000e+00 : f32
    %158 = vector.broadcast %cst_35 : f32 to vector<16x128xf32>
    %159 = arith.addf %158, %157 : vector<16x128xf32>
    %160 = arith.divf %158, %159 : vector<16x128xf32>
    %161 = arith.mulf %152, %131 : vector<16x128xf32>
    %162 = arith.mulf %146, %154 : vector<16x128xf32>
    %163 = arith.addf %161, %162 : vector<16x128xf32>
    %164 = math.tanh %163 : vector<16x128xf32>
    %165 = arith.mulf %160, %164 : vector<16x128xf32>
    %c5_i32 = arith.constant 5 : i32
    %166 = arith.index_cast %c5_i32 : i32 to index
    %c0_36 = arith.constant 0 : index
    %c0_37 = arith.constant 0 : index
    %167 = vector.load %arg2[%166, %c0_36, %c0_37] : memref<8x16x512xbf16, #tpu.memory_space<vmem>>, vector<1x16x512xbf16>
    %168 = vector.shape_cast %167 : vector<1x16x512xbf16> to vector<16x512xbf16>
    %169 = arith.extf %168 : vector<16x512xbf16> to vector<16x512xf32>
    %170 = arith.truncf %165 : vector<16x128xf32> to vector<16x128xbf16>
    %cst_38 = arith.constant dense<0.000000e+00> : vector<16x512xf32>
    %171 = tpu.matmul %170, %3, %cst_38 {dimension_numbers = #tpu.dot_dimension_numbers<[1], [0], [0], [1], [0, 0, 1, 1], [], []>} : vector<16x128xbf16>, vector<128x512xbf16>, vector<16x512xf32> -> vector<16x512xf32>
    %172 = arith.addf %169, %171 : vector<16x512xf32>
    %173 = vector.extract_strided_slice %172 {offsets = [0, 0], sizes = [16, 128], strides = [1, 1]} : vector<16x512xf32> to vector<16x128xf32>
    %174 = arith.negf %173 : vector<16x128xf32>
    %175 = math.exp %174 : vector<16x128xf32>
    %cst_39 = arith.constant 1.000000e+00 : f32
    %176 = vector.broadcast %cst_39 : f32 to vector<16x128xf32>
    %177 = arith.addf %176, %175 : vector<16x128xf32>
    %178 = arith.divf %176, %177 : vector<16x128xf32>
    %179 = vector.extract_strided_slice %172 {offsets = [0, 128], sizes = [16, 128], strides = [1, 1]} : vector<16x512xf32> to vector<16x128xf32>
    %180 = arith.negf %179 : vector<16x128xf32>
    %181 = math.exp %180 : vector<16x128xf32>
    %cst_40 = arith.constant 1.000000e+00 : f32
    %182 = vector.broadcast %cst_40 : f32 to vector<16x128xf32>
    %183 = arith.addf %182, %181 : vector<16x128xf32>
    %184 = arith.divf %182, %183 : vector<16x128xf32>
    %185 = vector.extract_strided_slice %172 {offsets = [0, 256], sizes = [16, 128], strides = [1, 1]} : vector<16x512xf32> to vector<16x128xf32>
    %186 = math.tanh %185 : vector<16x128xf32>
    %187 = vector.extract_strided_slice %172 {offsets = [0, 384], sizes = [16, 128], strides = [1, 1]} : vector<16x512xf32> to vector<16x128xf32>
    %188 = arith.negf %187 : vector<16x128xf32>
    %189 = math.exp %188 : vector<16x128xf32>
    %cst_41 = arith.constant 1.000000e+00 : f32
    %190 = vector.broadcast %cst_41 : f32 to vector<16x128xf32>
    %191 = arith.addf %190, %189 : vector<16x128xf32>
    %192 = arith.divf %190, %191 : vector<16x128xf32>
    %193 = arith.mulf %184, %163 : vector<16x128xf32>
    %194 = arith.mulf %178, %186 : vector<16x128xf32>
    %195 = arith.addf %193, %194 : vector<16x128xf32>
    %196 = math.tanh %195 : vector<16x128xf32>
    %197 = arith.mulf %192, %196 : vector<16x128xf32>
    %c6_i32 = arith.constant 6 : i32
    %198 = arith.index_cast %c6_i32 : i32 to index
    %c0_42 = arith.constant 0 : index
    %c0_43 = arith.constant 0 : index
    %199 = vector.load %arg2[%198, %c0_42, %c0_43] : memref<8x16x512xbf16, #tpu.memory_space<vmem>>, vector<1x16x512xbf16>
    %200 = vector.shape_cast %199 : vector<1x16x512xbf16> to vector<16x512xbf16>
    %201 = arith.extf %200 : vector<16x512xbf16> to vector<16x512xf32>
    %202 = arith.truncf %197 : vector<16x128xf32> to vector<16x128xbf16>
    %cst_44 = arith.constant dense<0.000000e+00> : vector<16x512xf32>
    %203 = tpu.matmul %202, %3, %cst_44 {dimension_numbers = #tpu.dot_dimension_numbers<[1], [0], [0], [1], [0, 0, 1, 1], [], []>} : vector<16x128xbf16>, vector<128x512xbf16>, vector<16x512xf32> -> vector<16x512xf32>
    %204 = arith.addf %201, %203 : vector<16x512xf32>
    %205 = vector.extract_strided_slice %204 {offsets = [0, 0], sizes = [16, 128], strides = [1, 1]} : vector<16x512xf32> to vector<16x128xf32>
    %206 = arith.negf %205 : vector<16x128xf32>
    %207 = math.exp %206 : vector<16x128xf32>
    %cst_45 = arith.constant 1.000000e+00 : f32
    %208 = vector.broadcast %cst_45 : f32 to vector<16x128xf32>
    %209 = arith.addf %208, %207 : vector<16x128xf32>
    %210 = arith.divf %208, %209 : vector<16x128xf32>
    %211 = vector.extract_strided_slice %204 {offsets = [0, 128], sizes = [16, 128], strides = [1, 1]} : vector<16x512xf32> to vector<16x128xf32>
    %212 = arith.negf %211 : vector<16x128xf32>
    %213 = math.exp %212 : vector<16x128xf32>
    %cst_46 = arith.constant 1.000000e+00 : f32
    %214 = vector.broadcast %cst_46 : f32 to vector<16x128xf32>
    %215 = arith.addf %214, %213 : vector<16x128xf32>
    %216 = arith.divf %214, %215 : vector<16x128xf32>
    %217 = vector.extract_strided_slice %204 {offsets = [0, 256], sizes = [16, 128], strides = [1, 1]} : vector<16x512xf32> to vector<16x128xf32>
    %218 = math.tanh %217 : vector<16x128xf32>
    %219 = vector.extract_strided_slice %204 {offsets = [0, 384], sizes = [16, 128], strides = [1, 1]} : vector<16x512xf32> to vector<16x128xf32>
    %220 = arith.negf %219 : vector<16x128xf32>
    %221 = math.exp %220 : vector<16x128xf32>
    %cst_47 = arith.constant 1.000000e+00 : f32
    %222 = vector.broadcast %cst_47 : f32 to vector<16x128xf32>
    %223 = arith.addf %222, %221 : vector<16x128xf32>
    %224 = arith.divf %222, %223 : vector<16x128xf32>
    %225 = arith.mulf %216, %195 : vector<16x128xf32>
    %226 = arith.mulf %210, %218 : vector<16x128xf32>
    %227 = arith.addf %225, %226 : vector<16x128xf32>
    %228 = math.tanh %227 : vector<16x128xf32>
    %229 = arith.mulf %224, %228 : vector<16x128xf32>
    %c7_i32 = arith.constant 7 : i32
    %230 = arith.index_cast %c7_i32 : i32 to index
    %c0_48 = arith.constant 0 : index
    %c0_49 = arith.constant 0 : index
    %231 = vector.load %arg2[%230, %c0_48, %c0_49] : memref<8x16x512xbf16, #tpu.memory_space<vmem>>, vector<1x16x512xbf16>
    %232 = vector.shape_cast %231 : vector<1x16x512xbf16> to vector<16x512xbf16>
    %233 = arith.extf %232 : vector<16x512xbf16> to vector<16x512xf32>
    %234 = arith.truncf %229 : vector<16x128xf32> to vector<16x128xbf16>
    %cst_50 = arith.constant dense<0.000000e+00> : vector<16x512xf32>
    %235 = tpu.matmul %234, %3, %cst_50 {dimension_numbers = #tpu.dot_dimension_numbers<[1], [0], [0], [1], [0, 0, 1, 1], [], []>} : vector<16x128xbf16>, vector<128x512xbf16>, vector<16x512xf32> -> vector<16x512xf32>
    %236 = arith.addf %233, %235 : vector<16x512xf32>
    %237 = vector.extract_strided_slice %236 {offsets = [0, 0], sizes = [16, 128], strides = [1, 1]} : vector<16x512xf32> to vector<16x128xf32>
    %238 = arith.negf %237 : vector<16x128xf32>
    %239 = math.exp %238 : vector<16x128xf32>
    %cst_51 = arith.constant 1.000000e+00 : f32
    %240 = vector.broadcast %cst_51 : f32 to vector<16x128xf32>
    %241 = arith.addf %240, %239 : vector<16x128xf32>
    %242 = arith.divf %240, %241 : vector<16x128xf32>
    %243 = vector.extract_strided_slice %236 {offsets = [0, 128], sizes = [16, 128], strides = [1, 1]} : vector<16x512xf32> to vector<16x128xf32>
    %244 = arith.negf %243 : vector<16x128xf32>
    %245 = math.exp %244 : vector<16x128xf32>
    %cst_52 = arith.constant 1.000000e+00 : f32
    %246 = vector.broadcast %cst_52 : f32 to vector<16x128xf32>
    %247 = arith.addf %246, %245 : vector<16x128xf32>
    %248 = arith.divf %246, %247 : vector<16x128xf32>
    %249 = vector.extract_strided_slice %236 {offsets = [0, 256], sizes = [16, 128], strides = [1, 1]} : vector<16x512xf32> to vector<16x128xf32>
    %250 = math.tanh %249 : vector<16x128xf32>
    %251 = vector.extract_strided_slice %236 {offsets = [0, 384], sizes = [16, 128], strides = [1, 1]} : vector<16x512xf32> to vector<16x128xf32>
    %252 = arith.negf %251 : vector<16x128xf32>
    %253 = math.exp %252 : vector<16x128xf32>
    %cst_53 = arith.constant 1.000000e+00 : f32
    %254 = vector.broadcast %cst_53 : f32 to vector<16x128xf32>
    %255 = arith.addf %254, %253 : vector<16x128xf32>
    %256 = arith.divf %254, %255 : vector<16x128xf32>
    %257 = arith.mulf %248, %227 : vector<16x128xf32>
    %258 = arith.mulf %242, %250 : vector<16x128xf32>
    %259 = arith.addf %257, %258 : vector<16x128xf32>
    %260 = math.tanh %259 : vector<16x128xf32>
    %261 = arith.mulf %256, %260 : vector<16x128xf32>
    %c8_i32 = arith.constant 8 : i32
    %c0_54 = arith.constant 0 : index
    %c0_55 = arith.constant 0 : index
    %262 = vector.load %arg5[%c0_54, %c0_55] : memref<16x128xf32, #tpu.memory_space<vmem>>, vector<16x128xf32>
    tpu.vector_store %arg5[%c0_54, %c0_55], %261 {strides = array<i32>} : memref<16x128xf32, #tpu.memory_space<vmem>>, vector<16x128xf32>,
    %c0_56 = arith.constant 0 : index
    %c0_57 = arith.constant 0 : index
    %263 = vector.load %arg6[%c0_56, %c0_57] : memref<16x128xf32, #tpu.memory_space<vmem>>, vector<16x128xf32>
    tpu.vector_store %arg6[%c0_56, %c0_57], %259 {strides = array<i32>} : memref<16x128xf32, #tpu.memory_space<vmem>>, vector<16x128xf32>,
    %c1_i32_58 = arith.constant 1 : i32
    %264 = arith.cmpi eq, %arg1, %c1_i32_58 : i32
    %265 = arith.extui %264 : i1 to i32
    %c0_i32_59 = arith.constant 0 : i32
    %266 = arith.cmpi ne, %265, %c0_i32_59 : i32
    scf.if %266 {
      %267 = arith.truncf %261 : vector<16x128xf32> to vector<16x128xbf16>
      %c0_60 = arith.constant 0 : index
      %c0_61 = arith.constant 0 : index
      %268 = vector.load %arg4[%c0_60, %c0_61] : memref<16x128xbf16, #tpu.memory_space<vmem>>, vector<16x128xbf16>
      tpu.vector_store %arg4[%c0_60, %c0_61], %267 {strides = array<i32>} : memref<16x128xbf16, #tpu.memory_space<vmem>>, vector<16x128xbf16>,
    } else {
    }
    return
  }
  func.func @transform_0(%arg0: i32, %arg1: i32) -> (i32, i32, i32) {
    %c0_i32 = arith.constant 0 : i32
    %c0_i32_0 = arith.constant 0 : i32
    return %arg1, %arg0, %c0_i32 : i32, i32, i32
  }
  func.func @transform_1(%arg0: i32, %arg1: i32) -> (i32, i32) {
    %c0_i32 = arith.constant 0 : i32
    %c0_i32_0 = arith.constant 0 : i32
    %c0_i32_1 = arith.constant 0 : i32
    return %c0_i32, %c0_i32_0 : i32, i32
  }
  func.func @transform_2(%arg0: i32, %arg1: i32) -> (i32, i32) {
    %c0_i32 = arith.constant 0 : i32
    %c0_i32_0 = arith.constant 0 : i32
    return %arg0, %c0_i32 : i32, i32
  }
}

module attributes {stable_mosaic.version = 11 : i64} {
  func.func @_lstm_recurrence_kernel(%arg0: i32, %arg1: i32, %arg2: memref<8x16x512xbf16, #tpu.memory_space<vmem>>, %arg3: memref<128x512xbf16, #tpu.memory_space<vmem>>, %arg4: memref<16x128xbf16, #tpu.memory_space<vmem>>, %arg5: memref<16x128xf32, #tpu.memory_space<vmem>>, %arg6: memref<16x128xf32, #tpu.memory_space<vmem>>) attributes {dimension_semantics = [#tpu.dimension_semantics<parallel>, #tpu.dimension_semantics<arbitrary>], iteration_bounds = array<i64: 2, 2>, scalar_prefetch = 0 : i64, scratch_operands = 2 : i64, tpu.core_type = #tpu.core_type<tc>, window_params = [{transform_indices = @transform_0, window_bounds = array<i64: 8, 16, 512>}, {pipeline_mode = #tpu.pipeline_mode<synchronous>, transform_indices = @transform_1, window_bounds = array<i64: 128, 512>}, {transform_indices = @transform_2, window_bounds = array<i64: 16, 128>}]} {
    %c0_i32 = arith.constant 0 : i32
    %0 = arith.cmpi eq, %arg1, %c0_i32 : i32
    %1 = arith.extui %0 : i1 to i32
    %c0_i32_0 = arith.constant 0 : i32
    %2 = arith.cmpi ne, %1, %c0_i32_0 : i32
    scf.if %2 {
      %cst_60 = arith.constant 0.000000e+00 : f32
      %267 = vector.broadcast %cst_60 : f32 to vector<16x128xf32>
      %c0_61 = arith.constant 0 : index
      %c0_62 = arith.constant 0 : index
      %268 = vector.load %arg5[%c0_61, %c0_62] : memref<16x128xf32, #tpu.memory_space<vmem>>, vector<16x128xf32>
      tpu.vector_store %arg5[%c0_61, %c0_62], %267 {strides = array<i32>} : memref<16x128xf32, #tpu.memory_space<vmem>>, vector<16x128xf32>,
      %cst_63 = arith.constant 0.000000e+00 : f32
      %269 = vector.broadcast %cst_63 : f32 to vector<16x128xf32>
      %c0_64 = arith.constant 0 : index
      %c0_65 = arith.constant 0 : index
      %270 = vector.load %arg6[%c0_64, %c0_65] : memref<16x128xf32, #tpu.memory_space<vmem>>, vector<16x128xf32>
      tpu.vector_store %arg6[%c0_64, %c0_65], %269 {strides = array<i32>} : memref<16x128xf32, #tpu.memory_space<vmem>>, vector<16x128xf32>,
    } else {
    }
    %c0 = arith.constant 0 : index
    %c0_1 = arith.constant 0 : index
    %3 = vector.load %arg3[%c0, %c0_1] : memref<128x512xbf16, #tpu.memory_space<vmem>>, vector<128x512xbf16>
    %c0_2 = arith.constant 0 : index
    %c0_3 = arith.constant 0 : index
    %4 = vector.load %arg5[%c0_2, %c0_3] : memref<16x128xf32, #tpu.memory_space<vmem>>, vector<16x128xf32>
    %c0_4 = arith.constant 0 : index
    %c0_5 = arith.constant 0 : index
    %5 = vector.load %arg6[%c0_4, %c0_5] : memref<16x128xf32, #tpu.memory_space<vmem>>, vector<16x128xf32>
    %c0_i32_6 = arith.constant 0 : i32
    %6 = arith.index_cast %c0_i32_6 : i32 to index
    %c0_7 = arith.constant 0 : index
    %c0_8 = arith.constant 0 : index
    %7 = vector.load %arg2[%6, %c0_7, %c0_8] : memref<8x16x512xbf16, #tpu.memory_space<vmem>>, vector<1x16x512xbf16>
    %8 = vector.shape_cast %7 : vector<1x16x512xbf16> to vector<16x512xbf16>
    %9 = arith.extf %8 : vector<16x512xbf16> to vector<16x512xf32>
    %10 = arith.truncf %4 : vector<16x128xf32> to vector<16x128xbf16>
    %cst = arith.constant dense<0.000000e+00> : vector<16x512xf32>
    %11 = tpu.matmul %10, %3, %cst {dimension_numbers = #tpu.dot_dimension_numbers<[1], [0], [0], [1], [0, 0, 1, 1], [], []>} : vector<16x128xbf16>, vector<128x512xbf16>, vector<16x512xf32> -> vector<16x512xf32>
    %12 = arith.addf %9, %11 : vector<16x512xf32>
    %13 = vector.extract_strided_slice %12 {offsets = [0, 0], sizes = [16, 128], strides = [1, 1]} : vector<16x512xf32> to vector<16x128xf32>
    %14 = arith.negf %13 : vector<16x128xf32>
    %15 = math.exp %14 : vector<16x128xf32>
    %cst_9 = arith.constant 1.000000e+00 : f32
    %16 = vector.broadcast %cst_9 : f32 to vector<16x128xf32>
    %17 = arith.addf %16, %15 : vector<16x128xf32>
    %18 = arith.divf %16, %17 : vector<16x128xf32>
    %19 = vector.extract_strided_slice %12 {offsets = [0, 128], sizes = [16, 128], strides = [1, 1]} : vector<16x512xf32> to vector<16x128xf32>
    %20 = arith.negf %19 : vector<16x128xf32>
    %21 = math.exp %20 : vector<16x128xf32>
    %cst_10 = arith.constant 1.000000e+00 : f32
    %22 = vector.broadcast %cst_10 : f32 to vector<16x128xf32>
    %23 = arith.addf %22, %21 : vector<16x128xf32>
    %24 = arith.divf %22, %23 : vector<16x128xf32>
    %25 = vector.extract_strided_slice %12 {offsets = [0, 256], sizes = [16, 128], strides = [1, 1]} : vector<16x512xf32> to vector<16x128xf32>
    %26 = math.tanh %25 : vector<16x128xf32>
    %27 = vector.extract_strided_slice %12 {offsets = [0, 384], sizes = [16, 128], strides = [1, 1]} : vector<16x512xf32> to vector<16x128xf32>
    %28 = arith.negf %27 : vector<16x128xf32>
    %29 = math.exp %28 : vector<16x128xf32>
    %cst_11 = arith.constant 1.000000e+00 : f32
    %30 = vector.broadcast %cst_11 : f32 to vector<16x128xf32>
    %31 = arith.addf %30, %29 : vector<16x128xf32>
    %32 = arith.divf %30, %31 : vector<16x128xf32>
    %33 = arith.mulf %24, %5 : vector<16x128xf32>
    %34 = arith.mulf %18, %26 : vector<16x128xf32>
    %35 = arith.addf %33, %34 : vector<16x128xf32>
    %36 = math.tanh %35 : vector<16x128xf32>
    %37 = arith.mulf %32, %36 : vector<16x128xf32>
    %c1_i32 = arith.constant 1 : i32
    %38 = arith.index_cast %c1_i32 : i32 to index
    %c0_12 = arith.constant 0 : index
    %c0_13 = arith.constant 0 : index
    %39 = vector.load %arg2[%38, %c0_12, %c0_13] : memref<8x16x512xbf16, #tpu.memory_space<vmem>>, vector<1x16x512xbf16>
    %40 = vector.shape_cast %39 : vector<1x16x512xbf16> to vector<16x512xbf16>
    %41 = arith.extf %40 : vector<16x512xbf16> to vector<16x512xf32>
    %42 = arith.truncf %37 : vector<16x128xf32> to vector<16x128xbf16>
    %cst_14 = arith.constant dense<0.000000e+00> : vector<16x512xf32>
    %43 = tpu.matmul %42, %3, %cst_14 {dimension_numbers = #tpu.dot_dimension_numbers<[1], [0], [0], [1], [0, 0, 1, 1], [], []>} : vector<16x128xbf16>, vector<128x512xbf16>, vector<16x512xf32> -> vector<16x512xf32>
    %44 = arith.addf %41, %43 : vector<16x512xf32>
    %45 = vector.extract_strided_slice %44 {offsets = [0, 0], sizes = [16, 128], strides = [1, 1]} : vector<16x512xf32> to vector<16x128xf32>
    %46 = arith.negf %45 : vector<16x128xf32>
    %47 = math.exp %46 : vector<16x128xf32>
    %cst_15 = arith.constant 1.000000e+00 : f32
    %48 = vector.broadcast %cst_15 : f32 to vector<16x128xf32>
    %49 = arith.addf %48, %47 : vector<16x128xf32>
    %50 = arith.divf %48, %49 : vector<16x128xf32>
    %51 = vector.extract_strided_slice %44 {offsets = [0, 128], sizes = [16, 128], strides = [1, 1]} : vector<16x512xf32> to vector<16x128xf32>
    %52 = arith.negf %51 : vector<16x128xf32>
    %53 = math.exp %52 : vector<16x128xf32>
    %cst_16 = arith.constant 1.000000e+00 : f32
    %54 = vector.broadcast %cst_16 : f32 to vector<16x128xf32>
    %55 = arith.addf %54, %53 : vector<16x128xf32>
    %56 = arith.divf %54, %55 : vector<16x128xf32>
    %57 = vector.extract_strided_slice %44 {offsets = [0, 256], sizes = [16, 128], strides = [1, 1]} : vector<16x512xf32> to vector<16x128xf32>
    %58 = math.tanh %57 : vector<16x128xf32>
    %59 = vector.extract_strided_slice %44 {offsets = [0, 384], sizes = [16, 128], strides = [1, 1]} : vector<16x512xf32> to vector<16x128xf32>
    %60 = arith.negf %59 : vector<16x128xf32>
    %61 = math.exp %60 : vector<16x128xf32>
    %cst_17 = arith.constant 1.000000e+00 : f32
    %62 = vector.broadcast %cst_17 : f32 to vector<16x128xf32>
    %63 = arith.addf %62, %61 : vector<16x128xf32>
    %64 = arith.divf %62, %63 : vector<16x128xf32>
    %65 = arith.mulf %56, %35 : vector<16x128xf32>
    %66 = arith.mulf %50, %58 : vector<16x128xf32>
    %67 = arith.addf %65, %66 : vector<16x128xf32>
    %68 = math.tanh %67 : vector<16x128xf32>
    %69 = arith.mulf %64, %68 : vector<16x128xf32>
    %c2_i32 = arith.constant 2 : i32
    %70 = arith.index_cast %c2_i32 : i32 to index
    %c0_18 = arith.constant 0 : index
    %c0_19 = arith.constant 0 : index
    %71 = vector.load %arg2[%70, %c0_18, %c0_19] : memref<8x16x512xbf16, #tpu.memory_space<vmem>>, vector<1x16x512xbf16>
    %72 = vector.shape_cast %71 : vector<1x16x512xbf16> to vector<16x512xbf16>
    %73 = arith.extf %72 : vector<16x512xbf16> to vector<16x512xf32>
    %74 = arith.truncf %69 : vector<16x128xf32> to vector<16x128xbf16>
    %cst_20 = arith.constant dense<0.000000e+00> : vector<16x512xf32>
    %75 = tpu.matmul %74, %3, %cst_20 {dimension_numbers = #tpu.dot_dimension_numbers<[1], [0], [0], [1], [0, 0, 1, 1], [], []>} : vector<16x128xbf16>, vector<128x512xbf16>, vector<16x512xf32> -> vector<16x512xf32>
    %76 = arith.addf %73, %75 : vector<16x512xf32>
    %77 = vector.extract_strided_slice %76 {offsets = [0, 0], sizes = [16, 128], strides = [1, 1]} : vector<16x512xf32> to vector<16x128xf32>
    %78 = arith.negf %77 : vector<16x128xf32>
    %79 = math.exp %78 : vector<16x128xf32>
    %cst_21 = arith.constant 1.000000e+00 : f32
    %80 = vector.broadcast %cst_21 : f32 to vector<16x128xf32>
    %81 = arith.addf %80, %79 : vector<16x128xf32>
    %82 = arith.divf %80, %81 : vector<16x128xf32>
    %83 = vector.extract_strided_slice %76 {offsets = [0, 128], sizes = [16, 128], strides = [1, 1]} : vector<16x512xf32> to vector<16x128xf32>
    %84 = arith.negf %83 : vector<16x128xf32>
    %85 = math.exp %84 : vector<16x128xf32>
    %cst_22 = arith.constant 1.000000e+00 : f32
    %86 = vector.broadcast %cst_22 : f32 to vector<16x128xf32>
    %87 = arith.addf %86, %85 : vector<16x128xf32>
    %88 = arith.divf %86, %87 : vector<16x128xf32>
    %89 = vector.extract_strided_slice %76 {offsets = [0, 256], sizes = [16, 128], strides = [1, 1]} : vector<16x512xf32> to vector<16x128xf32>
    %90 = math.tanh %89 : vector<16x128xf32>
    %91 = vector.extract_strided_slice %76 {offsets = [0, 384], sizes = [16, 128], strides = [1, 1]} : vector<16x512xf32> to vector<16x128xf32>
    %92 = arith.negf %91 : vector<16x128xf32>
    %93 = math.exp %92 : vector<16x128xf32>
    %cst_23 = arith.constant 1.000000e+00 : f32
    %94 = vector.broadcast %cst_23 : f32 to vector<16x128xf32>
    %95 = arith.addf %94, %93 : vector<16x128xf32>
    %96 = arith.divf %94, %95 : vector<16x128xf32>
    %97 = arith.mulf %88, %67 : vector<16x128xf32>
    %98 = arith.mulf %82, %90 : vector<16x128xf32>
    %99 = arith.addf %97, %98 : vector<16x128xf32>
    %100 = math.tanh %99 : vector<16x128xf32>
    %101 = arith.mulf %96, %100 : vector<16x128xf32>
    %c3_i32 = arith.constant 3 : i32
    %102 = arith.index_cast %c3_i32 : i32 to index
    %c0_24 = arith.constant 0 : index
    %c0_25 = arith.constant 0 : index
    %103 = vector.load %arg2[%102, %c0_24, %c0_25] : memref<8x16x512xbf16, #tpu.memory_space<vmem>>, vector<1x16x512xbf16>
    %104 = vector.shape_cast %103 : vector<1x16x512xbf16> to vector<16x512xbf16>
    %105 = arith.extf %104 : vector<16x512xbf16> to vector<16x512xf32>
    %106 = arith.truncf %101 : vector<16x128xf32> to vector<16x128xbf16>
    %cst_26 = arith.constant dense<0.000000e+00> : vector<16x512xf32>
    %107 = tpu.matmul %106, %3, %cst_26 {dimension_numbers = #tpu.dot_dimension_numbers<[1], [0], [0], [1], [0, 0, 1, 1], [], []>} : vector<16x128xbf16>, vector<128x512xbf16>, vector<16x512xf32> -> vector<16x512xf32>
    %108 = arith.addf %105, %107 : vector<16x512xf32>
    %109 = vector.extract_strided_slice %108 {offsets = [0, 0], sizes = [16, 128], strides = [1, 1]} : vector<16x512xf32> to vector<16x128xf32>
    %110 = arith.negf %109 : vector<16x128xf32>
    %111 = math.exp %110 : vector<16x128xf32>
    %cst_27 = arith.constant 1.000000e+00 : f32
    %112 = vector.broadcast %cst_27 : f32 to vector<16x128xf32>
    %113 = arith.addf %112, %111 : vector<16x128xf32>
    %114 = arith.divf %112, %113 : vector<16x128xf32>
    %115 = vector.extract_strided_slice %108 {offsets = [0, 128], sizes = [16, 128], strides = [1, 1]} : vector<16x512xf32> to vector<16x128xf32>
    %116 = arith.negf %115 : vector<16x128xf32>
    %117 = math.exp %116 : vector<16x128xf32>
    %cst_28 = arith.constant 1.000000e+00 : f32
    %118 = vector.broadcast %cst_28 : f32 to vector<16x128xf32>
    %119 = arith.addf %118, %117 : vector<16x128xf32>
    %120 = arith.divf %118, %119 : vector<16x128xf32>
    %121 = vector.extract_strided_slice %108 {offsets = [0, 256], sizes = [16, 128], strides = [1, 1]} : vector<16x512xf32> to vector<16x128xf32>
    %122 = math.tanh %121 : vector<16x128xf32>
    %123 = vector.extract_strided_slice %108 {offsets = [0, 384], sizes = [16, 128], strides = [1, 1]} : vector<16x512xf32> to vector<16x128xf32>
    %124 = arith.negf %123 : vector<16x128xf32>
    %125 = math.exp %124 : vector<16x128xf32>
    %cst_29 = arith.constant 1.000000e+00 : f32
    %126 = vector.broadcast %cst_29 : f32 to vector<16x128xf32>
    %127 = arith.addf %126, %125 : vector<16x128xf32>
    %128 = arith.divf %126, %127 : vector<16x128xf32>
    %129 = arith.mulf %120, %99 : vector<16x128xf32>
    %130 = arith.mulf %114, %122 : vector<16x128xf32>
    %131 = arith.addf %129, %130 : vector<16x128xf32>
    %132 = math.tanh %131 : vector<16x128xf32>
    %133 = arith.mulf %128, %132 : vector<16x128xf32>
    %c4_i32 = arith.constant 4 : i32
    %134 = arith.index_cast %c4_i32 : i32 to index
    %c0_30 = arith.constant 0 : index
    %c0_31 = arith.constant 0 : index
    %135 = vector.load %arg2[%134, %c0_30, %c0_31] : memref<8x16x512xbf16, #tpu.memory_space<vmem>>, vector<1x16x512xbf16>
    %136 = vector.shape_cast %135 : vector<1x16x512xbf16> to vector<16x512xbf16>
    %137 = arith.extf %136 : vector<16x512xbf16> to vector<16x512xf32>
    %138 = arith.truncf %133 : vector<16x128xf32> to vector<16x128xbf16>
    %cst_32 = arith.constant dense<0.000000e+00> : vector<16x512xf32>
    %139 = tpu.matmul %138, %3, %cst_32 {dimension_numbers = #tpu.dot_dimension_numbers<[1], [0], [0], [1], [0, 0, 1, 1], [], []>} : vector<16x128xbf16>, vector<128x512xbf16>, vector<16x512xf32> -> vector<16x512xf32>
    %140 = arith.addf %137, %139 : vector<16x512xf32>
    %141 = vector.extract_strided_slice %140 {offsets = [0, 0], sizes = [16, 128], strides = [1, 1]} : vector<16x512xf32> to vector<16x128xf32>
    %142 = arith.negf %141 : vector<16x128xf32>
    %143 = math.exp %142 : vector<16x128xf32>
    %cst_33 = arith.constant 1.000000e+00 : f32
    %144 = vector.broadcast %cst_33 : f32 to vector<16x128xf32>
    %145 = arith.addf %144, %143 : vector<16x128xf32>
    %146 = arith.divf %144, %145 : vector<16x128xf32>
    %147 = vector.extract_strided_slice %140 {offsets = [0, 128], sizes = [16, 128], strides = [1, 1]} : vector<16x512xf32> to vector<16x128xf32>
    %148 = arith.negf %147 : vector<16x128xf32>
    %149 = math.exp %148 : vector<16x128xf32>
    %cst_34 = arith.constant 1.000000e+00 : f32
    %150 = vector.broadcast %cst_34 : f32 to vector<16x128xf32>
    %151 = arith.addf %150, %149 : vector<16x128xf32>
    %152 = arith.divf %150, %151 : vector<16x128xf32>
    %153 = vector.extract_strided_slice %140 {offsets = [0, 256], sizes = [16, 128], strides = [1, 1]} : vector<16x512xf32> to vector<16x128xf32>
    %154 = math.tanh %153 : vector<16x128xf32>
    %155 = vector.extract_strided_slice %140 {offsets = [0, 384], sizes = [16, 128], strides = [1, 1]} : vector<16x512xf32> to vector<16x128xf32>
    %156 = arith.negf %155 : vector<16x128xf32>
    %157 = math.exp %156 : vector<16x128xf32>
    %cst_35 = arith.constant 1.000000e+00 : f32
    %158 = vector.broadcast %cst_35 : f32 to vector<16x128xf32>
    %159 = arith.addf %158, %157 : vector<16x128xf32>
    %160 = arith.divf %158, %159 : vector<16x128xf32>
    %161 = arith.mulf %152, %131 : vector<16x128xf32>
    %162 = arith.mulf %146, %154 : vector<16x128xf32>
    %163 = arith.addf %161, %162 : vector<16x128xf32>
    %164 = math.tanh %163 : vector<16x128xf32>
    %165 = arith.mulf %160, %164 : vector<16x128xf32>
    %c5_i32 = arith.constant 5 : i32
    %166 = arith.index_cast %c5_i32 : i32 to index
    %c0_36 = arith.constant 0 : index
    %c0_37 = arith.constant 0 : index
    %167 = vector.load %arg2[%166, %c0_36, %c0_37] : memref<8x16x512xbf16, #tpu.memory_space<vmem>>, vector<1x16x512xbf16>
    %168 = vector.shape_cast %167 : vector<1x16x512xbf16> to vector<16x512xbf16>
    %169 = arith.extf %168 : vector<16x512xbf16> to vector<16x512xf32>
    %170 = arith.truncf %165 : vector<16x128xf32> to vector<16x128xbf16>
    %cst_38 = arith.constant dense<0.000000e+00> : vector<16x512xf32>
    %171 = tpu.matmul %170, %3, %cst_38 {dimension_numbers = #tpu.dot_dimension_numbers<[1], [0], [0], [1], [0, 0, 1, 1], [], []>} : vector<16x128xbf16>, vector<128x512xbf16>, vector<16x512xf32> -> vector<16x512xf32>
    %172 = arith.addf %169, %171 : vector<16x512xf32>
    %173 = vector.extract_strided_slice %172 {offsets = [0, 0], sizes = [16, 128], strides = [1, 1]} : vector<16x512xf32> to vector<16x128xf32>
    %174 = arith.negf %173 : vector<16x128xf32>
    %175 = math.exp %174 : vector<16x128xf32>
    %cst_39 = arith.constant 1.000000e+00 : f32
    %176 = vector.broadcast %cst_39 : f32 to vector<16x128xf32>
    %177 = arith.addf %176, %175 : vector<16x128xf32>
    %178 = arith.divf %176, %177 : vector<16x128xf32>
    %179 = vector.extract_strided_slice %172 {offsets = [0, 128], sizes = [16, 128], strides = [1, 1]} : vector<16x512xf32> to vector<16x128xf32>
    %180 = arith.negf %179 : vector<16x128xf32>
    %181 = math.exp %180 : vector<16x128xf32>
    %cst_40 = arith.constant 1.000000e+00 : f32
    %182 = vector.broadcast %cst_40 : f32 to vector<16x128xf32>
    %183 = arith.addf %182, %181 : vector<16x128xf32>
    %184 = arith.divf %182, %183 : vector<16x128xf32>
    %185 = vector.extract_strided_slice %172 {offsets = [0, 256], sizes = [16, 128], strides = [1, 1]} : vector<16x512xf32> to vector<16x128xf32>
    %186 = math.tanh %185 : vector<16x128xf32>
    %187 = vector.extract_strided_slice %172 {offsets = [0, 384], sizes = [16, 128], strides = [1, 1]} : vector<16x512xf32> to vector<16x128xf32>
    %188 = arith.negf %187 : vector<16x128xf32>
    %189 = math.exp %188 : vector<16x128xf32>
    %cst_41 = arith.constant 1.000000e+00 : f32
    %190 = vector.broadcast %cst_41 : f32 to vector<16x128xf32>
    %191 = arith.addf %190, %189 : vector<16x128xf32>
    %192 = arith.divf %190, %191 : vector<16x128xf32>
    %193 = arith.mulf %184, %163 : vector<16x128xf32>
    %194 = arith.mulf %178, %186 : vector<16x128xf32>
    %195 = arith.addf %193, %194 : vector<16x128xf32>
    %196 = math.tanh %195 : vector<16x128xf32>
    %197 = arith.mulf %192, %196 : vector<16x128xf32>
    %c6_i32 = arith.constant 6 : i32
    %198 = arith.index_cast %c6_i32 : i32 to index
    %c0_42 = arith.constant 0 : index
    %c0_43 = arith.constant 0 : index
    %199 = vector.load %arg2[%198, %c0_42, %c0_43] : memref<8x16x512xbf16, #tpu.memory_space<vmem>>, vector<1x16x512xbf16>
    %200 = vector.shape_cast %199 : vector<1x16x512xbf16> to vector<16x512xbf16>
    %201 = arith.extf %200 : vector<16x512xbf16> to vector<16x512xf32>
    %202 = arith.truncf %197 : vector<16x128xf32> to vector<16x128xbf16>
    %cst_44 = arith.constant dense<0.000000e+00> : vector<16x512xf32>
    %203 = tpu.matmul %202, %3, %cst_44 {dimension_numbers = #tpu.dot_dimension_numbers<[1], [0], [0], [1], [0, 0, 1, 1], [], []>} : vector<16x128xbf16>, vector<128x512xbf16>, vector<16x512xf32> -> vector<16x512xf32>
    %204 = arith.addf %201, %203 : vector<16x512xf32>
    %205 = vector.extract_strided_slice %204 {offsets = [0, 0], sizes = [16, 128], strides = [1, 1]} : vector<16x512xf32> to vector<16x128xf32>
    %206 = arith.negf %205 : vector<16x128xf32>
    %207 = math.exp %206 : vector<16x128xf32>
    %cst_45 = arith.constant 1.000000e+00 : f32
    %208 = vector.broadcast %cst_45 : f32 to vector<16x128xf32>
    %209 = arith.addf %208, %207 : vector<16x128xf32>
    %210 = arith.divf %208, %209 : vector<16x128xf32>
    %211 = vector.extract_strided_slice %204 {offsets = [0, 128], sizes = [16, 128], strides = [1, 1]} : vector<16x512xf32> to vector<16x128xf32>
    %212 = arith.negf %211 : vector<16x128xf32>
    %213 = math.exp %212 : vector<16x128xf32>
    %cst_46 = arith.constant 1.000000e+00 : f32
    %214 = vector.broadcast %cst_46 : f32 to vector<16x128xf32>
    %215 = arith.addf %214, %213 : vector<16x128xf32>
    %216 = arith.divf %214, %215 : vector<16x128xf32>
    %217 = vector.extract_strided_slice %204 {offsets = [0, 256], sizes = [16, 128], strides = [1, 1]} : vector<16x512xf32> to vector<16x128xf32>
    %218 = math.tanh %217 : vector<16x128xf32>
    %219 = vector.extract_strided_slice %204 {offsets = [0, 384], sizes = [16, 128], strides = [1, 1]} : vector<16x512xf32> to vector<16x128xf32>
    %220 = arith.negf %219 : vector<16x128xf32>
    %221 = math.exp %220 : vector<16x128xf32>
    %cst_47 = arith.constant 1.000000e+00 : f32
    %222 = vector.broadcast %cst_47 : f32 to vector<16x128xf32>
    %223 = arith.addf %222, %221 : vector<16x128xf32>
    %224 = arith.divf %222, %223 : vector<16x128xf32>
    %225 = arith.mulf %216, %195 : vector<16x128xf32>
    %226 = arith.mulf %210, %218 : vector<16x128xf32>
    %227 = arith.addf %225, %226 : vector<16x128xf32>
    %228 = math.tanh %227 : vector<16x128xf32>
    %229 = arith.mulf %224, %228 : vector<16x128xf32>
    %c7_i32 = arith.constant 7 : i32
    %230 = arith.index_cast %c7_i32 : i32 to index
    %c0_48 = arith.constant 0 : index
    %c0_49 = arith.constant 0 : index
    %231 = vector.load %arg2[%230, %c0_48, %c0_49] : memref<8x16x512xbf16, #tpu.memory_space<vmem>>, vector<1x16x512xbf16>
    %232 = vector.shape_cast %231 : vector<1x16x512xbf16> to vector<16x512xbf16>
    %233 = arith.extf %232 : vector<16x512xbf16> to vector<16x512xf32>
    %234 = arith.truncf %229 : vector<16x128xf32> to vector<16x128xbf16>
    %cst_50 = arith.constant dense<0.000000e+00> : vector<16x512xf32>
    %235 = tpu.matmul %234, %3, %cst_50 {dimension_numbers = #tpu.dot_dimension_numbers<[1], [0], [0], [1], [0, 0, 1, 1], [], []>} : vector<16x128xbf16>, vector<128x512xbf16>, vector<16x512xf32> -> vector<16x512xf32>
    %236 = arith.addf %233, %235 : vector<16x512xf32>
    %237 = vector.extract_strided_slice %236 {offsets = [0, 0], sizes = [16, 128], strides = [1, 1]} : vector<16x512xf32> to vector<16x128xf32>
    %238 = arith.negf %237 : vector<16x128xf32>
    %239 = math.exp %238 : vector<16x128xf32>
    %cst_51 = arith.constant 1.000000e+00 : f32
    %240 = vector.broadcast %cst_51 : f32 to vector<16x128xf32>
    %241 = arith.addf %240, %239 : vector<16x128xf32>
    %242 = arith.divf %240, %241 : vector<16x128xf32>
    %243 = vector.extract_strided_slice %236 {offsets = [0, 128], sizes = [16, 128], strides = [1, 1]} : vector<16x512xf32> to vector<16x128xf32>
    %244 = arith.negf %243 : vector<16x128xf32>
    %245 = math.exp %244 : vector<16x128xf32>
    %cst_52 = arith.constant 1.000000e+00 : f32
    %246 = vector.broadcast %cst_52 : f32 to vector<16x128xf32>
    %247 = arith.addf %246, %245 : vector<16x128xf32>
    %248 = arith.divf %246, %247 : vector<16x128xf32>
    %249 = vector.extract_strided_slice %236 {offsets = [0, 256], sizes = [16, 128], strides = [1, 1]} : vector<16x512xf32> to vector<16x128xf32>
    %250 = math.tanh %249 : vector<16x128xf32>
    %251 = vector.extract_strided_slice %236 {offsets = [0, 384], sizes = [16, 128], strides = [1, 1]} : vector<16x512xf32> to vector<16x128xf32>
    %252 = arith.negf %251 : vector<16x128xf32>
    %253 = math.exp %252 : vector<16x128xf32>
    %cst_53 = arith.constant 1.000000e+00 : f32
    %254 = vector.broadcast %cst_53 : f32 to vector<16x128xf32>
    %255 = arith.addf %254, %253 : vector<16x128xf32>
    %256 = arith.divf %254, %255 : vector<16x128xf32>
    %257 = arith.mulf %248, %227 : vector<16x128xf32>
    %258 = arith.mulf %242, %250 : vector<16x128xf32>
    %259 = arith.addf %257, %258 : vector<16x128xf32>
    %260 = math.tanh %259 : vector<16x128xf32>
    %261 = arith.mulf %256, %260 : vector<16x128xf32>
    %c8_i32 = arith.constant 8 : i32
    %c0_54 = arith.constant 0 : index
    %c0_55 = arith.constant 0 : index
    %262 = vector.load %arg5[%c0_54, %c0_55] : memref<16x128xf32, #tpu.memory_space<vmem>>, vector<16x128xf32>
    tpu.vector_store %arg5[%c0_54, %c0_55], %261 {strides = array<i32>} : memref<16x128xf32, #tpu.memory_space<vmem>>, vector<16x128xf32>,
    %c0_56 = arith.constant 0 : index
    %c0_57 = arith.constant 0 : index
    %263 = vector.load %arg6[%c0_56, %c0_57] : memref<16x128xf32, #tpu.memory_space<vmem>>, vector<16x128xf32>
    tpu.vector_store %arg6[%c0_56, %c0_57], %259 {strides = array<i32>} : memref<16x128xf32, #tpu.memory_space<vmem>>, vector<16x128xf32>,
    %c1_i32_58 = arith.constant 1 : i32
    %264 = arith.cmpi eq, %arg1, %c1_i32_58 : i32
    %265 = arith.extui %264 : i1 to i32
    %c0_i32_59 = arith.constant 0 : i32
    %266 = arith.cmpi ne, %265, %c0_i32_59 : i32
    scf.if %266 {
      %267 = arith.truncf %261 : vector<16x128xf32> to vector<16x128xbf16>
      %c0_60 = arith.constant 0 : index
      %c0_61 = arith.constant 0 : index
      %268 = vector.load %arg4[%c0_60, %c0_61] : memref<16x128xbf16, #tpu.memory_space<vmem>>, vector<16x128xbf16>
      tpu.vector_store %arg4[%c0_60, %c0_61], %267 {strides = array<i32>} : memref<16x128xbf16, #tpu.memory_space<vmem>>, vector<16x128xbf16>,
    } else {
    }
    return
  }
  func.func @transform_0(%arg0: i32, %arg1: i32) -> (i32, i32, i32) {
    %c0_i32 = arith.constant 0 : i32
    %c0_i32_0 = arith.constant 0 : i32
    return %arg1, %arg0, %c0_i32 : i32, i32, i32
  }
  func.func @transform_1(%arg0: i32, %arg1: i32) -> (i32, i32) {
    %c0_i32 = arith.constant 0 : i32
    %c0_i32_0 = arith.constant 0 : i32
    %c0_i32_1 = arith.constant 0 : i32
    return %c0_i32, %c0_i32_0 : i32, i32
  }
  func.func @transform_2(%arg0: i32, %arg1: i32) -> (i32, i32) {
    %c0_i32 = arith.constant 0 : i32
    %c0_i32_0 = arith.constant 0 : i32
    return %arg0, %c0_i32 : i32, i32
  }
}

</mosaic_0001>

<llo_original>
// kernel: tpu_custom_call.1
$region0: #{tpu_custom_call.1}
  #allocation0 [shape = 'u32[]', space=smem, size = 0x4, offset = 0x4, fixed_abs, tag = 'smem constant byte address 0x4 - core index']
  #allocation1 [shape = 'u32[144,128]{1,0:T(1,128)}', space=vmem, size = 0x12000, scoped, tag = 'internal scratch']
  #allocation2 [shape = 'f32[16,128]{1,0:T(8,128)}', space=vmem, size = 0x2000, scoped, tag = 'scratch operand']
  #allocation3 [shape = 'f32[16,128]{1,0:T(8,128)}', space=vmem, size = 0x2000, scoped, tag = 'scratch operand']
  #allocation10 [shape = 's32[]', space=sflag, size = 0x4, offset = 0, fixed_abs, tag = 'sflag constant byte address 0x0 - dummy sync flag']
  %s0 = inlined_call_operand.hbm [shape: bf16[16,32,512], index: 0, kind: input, shape index: {}]
  %s1 = inlined_call_operand.hbm [shape: bf16[128,512], index: 1, kind: input, shape index: {}]
  %s2 = inlined_call_operand.hbm [shape: bf16[32,128], index: 2, kind: output, shape index: {}]
  %s3 = sld [smem:[#allocation0]]
  $region57: #{tpu_custom_call.1} parent=0
    _
  %s5 = ssub.s32 1, %s3
  %s6 = scalar_select 0, %s5, %s3
  $region1: #{tpu_custom_call.1} parent=0
    #allocation4 [shape = 'u8[262144]{0}', space=vmem, size = 0x40000, scoped, tag = 'input window, operand 0']
    #allocation5 [shape = 's32[2]{0}', space=sflag, size = 0x8, scoped, tag = 'scoped memory for tpu_custom_call.1']
    #allocation6 [shape = 's32[2]{0}', space=sflag, size = 0x8, scoped, tag = 'scoped memory for tpu_custom_call.1']
    #allocation7 [shape = 'u8[131072]{0}', space=vmem, size = 0x20000, scoped, tag = 'input window, operand 1, single buffered']
    #allocation8 [shape = 's32[1]{0}', space=sflag, size = 0x4, scoped, tag = 'scoped memory for tpu_custom_call.1']
    #allocation9 [shape = 'u8[8192]{0}', space=vmem, size = 0x2000, scoped, tag = 'output window, operand 0']
    %7 = vsyncpa [#allocation5], 0
    %s8 = scalar_lea.sflag [#allocation5], 1
    %9 = vsyncpa %s8, 0
    %10 = vsyncpa [#allocation8], 0
    %11 = vsyncpa [#allocation6], 0
    %s12 = scalar_lea.sflag [#allocation6], 1
    %13 = vsyncpa %s12, 0
    loop: start=0, step=1, limit=6
    $region2: #{tpu_custom_call.1} parent=1 // loop_pre_header
      _
    $region3: #{tpu_custom_call.1} parent=1 // loop_header
      %s15 = sphi 0, %s19
      %p16 = scmp.ge.s32.totalorder %s15, 6
      %s22 = sphi 0, %s34
      %s23 = sphi 0, %s30
      %s24 = sphi 0, %s22
      %s25 = sphi 0, %s23
      %s26 = sphi 0, %s24
      %s27 = sphi 0, %s25
      %s39 = sphi 0, %s41
      %s42 = sphi 0, %s39
      %s43 = sphi 0, %s42
      %s59 = sphi 0, %s43
      %s63 = sphi 0, %s63
      %s65 = sphi 0, %s63
      %s66 = sphi 0, %s65
      %s80 = sphi 0, %s66
      %s86 = sphi 0, %s88
      %s89 = sphi 0, %s86
      %s90 = sphi 0, %s89
      %s106 = sphi 0, %s90
    $region4: #{tpu_custom_call.1} parent=1 // loop_header_branch
      %18 = sbr.rel (%p16) target = $region8
    $region5: #{tpu_custom_call.1} parent=1 // loop_body
      %s20 = ssub.s32 %s15, 1
      %s21 = ssub.s32 %s15, 2
      %s28 = sadd.s32 1, %s23
      %p29 = scmp.ge.s32.totalorder %s28, 2
      %s30 = scalar_select %p29, 0, %s28
      %s31 = sadd.s32 1, %s22
      %s32 = scalar_select %p29, %s31, %s22
      %p33 = scmp.ge.s32.totalorder %s32, 2
      %s34 = scalar_select %p33, 0, %s32
      %s35 = ssub.s32 %s23, %s30
      %s36 = ssub.s32 %s22, %s34
      %s37 = sor.u32 %s35, %s36
      %p38 = scmp.eq.s32.totalorder %s37, 0
      %s40 = sadd.s32 %s39, 1
      %s41 = scalar_select %p38, %s39, %s40
      %p44 = pneg %p38
      %p45 = scmp.eq.s32.totalorder %s15, 3
      %p46 = por %p44, %p45
      %p47 = scmp.ne.s32.totalorder %s39, %s42
      %p48 = scmp.eq.s32.totalorder %s15, 0
      %p49 = por %p47, %p48
      %p50 = scmp.ne.s32.totalorder %s39, %s42
      %p51 = scmp.eq.s32.totalorder %s20, 3
      %p52 = por %p50, %p51
      %p53 = scmp.ne.s32.totalorder %s42, %s43
      %p54 = scmp.eq.s32.totalorder %s20, 0
      %p55 = por %p53, %p54
      %p56 = scmp.ne.s32.totalorder %s42, %s43
      %p57 = scmp.eq.s32.totalorder %s21, 3
      %p58 = por %p56, %p57
      %p60 = scmp.ne.s32.totalorder %s43, %s59
      %p61 = scmp.eq.s32.totalorder %s21, 0
      %p62 = por %p60, %p61
      %s64 = sadd.s32 %s63, 1
      %p67 = scmp.eq.s32.totalorder %s15, 3
      %p68 = scmp.ne.s32.totalorder %s63, %s65
      %p69 = scmp.eq.s32.totalorder %s15, 0
      %p70 = por %p68, %p69
      %p71 = scmp.ne.s32.totalorder %s63, %s65
      %p72 = scmp.eq.s32.totalorder %s20, 3
      %p73 = por %p71, %p72
      %p74 = scmp.ne.s32.totalorder %s65, %s66
      %p75 = scmp.eq.s32.totalorder %s20, 0
      %p76 = por %p74, %p75
      %p77 = scmp.ne.s32.totalorder %s65, %s66
      %p78 = scmp.eq.s32.totalorder %s21, 3
      %p79 = por %p77, %p78
      %p81 = scmp.ne.s32.totalorder %s66, %s80
      %p82 = scmp.eq.s32.totalorder %s21, 0
      %p83 = por %p81, %p82
      %s84 = ssub.s32 %s22, %s34
      %p85 = scmp.eq.s32.totalorder %s84, 0
      %s87 = sadd.s32 %s86, 1
      %s88 = scalar_select %p85, %s86, %s87
      %p91 = pneg %p85
      %p92 = scmp.eq.s32.totalorder %s15, 3
      %p93 = por %p91, %p92
      %p94 = scmp.ne.s32.totalorder %s86, %s89
      %p95 = scmp.eq.s32.totalorder %s15, 0
      %p96 = por %p94, %p95
      %p97 = scmp.ne.s32.totalorder %s86, %s89
      %p98 = scmp.eq.s32.totalorder %s20, 3
      %p99 = por %p97, %p98
      %p100 = scmp.ne.s32.totalorder %s89, %s90
      %p101 = scmp.eq.s32.totalorder %s20, 0
      %p102 = por %p100, %p101
      %p103 = scmp.ne.s32.totalorder %s89, %s90
      %p104 = scmp.eq.s32.totalorder %s21, 3
      %p105 = por %p103, %p104
      %p107 = scmp.ne.s32.totalorder %s90, %s106
      %p108 = scmp.eq.s32.totalorder %s21, 0
      %p109 = por %p107, %p108
      %p110 = scmp.le.s32.totalorder 1, %s15
      %p111 = scmp.lt.s32.totalorder %s15, 5
      %p112 = pnand %p110, %p111
      %p113 = pneg %p112
      // Predicated region
      $region9: #{tpu_custom_call.1} parent=5 // pred_check
        _
      $region10: #{tpu_custom_call.1} parent=5 // pred_check_branch
        %115 = sbr.rel (%p112) target = $region12
      $region11: #{tpu_custom_call.1} parent=5 // pred_region
        %s116 = ssub.s32 %s15, 1
        // Predicated region
        $region13: #{tpu_custom_call.1} parent=11 // pred_check
          %p117 = pneg %p76
        $region14: #{tpu_custom_call.1} parent=11 // pred_check_branch
          %119 = sbr.rel (%p117) target = $region16
        $region15: #{tpu_custom_call.1} parent=11 // pred_region
          %s121 = ssub.s32 4096, 4096
          %122 = vsyncadd [#allocation8], %s121
          %s123 = sshll.u32 [#allocation7], 4
          %s124 = int_to_ptr.vmem [resolvable:$true] %s123
          %129 = dma.hbm_to_vmem [thread:$0]  %s1, 4096, %s124, [#allocation8], 256, 256, 16
        $region16: #{tpu_custom_call.1} parent=11 // pred_fallthru
          _
      $region12: #{tpu_custom_call.1} parent=5 // pred_fallthru
        _
      %p130 = scmp.lt.s32.totalorder %s15, 4
      // Predicated region
      $region17: #{tpu_custom_call.1} parent=5 // pred_check
        %p131 = pneg %p130
      $region18: #{tpu_custom_call.1} parent=5 // pred_check_branch
        %133 = sbr.rel (%p131) target = $region20
      $region19: #{tpu_custom_call.1} parent=5 // pred_region
        // Predicated region
        $region21: #{tpu_custom_call.1} parent=19 // pred_check
          %p134 = pneg %p49
        $region22: #{tpu_custom_call.1} parent=19 // pred_check_branch
          %136 = sbr.rel (%p134) target = $region24
        $region23: #{tpu_custom_call.1} parent=19 // pred_region
          #allocation11 [shape = 'u32[6]{0}', space=smem, size = 0x18, scoped, tag = 'DMA stride descriptor']
          %s137 = sand.u32 %s39, 1
          %s138 = scalar_lea.sflag [#allocation5], %s137
          %s139 = sand.u32 %s39, 1
          %s140 = smul.addr %s139, 256
          %s141 = scalar_lea.vmem [#allocation4], %s140
          %s142 = smul.u32 8, %s23
          %s143 = smul.u32 2, %s22
          %s145 = ssub.s32 4096, 4096
          %146 = vsyncadd %s138, %s145
          %s147 = smul.addr %s143, 4
          %s148 = smul.addr %s142, 16
          %s149 = sadd.s32 %s147, %s148
          %s150 = smul.addr %s149, 64
          %s151 = scalar_lea.hbm %s0, %s150
          %s153 = sshll.u32 1, 14
          %s154 = sxor.u32 4294967295, %s153
          %s156 = sld [smem:[#allocation0]]
          %s157 = sadd.s32 2, %s156
          %s159 = sshll.u32 7, 26
          %s160 = sxor.u32 4294967295, %s159
          %s161 = sand.u32 0, %s160
          %s162 = sshll.u32 %s157, 26
          %s163 = sor.u32 %s161, %s162
          %s164 = sshll.u32 %s141, 4
          %s165 = int_to_ptr.vmem [resolvable:$true] %s164
          %171 = sst [smem:[#allocation11]] 1024
          %s172 = scalar_lea.smem [#allocation11], 1
          %173 = sst [smem:[%s172]] 512
          %s174 = scalar_lea.smem [#allocation11], 2
          %175 = sst [smem:[%s174]] 2
          %s176 = scalar_lea.smem [#allocation11], 3
          %177 = sst [smem:[%s176]] 256
          %s178 = scalar_lea.smem [#allocation11], 4
          %179 = sst [smem:[%s178]] 256
          %s180 = scalar_lea.smem [#allocation11], 5
          %181 = sst [smem:[%s180]] 16
          %183 = dma.general %s151, 4096, %s165, %s138, 131072, [#allocation11], %s163, 0
        $region24: #{tpu_custom_call.1} parent=19 // pred_fallthru
          _
      $region20: #{tpu_custom_call.1} parent=5 // pred_fallthru
        _
      %p184 = scmp.le.s32.totalorder 1, %s15
      %p185 = scmp.lt.s32.totalorder %s15, 5
      %p186 = pnand %p184, %p185
      %p187 = pneg %p186
      // Predicated region
      $region25: #{tpu_custom_call.1} parent=5 // pred_check
        _
      $region26: #{tpu_custom_call.1} parent=5 // pred_check_branch
        %189 = sbr.rel (%p186) target = $region28
      $region27: #{tpu_custom_call.1} parent=5 // pred_region
        %s190 = ssub.s32 %s15, 1
        %s191 = sand.u32 %s42, 1
        %s192 = scalar_lea.sflag [#allocation5], %s191
        %s193 = sand.u32 %s42, 1
        %s194 = smul.addr %s193, 256
        %s195 = scalar_lea.vmem [#allocation4], %s194
        // Predicated region
        $region29: #{tpu_custom_call.1} parent=27 // pred_check
          %p196 = pneg %p55
        $region30: #{tpu_custom_call.1} parent=27 // pred_check_branch
          %198 = sbr.rel (%p196) target = $region32
        $region31: #{tpu_custom_call.1} parent=27 // pred_region
          %199 = dma.done %s192, 4096
        $region32: #{tpu_custom_call.1} parent=27 // pred_fallthru
          _
        // Predicated region
        $region33: #{tpu_custom_call.1} parent=27 // pred_check
          %p200 = pneg %p76
        $region34: #{tpu_custom_call.1} parent=27 // pred_check_branch
          %202 = sbr.rel (%p200) target = $region36
        $region35: #{tpu_custom_call.1} parent=27 // pred_region
          %203 = dma.done [#allocation8], 4096
        $region36: #{tpu_custom_call.1} parent=27 // pred_fallthru
          _
        %s204 = sand.u32 %s42, 1
        %s205 = scalar_lea.sflag [#allocation5], %s204
        %s206 = sand.u32 %s42, 1
        %s207 = smul.addr %s206, 256
        %s208 = scalar_lea.vmem [#allocation4], %s207
        %p209 = pneg %p55
        %p210 = pneg %p52
        %p211 = pneg %p76
        %p212 = pneg %p73
        %p213 = pneg %p102
        %p214 = pneg %p99
        %s215 = sand.u32 %s89, 1
        %s216 = scalar_lea.sflag [#allocation6], %s215
        %s217 = sand.u32 %s89, 1
        %s218 = smul.addr %s217, 8
        %s219 = scalar_lea.vmem [#allocation9], %s218
        %s220 = smul.u32 8, %s25
        %s221 = smul.u32 2, %s24
        %s222 = smul.u32 2, %s24
        %p224 = scmp.eq.s32.totalorder %s25, 0
        // Predicated region
        $region37: #{tpu_custom_call.1} parent=27 // pred_check
          %p225 = pneg %p224
        $region38: #{tpu_custom_call.1} parent=27 // pred_check_branch
          %227 = sbr.rel (%p225) target = $region40
        $region39: #{tpu_custom_call.1} parent=27 // pred_region
          %228 = vst [vmem:[#allocation2] sm:$0xff] 0.0
          %229 = vst [vmem:[#allocation2 + $0x8] sm:$0xff] 0.0
          %230 = vst [vmem:[#allocation3] sm:$0xff] 0.0
          %231 = vst [vmem:[#allocation3 + $0x8] sm:$0xff] 0.0
        $region40: #{tpu_custom_call.1} parent=27 // pred_fallthru
          _
        %v232 = vld [vmem:[#allocation7] sm:$0xff]
        %v233 = vld [vmem:[#allocation7 + $0x8] sm:$0xff]
        %v234 = vld [vmem:[#allocation7 + $0x10] sm:$0xff]
        %v235 = vld [vmem:[#allocation7 + $0x18] sm:$0xff]
        %v236 = vld [vmem:[#allocation7 + $0x20] sm:$0xff]
        %v237 = vld [vmem:[#allocation7 + $0x28] sm:$0xff]
        %v238 = vld [vmem:[#allocation7 + $0x30] sm:$0xff]
        %v239 = vld [vmem:[#allocation7 + $0x38] sm:$0xff]
        %v240 = vld [vmem:[#allocation7 + $0x40] sm:$0xff]
        %v241 = vld [vmem:[#allocation7 + $0x48] sm:$0xff]
        %v242 = vld [vmem:[#allocation7 + $0x50] sm:$0xff]
        %v243 = vld [vmem:[#allocation7 + $0x58] sm:$0xff]
        %v244 = vld [vmem:[#allocation7 + $0x60] sm:$0xff]
        %v245 = vld [vmem:[#allocation7 + $0x68] sm:$0xff]
        %v246 = vld [vmem:[#allocation7 + $0x70] sm:$0xff]
        %v247 = vld [vmem:[#allocation7 + $0x78] sm:$0xff]
        %v248 = vld [vmem:[#allocation7 + $0x80] sm:$0xff]
        %v249 = vld [vmem:[#allocation7 + $0x88] sm:$0xff]
        %v250 = vld [vmem:[#allocation7 + $0x90] sm:$0xff]
        %v251 = vld [vmem:[#allocation7 + $0x98] sm:$0xff]
        %v252 = vld [vmem:[#allocation7 + $0xa0] sm:$0xff]
        %v253 = vld [vmem:[#allocation7 + $0xa8] sm:$0xff]
        %v254 = vld [vmem:[#allocation7 + $0xb0] sm:$0xff]
        %v255 = vld [vmem:[#allocation7 + $0xb8] sm:$0xff]
        %v256 = vld [vmem:[#allocation7 + $0xc0] sm:$0xff]
        %v257 = vld [vmem:[#allocation7 + $0xc8] sm:$0xff]
        %v258 = vld [vmem:[#allocation7 + $0xd0] sm:$0xff]
        %v259 = vld [vmem:[#allocation7 + $0xd8] sm:$0xff]
        %v260 = vld [vmem:[#allocation7 + $0xe0] sm:$0xff]
        %v261 = vld [vmem:[#allocation7 + $0xe8] sm:$0xff]
        %v262 = vld [vmem:[#allocation7 + $0xf0] sm:$0xff]
        %v263 = vld [vmem:[#allocation7 + $0xf8] sm:$0xff]
        %v264 = vld [vmem:[#allocation2] sm:$0xff]
        %v265 = vld [vmem:[#allocation2 + $0x8] sm:$0xff]
        %v266 = vld [vmem:[#allocation3] sm:$0xff]
        %v267 = vld [vmem:[#allocation3 + $0x8] sm:$0xff]
        %v268 = vld [vmem:[%s195] sm:$0xff]
        %v269 = vld [vmem:[%s195 + $0x8] sm:$0xff]
        %v270 = vld [vmem:[%s195 + $0x10] sm:$0xff]
        %v271 = vld [vmem:[%s195 + $0x18] sm:$0xff]
        %v272 = vunpack.c.l.bf16 %v268
        %v273 = vunpack.c.h.bf16 %v268
        %v274 = vunpack.c.l.bf16 %v269
        %v275 = vunpack.c.h.bf16 %v269
        %v276 = vunpack.c.l.bf16 %v270
        %v277 = vunpack.c.h.bf16 %v270
        %v278 = vunpack.c.l.bf16 %v271
        %v279 = vunpack.c.h.bf16 %v271
        %v280 = vpack.c.bf16 %v265, %v264
        %v313 = vunpack.c.l.b16 %v232
        %v314 = vunpack.c.h.b16 %v232
        %v315 = vunpack.c.l.b16 %v233
        %v316 = vunpack.c.h.b16 %v233
        %v317 = vunpack.c.l.b16 %v234
        %v318 = vunpack.c.h.b16 %v234
        %v319 = vunpack.c.l.b16 %v235
        %v320 = vunpack.c.h.b16 %v235
        %v321 = vunpack.c.l.b16 %v236
        %v322 = vunpack.c.h.b16 %v236
        %v323 = vunpack.c.l.b16 %v237
        %v324 = vunpack.c.h.b16 %v237
        %v325 = vunpack.c.l.b16 %v238
        %v326 = vunpack.c.h.b16 %v238
        %v327 = vunpack.c.l.b16 %v239
        %v328 = vunpack.c.h.b16 %v239
        %v329 = vunpack.c.l.b16 %v240
        %v330 = vunpack.c.h.b16 %v240
        %v331 = vunpack.c.l.b16 %v241
        %v332 = vunpack.c.h.b16 %v241
        %v333 = vunpack.c.l.b16 %v242
        %v334 = vunpack.c.h.b16 %v242
        %v335 = vunpack.c.l.b16 %v243
        %v336 = vunpack.c.h.b16 %v243
        %v337 = vunpack.c.l.b16 %v244
        %v338 = vunpack.c.h.b16 %v244
        %v339 = vunpack.c.l.b16 %v245
        %v340 = vunpack.c.h.b16 %v245
        %v341 = vunpack.c.l.b16 %v246
        %v342 = vunpack.c.h.b16 %v246
        %v343 = vunpack.c.l.b16 %v247
        %v344 = vunpack.c.h.b16 %v247
        %v345 = vunpack.c.l.b16 %v248
        %v346 = vunpack.c.h.b16 %v248
        %v347 = vunpack.c.l.b16 %v249
        %v348 = vunpack.c.h.b16 %v249
        %v349 = vunpack.c.l.b16 %v250
        %v350 = vunpack.c.h.b16 %v250
        %v351 = vunpack.c.l.b16 %v251
        %v352 = vunpack.c.h.b16 %v251
        %v353 = vunpack.c.l.b16 %v252
        %v354 = vunpack.c.h.b16 %v252
        %v355 = vunpack.c.l.b16 %v253
        %v356 = vunpack.c.h.b16 %v253
        %v357 = vunpack.c.l.b16 %v254
        %v358 = vunpack.c.h.b16 %v254
        %v359 = vunpack.c.l.b16 %v255
        %v360 = vunpack.c.h.b16 %v255
        %v361 = vunpack.c.l.b16 %v256
        %v362 = vunpack.c.h.b16 %v256
        %v363 = vunpack.c.l.b16 %v257
        %v364 = vunpack.c.h.b16 %v257
        %v365 = vunpack.c.l.b16 %v258
        %v366 = vunpack.c.h.b16 %v258
        %v367 = vunpack.c.l.b16 %v259
        %v368 = vunpack.c.h.b16 %v259
        %v369 = vunpack.c.l.b16 %v260
        %v370 = vunpack.c.h.b16 %v260
        %v371 = vunpack.c.l.b16 %v261
        %v372 = vunpack.c.h.b16 %v261
        %v373 = vunpack.c.l.b16 %v262
        %v374 = vunpack.c.h.b16 %v262
        %v375 = vunpack.c.l.b16 %v263
        %v376 = vunpack.c.h.b16 %v263
        %v377 = vpack.c.b16 %v317, %v313
        %v378 = vpack.c.b16 %v318, %v314
        %v379 = vpack.c.b16 %v319, %v315
        %v380 = vpack.c.b16 %v320, %v316
        %v381 = vpack.c.b16 %v325, %v321
        %v382 = vpack.c.b16 %v326, %v322
        %v383 = vpack.c.b16 %v327, %v323
        %v384 = vpack.c.b16 %v328, %v324
        %v385 = vpack.c.b16 %v333, %v329
        %v386 = vpack.c.b16 %v334, %v330
        %v387 = vpack.c.b16 %v335, %v331
        %v388 = vpack.c.b16 %v336, %v332
        %v389 = vpack.c.b16 %v341, %v337
        %v390 = vpack.c.b16 %v342, %v338
        %v391 = vpack.c.b16 %v343, %v339
        %v392 = vpack.c.b16 %v344, %v340
        %v393 = vpack.c.b16 %v349, %v345
        %v394 = vpack.c.b16 %v350, %v346
        %v395 = vpack.c.b16 %v351, %v347
        %v396 = vpack.c.b16 %v352, %v348
        %v397 = vpack.c.b16 %v357, %v353
        %v398 = vpack.c.b16 %v358, %v354
        %v399 = vpack.c.b16 %v359, %v355
        %v400 = vpack.c.b16 %v360, %v356
        %v401 = vpack.c.b16 %v365, %v361
        %v402 = vpack.c.b16 %v366, %v362
        %v403 = vpack.c.b16 %v367, %v363
        %v404 = vpack.c.b16 %v368, %v364
        %v405 = vpack.c.b16 %v373, %v369
        %v406 = vpack.c.b16 %v374, %v370
        %v407 = vpack.c.b16 %v375, %v371
        %v408 = vpack.c.b16 %v376, %v372
        %441 = vmatprep.subr.bf16.mxu0 %v406
        %442 = vmatpush1.bf16.msra.mxu0 %v405
        %443 = vmatprep.subr.bf16.mxu0 %v402
        %444 = vmatpush1.bf16.msra.mxu0 %v401
        %445 = vmatprep.subr.bf16.mxu0 %v398
        %446 = vmatpush1.bf16.msra.mxu0 %v397
        %447 = vmatprep.subr.bf16.mxu0 %v394
        %448 = vmatpush1.bf16.msra.mxu0 %v393
        %449 = vmatprep.subr.bf16.mxu0 %v390
        %450 = vmatpush1.bf16.msra.mxu0 %v389
        %451 = vmatprep.subr.bf16.mxu0 %v386
        %452 = vmatpush1.bf16.msra.mxu0 %v385
        %453 = vmatprep.subr.bf16.mxu0 %v382
        %454 = vmatpush1.bf16.msra.mxu0 %v381
        %455 = vmatprep.subr.bf16.mxu0 %v378
        %456 = vmatpush1.bf16.msra.mxu0 %v377
        %457 = vmatprep.subr.bf16.mxu0 0
        %458 = vmatpush2.bf16.msra.mxu0 0
        %459 = vmatprep.subr.bf16.mxu0 0
        %460 = vmatpush2.bf16.msra.mxu0 0
        %461 = vmatprep.subr.bf16.mxu0 0
        %462 = vmatpush2.bf16.msra.mxu0 0
        %463 = vmatprep.subr.bf16.mxu0 0
        %464 = vmatpush2.bf16.msra.mxu0 0
        %465 = vmatprep.subr.bf16.mxu0 0
        %466 = vmatpush2.bf16.msra.mxu0 0
        %467 = vmatprep.subr.bf16.mxu0 0
        %468 = vmatpush2.bf16.msra.mxu0 0
        %469 = vmatprep.subr.bf16.mxu0 0
        %470 = vmatpush2.bf16.msra.mxu0 0
        %471 = vmatprep.subr.bf16.mxu0 0
        %472 = vmatpush2.bf16.msra.mxu0 0
        %473 = vmatprep.mubr.bf16.mxu0 0
        %474 = vmatmul.mubr.bf16.gmra.mxu0 %v280
        %v475 = vpop.f32.mrf.mxu0
        %v476 = vadd.f32 0.0, %v475
        %v477 = vpop.f32.mrf.mxu0
        %v478 = vadd.f32 0.0, %v477
        %v479 = vpop.f32.mrf.mxu0
        %v480 = vadd.f32 0.0, %v479
        %v481 = vpop.f32.mrf.mxu0
        %v482 = vadd.f32 0.0, %v481
        %483 = vdwg.mxu0
        %484 = vmatprep.subr.bf16.mxu0 %v408
        %485 = vmatpush1.bf16.msra.mxu0 %v407
        %486 = vmatprep.subr.bf16.mxu0 %v404
        %487 = vmatpush1.bf16.msra.mxu0 %v403
        %488 = vmatprep.subr.bf16.mxu0 %v400
        %489 = vmatpush1.bf16.msra.mxu0 %v399
        %490 = vmatprep.subr.bf16.mxu0 %v396
        %491 = vmatpush1.bf16.msra.mxu0 %v395
        %492 = vmatprep.subr.bf16.mxu0 %v392
        %493 = vmatpush1.bf16.msra.mxu0 %v391
        %494 = vmatprep.subr.bf16.mxu0 %v388
        %495 = vmatpush1.bf16.msra.mxu0 %v387
        %496 = vmatprep.subr.bf16.mxu0 %v384
        %497 = vmatpush1.bf16.msra.mxu0 %v383
        %498 = vmatprep.subr.bf16.mxu0 %v380
        %499 = vmatpush1.bf16.msra.mxu0 %v379
        %500 = vmatprep.subr.bf16.mxu0 0
        %501 = vmatpush2.bf16.msra.mxu0 0
        %502 = vmatprep.subr.bf16.mxu0 0
        %503 = vmatpush2.bf16.msra.mxu0 0
        %504 = vmatprep.subr.bf16.mxu0 0
        %505 = vmatpush2.bf16.msra.mxu0 0
        %506 = vmatprep.subr.bf16.mxu0 0
        %507 = vmatpush2.bf16.msra.mxu0 0
        %508 = vmatprep.subr.bf16.mxu0 0
        %509 = vmatpush2.bf16.msra.mxu0 0
        %510 = vmatprep.subr.bf16.mxu0 0
        %511 = vmatpush2.bf16.msra.mxu0 0
        %512 = vmatprep.subr.bf16.mxu0 0
        %513 = vmatpush2.bf16.msra.mxu0 0
        %514 = vmatprep.subr.bf16.mxu0 0
        %515 = vmatpush2.bf16.msra.mxu0 0
        %516 = vmatprep.mubr.bf16.mxu0 0
        %517 = vmatmul.mubr.bf16.gmra.mxu0 %v280
        %v518 = vpop.f32.mrf.mxu0
        %v519 = vadd.f32 0.0, %v518
        %v520 = vpop.f32.mrf.mxu0
        %v521 = vadd.f32 0.0, %v520
        %v522 = vpop.f32.mrf.mxu0
        %v523 = vadd.f32 0.0, %v522
        %v524 = vpop.f32.mrf.mxu0
        %v525 = vadd.f32 0.0, %v524
        %526 = vdwg.mxu0
        %v527 = vadd.f32 %v272, %v476
        %v528 = vadd.f32 %v273, %v478
        %v529 = vadd.f32 %v274, %v519
        %v530 = vadd.f32 %v275, %v521
        %v531 = vadd.f32 %v276, %v480
        %v532 = vadd.f32 %v277, %v482
        %v533 = vadd.f32 %v278, %v523
        %v534 = vadd.f32 %v279, %v525
        %v535 = vxor.u32 %v527, 2147483648
        %v536 = vxor.u32 %v531, 2147483648
        %v537 = vmul.f32 %v535, 1.442695
        %v538 = vpow.pop %v537
        %v539 = vmul.f32 %v536, 1.442695
        %v540 = vpow.pop %v539
        %v541 = vadd.f32 %v538, 1.0
        %v542 = vadd.f32 %v540, 1.0
        %v543 = vrcp.pop %v541
        %v544 = vmul.f32 1.0, %v543
        %v545 = vrcp.pop %v542
        %v546 = vmul.f32 1.0, %v545
        %v547 = vxor.u32 %v528, 2147483648
        %v548 = vxor.u32 %v532, 2147483648
        %v549 = vmul.f32 %v547, 1.442695
        %v550 = vpow.pop %v549
        %v551 = vmul.f32 %v548, 1.442695
        %v552 = vpow.pop %v551
        %v553 = vadd.f32 %v550, 1.0
        %v554 = vadd.f32 %v552, 1.0
        %v555 = vrcp.pop %v553
        %v556 = vmul.f32 1.0, %v555
        %v557 = vrcp.pop %v554
        %v558 = vmul.f32 1.0, %v557
        %v559 = vtanh.pop %v529
        %v560 = vtanh.pop %v533
        %v561 = vxor.u32 %v530, 2147483648
        %v562 = vxor.u32 %v534, 2147483648
        %v563 = vmul.f32 %v561, 1.442695
        %v564 = vpow.pop %v563
        %v565 = vmul.f32 %v562, 1.442695
        %v566 = vpow.pop %v565
        %v567 = vadd.f32 %v564, 1.0
        %v568 = vadd.f32 %v566, 1.0
        %v569 = vrcp.pop %v567
        %v570 = vmul.f32 1.0, %v569
        %v571 = vrcp.pop %v568
        %v572 = vmul.f32 1.0, %v571
        %v573 = vmul.f32 %v556, %v266
        %v574 = vmul.f32 %v558, %v267
        %v575 = vmul.f32 %v544, %v559
        %v576 = vmul.f32 %v546, %v560
        %v577 = vadd.f32 %v573, %v575
        %v578 = vadd.f32 %v574, %v576
        %v579 = vtanh.pop %v577
        %v580 = vtanh.pop %v578
        %v581 = vmul.f32 %v570, %v579
        %v582 = vmul.f32 %v572, %v580
        %s583 = scalar_lea.vmem %s195, 32 [#allocation4]
        %v584 = vld [vmem:[%s583] sm:$0xff]
        %v585 = vld [vmem:[%s583 + $0x8] sm:$0xff]
        %v586 = vld [vmem:[%s583 + $0x10] sm:$0xff]
        %v587 = vld [vmem:[%s583 + $0x18] sm:$0xff]
        %v588 = vunpack.c.l.bf16 %v584
        %v589 = vunpack.c.h.bf16 %v584
        %v590 = vunpack.c.l.bf16 %v585
        %v591 = vunpack.c.h.bf16 %v585
        %v592 = vunpack.c.l.bf16 %v586
        %v593 = vunpack.c.h.bf16 %v586
        %v594 = vunpack.c.l.bf16 %v587
        %v595 = vunpack.c.h.bf16 %v587
        %v596 = vpack.c.bf16 %v582, %v581
        %597 = vmatprep.subr.bf16.mxu0 %v406
        %598 = vmatpush1.bf16.msra.mxu0 %v405
        %599 = vmatprep.subr.bf16.mxu0 %v402
        %600 = vmatpush1.bf16.msra.mxu0 %v401
        %601 = vmatprep.subr.bf16.mxu0 %v398
        %602 = vmatpush1.bf16.msra.mxu0 %v397
        %603 = vmatprep.subr.bf16.mxu0 %v394
        %604 = vmatpush1.bf16.msra.mxu0 %v393
        %605 = vmatprep.subr.bf16.mxu0 %v390
        %606 = vmatpush1.bf16.msra.mxu0 %v389
        %607 = vmatprep.subr.bf16.mxu0 %v386
        %608 = vmatpush1.bf16.msra.mxu0 %v385
        %609 = vmatprep.subr.bf16.mxu0 %v382
        %610 = vmatpush1.bf16.msra.mxu0 %v381
        %611 = vmatprep.subr.bf16.mxu0 %v378
        %612 = vmatpush1.bf16.msra.mxu0 %v377
        %613 = vmatprep.subr.bf16.mxu0 0
        %614 = vmatpush2.bf16.msra.mxu0 0
        %615 = vmatprep.subr.bf16.mxu0 0
        %616 = vmatpush2.bf16.msra.mxu0 0
        %617 = vmatprep.subr.bf16.mxu0 0
        %618 = vmatpush2.bf16.msra.mxu0 0
        %619 = vmatprep.subr.bf16.mxu0 0
        %620 = vmatpush2.bf16.msra.mxu0 0
        %621 = vmatprep.subr.bf16.mxu0 0
        %622 = vmatpush2.bf16.msra.mxu0 0
        %623 = vmatprep.subr.bf16.mxu0 0
        %624 = vmatpush2.bf16.msra.mxu0 0
        %625 = vmatprep.subr.bf16.mxu0 0
        %626 = vmatpush2.bf16.msra.mxu0 0
        %627 = vmatprep.subr.bf16.mxu0 0
        %628 = vmatpush2.bf16.msra.mxu0 0
        %629 = vmatprep.mubr.bf16.mxu0 0
        %630 = vmatmul.mubr.bf16.gmra.mxu0 %v596
        %v631 = vpop.f32.mrf.mxu0
        %v632 = vadd.f32 0.0, %v631
        %v633 = vpop.f32.mrf.mxu0
        %v634 = vadd.f32 0.0, %v633
        %v635 = vpop.f32.mrf.mxu0
        %v636 = vadd.f32 0.0, %v635
        %v637 = vpop.f32.mrf.mxu0
        %v638 = vadd.f32 0.0, %v637
        %639 = vdwg.mxu0
        %640 = vmatprep.subr.bf16.mxu0 %v408
        %641 = vmatpush1.bf16.msra.mxu0 %v407
        %642 = vmatprep.subr.bf16.mxu0 %v404
        %643 = vmatpush1.bf16.msra.mxu0 %v403
        %644 = vmatprep.subr.bf16.mxu0 %v400
        %645 = vmatpush1.bf16.msra.mxu0 %v399
        %646 = vmatprep.subr.bf16.mxu0 %v396
        %647 = vmatpush1.bf16.msra.mxu0 %v395
        %648 = vmatprep.subr.bf16.mxu0 %v392
        %649 = vmatpush1.bf16.msra.mxu0 %v391
        %650 = vmatprep.subr.bf16.mxu0 %v388
        %651 = vmatpush1.bf16.msra.mxu0 %v387
        %652 = vmatprep.subr.bf16.mxu0 %v384
        %653 = vmatpush1.bf16.msra.mxu0 %v383
        %654 = vmatprep.subr.bf16.mxu0 %v380
        %655 = vmatpush1.bf16.msra.mxu0 %v379
        %656 = vmatprep.subr.bf16.mxu0 0
        %657 = vmatpush2.bf16.msra.mxu0 0
        %658 = vmatprep.subr.bf16.mxu0 0
        %659 = vmatpush2.bf16.msra.mxu0 0
        %660 = vmatprep.subr.bf16.mxu0 0
        %661 = vmatpush2.bf16.msra.mxu0 0
        %662 = vmatprep.subr.bf16.mxu0 0
        %663 = vmatpush2.bf16.msra.mxu0 0
        %664 = vmatprep.subr.bf16.mxu0 0
        %665 = vmatpush2.bf16.msra.mxu0 0
        %666 = vmatprep.subr.bf16.mxu0 0
        %667 = vmatpush2.bf16.msra.mxu0 0
        %668 = vmatprep.subr.bf16.mxu0 0
        %669 = vmatpush2.bf16.msra.mxu0 0
        %670 = vmatprep.subr.bf16.mxu0 0
        %671 = vmatpush2.bf16.msra.mxu0 0
        %672 = vmatprep.mubr.bf16.mxu0 0
        %673 = vmatmul.mubr.bf16.gmra.mxu0 %v596
        %v674 = vpop.f32.mrf.mxu0
        %v675 = vadd.f32 0.0, %v674
        %v676 = vpop.f32.mrf.mxu0
        %v677 = vadd.f32 0.0, %v676
        %v678 = vpop.f32.mrf.mxu0
        %v679 = vadd.f32 0.0, %v678
        %v680 = vpop.f32.mrf.mxu0
        %v681 = vadd.f32 0.0, %v680
        %682 = vdwg.mxu0
        %v683 = vadd.f32 %v588, %v632
        %v684 = vadd.f32 %v589, %v634
        %v685 = vadd.f32 %v590, %v675
        %v686 = vadd.f32 %v591, %v677
        %v687 = vadd.f32 %v592, %v636
        %v688 = vadd.f32 %v593, %v638
        %v689 = vadd.f32 %v594, %v679
        %v690 = vadd.f32 %v595, %v681
        %v691 = vxor.u32 %v683, 2147483648
        %v692 = vxor.u32 %v687, 2147483648
        %v693 = vmul.f32 %v691, 1.442695
        %v694 = vpow.pop %v693
        %v695 = vmul.f32 %v692, 1.442695
        %v696 = vpow.pop %v695
        %v697 = vadd.f32 %v694, 1.0
        %v698 = vadd.f32 %v696, 1.0
        %v699 = vrcp.pop %v697
        %v700 = vmul.f32 1.0, %v699
        %v701 = vrcp.pop %v698
        %v702 = vmul.f32 1.0, %v701
        %v703 = vxor.u32 %v684, 2147483648
        %v704 = vxor.u32 %v688, 2147483648
        %v705 = vmul.f32 %v703, 1.442695
        %v706 = vpow.pop %v705
        %v707 = vmul.f32 %v704, 1.442695
        %v708 = vpow.pop %v707
        %v709 = vadd.f32 %v706, 1.0
        %v710 = vadd.f32 %v708, 1.0
        %v711 = vrcp.pop %v709
        %v712 = vmul.f32 1.0, %v711
        %v713 = vrcp.pop %v710
        %v714 = vmul.f32 1.0, %v713
        %v715 = vtanh.pop %v685
        %v716 = vtanh.pop %v689
        %v717 = vxor.u32 %v686, 2147483648
        %v718 = vxor.u32 %v690, 2147483648
        %v719 = vmul.f32 %v717, 1.442695
        %v720 = vpow.pop %v719
        %v721 = vmul.f32 %v718, 1.442695
        %v722 = vpow.pop %v721
        %v723 = vadd.f32 %v720, 1.0
        %v724 = vadd.f32 %v722, 1.0
        %v725 = vrcp.pop %v723
        %v726 = vmul.f32 1.0, %v725
        %v727 = vrcp.pop %v724
        %v728 = vmul.f32 1.0, %v727
        %v729 = vmul.f32 %v712, %v577
        %v730 = vmul.f32 %v714, %v578
        %v731 = vmul.f32 %v700, %v715
        %v732 = vmul.f32 %v702, %v716
        %v733 = vadd.f32 %v729, %v731
        %v734 = vadd.f32 %v730, %v732
        %v735 = vtanh.pop %v733
        %v736 = vtanh.pop %v734
        %v737 = vmul.f32 %v726, %v735
        %v738 = vmul.f32 %v728, %v736
        %s739 = scalar_lea.vmem %s195, 64 [#allocation4]
        %v740 = vld [vmem:[%s739] sm:$0xff]
        %v741 = vld [vmem:[%s739 + $0x8] sm:$0xff]
        %v742 = vld [vmem:[%s739 + $0x10] sm:$0xff]
        %v743 = vld [vmem:[%s739 + $0x18] sm:$0xff]
        %v744 = vunpack.c.l.bf16 %v740
        %v745 = vunpack.c.h.bf16 %v740
        %v746 = vunpack.c.l.bf16 %v741
        %v747 = vunpack.c.h.bf16 %v741
        %v748 = vunpack.c.l.bf16 %v742
        %v749 = vunpack.c.h.bf16 %v742
        %v750 = vunpack.c.l.bf16 %v743
        %v751 = vunpack.c.h.bf16 %v743
        %v752 = vpack.c.bf16 %v738, %v737
        %753 = vmatprep.subr.bf16.mxu0 %v406
        %754 = vmatpush1.bf16.msra.mxu0 %v405
        %755 = vmatprep.subr.bf16.mxu0 %v402
        %756 = vmatpush1.bf16.msra.mxu0 %v401
        %757 = vmatprep.subr.bf16.mxu0 %v398
        %758 = vmatpush1.bf16.msra.mxu0 %v397
        %759 = vmatprep.subr.bf16.mxu0 %v394
        %760 = vmatpush1.bf16.msra.mxu0 %v393
        %761 = vmatprep.subr.bf16.mxu0 %v390
        %762 = vmatpush1.bf16.msra.mxu0 %v389
        %763 = vmatprep.subr.bf16.mxu0 %v386
        %764 = vmatpush1.bf16.msra.mxu0 %v385
        %765 = vmatprep.subr.bf16.mxu0 %v382
        %766 = vmatpush1.bf16.msra.mxu0 %v381
        %767 = vmatprep.subr.bf16.mxu0 %v378
        %768 = vmatpush1.bf16.msra.mxu0 %v377
        %769 = vmatprep.subr.bf16.mxu0 0
        %770 = vmatpush2.bf16.msra.mxu0 0
        %771 = vmatprep.subr.bf16.mxu0 0
        %772 = vmatpush2.bf16.msra.mxu0 0
        %773 = vmatprep.subr.bf16.mxu0 0
        %774 = vmatpush2.bf16.msra.mxu0 0
        %775 = vmatprep.subr.bf16.mxu0 0
        %776 = vmatpush2.bf16.msra.mxu0 0
        %777 = vmatprep.subr.bf16.mxu0 0
        %778 = vmatpush2.bf16.msra.mxu0 0
        %779 = vmatprep.subr.bf16.mxu0 0
        %780 = vmatpush2.bf16.msra.mxu0 0
        %781 = vmatprep.subr.bf16.mxu0 0
        %782 = vmatpush2.bf16.msra.mxu0 0
        %783 = vmatprep.subr.bf16.mxu0 0
        %784 = vmatpush2.bf16.msra.mxu0 0
        %785 = vmatprep.mubr.bf16.mxu0 0
        %786 = vmatmul.mubr.bf16.gmra.mxu0 %v752
        %v787 = vpop.f32.mrf.mxu0
        %v788 = vadd.f32 0.0, %v787
        %v789 = vpop.f32.mrf.mxu0
        %v790 = vadd.f32 0.0, %v789
        %v791 = vpop.f32.mrf.mxu0
        %v792 = vadd.f32 0.0, %v791
        %v793 = vpop.f32.mrf.mxu0
        %v794 = vadd.f32 0.0, %v793
        %795 = vdwg.mxu0
        %796 = vmatprep.subr.bf16.mxu0 %v408
        %797 = vmatpush1.bf16.msra.mxu0 %v407
        %798 = vmatprep.subr.bf16.mxu0 %v404
        %799 = vmatpush1.bf16.msra.mxu0 %v403
        %800 = vmatprep.subr.bf16.mxu0 %v400
        %801 = vmatpush1.bf16.msra.mxu0 %v399
        %802 = vmatprep.subr.bf16.mxu0 %v396
        %803 = vmatpush1.bf16.msra.mxu0 %v395
        %804 = vmatprep.subr.bf16.mxu0 %v392
        %805 = vmatpush1.bf16.msra.mxu0 %v391
        %806 = vmatprep.subr.bf16.mxu0 %v388
        %807 = vmatpush1.bf16.msra.mxu0 %v387
        %808 = vmatprep.subr.bf16.mxu0 %v384
        %809 = vmatpush1.bf16.msra.mxu0 %v383
        %810 = vmatprep.subr.bf16.mxu0 %v380
        %811 = vmatpush1.bf16.msra.mxu0 %v379
        %812 = vmatprep.subr.bf16.mxu0 0
        %813 = vmatpush2.bf16.msra.mxu0 0
        %814 = vmatprep.subr.bf16.mxu0 0
        %815 = vmatpush2.bf16.msra.mxu0 0
        %816 = vmatprep.subr.bf16.mxu0 0
        %817 = vmatpush2.bf16.msra.mxu0 0
        %818 = vmatprep.subr.bf16.mxu0 0
        %819 = vmatpush2.bf16.msra.mxu0 0
        %820 = vmatprep.subr.bf16.mxu0 0
        %821 = vmatpush2.bf16.msra.mxu0 0
        %822 = vmatprep.subr.bf16.mxu0 0
        %823 = vmatpush2.bf16.msra.mxu0 0
        %824 = vmatprep.subr.bf16.mxu0 0
        %825 = vmatpush2.bf16.msra.mxu0 0
        %826 = vmatprep.subr.bf16.mxu0 0
        %827 = vmatpush2.bf16.msra.mxu0 0
        %828 = vmatprep.mubr.bf16.mxu0 0
        %829 = vmatmul.mubr.bf16.gmra.mxu0 %v752
        %v830 = vpop.f32.mrf.mxu0
        %v831 = vadd.f32 0.0, %v830
        %v832 = vpop.f32.mrf.mxu0
        %v833 = vadd.f32 0.0, %v832
        %v834 = vpop.f32.mrf.mxu0
        %v835 = vadd.f32 0.0, %v834
        %v836 = vpop.f32.mrf.mxu0
        %v837 = vadd.f32 0.0, %v836
        %838 = vdwg.mxu0
        %v839 = vadd.f32 %v744, %v788
        %v840 = vadd.f32 %v745, %v790
        %v841 = vadd.f32 %v746, %v831
        %v842 = vadd.f32 %v747, %v833
        %v843 = vadd.f32 %v748, %v792
        %v844 = vadd.f32 %v749, %v794
        %v845 = vadd.f32 %v750, %v835
        %v846 = vadd.f32 %v751, %v837
        %v847 = vxor.u32 %v839, 2147483648
        %v848 = vxor.u32 %v843, 2147483648
        %v849 = vmul.f32 %v847, 1.442695
        %v850 = vpow.pop %v849
        %v851 = vmul.f32 %v848, 1.442695
        %v852 = vpow.pop %v851
        %v853 = vadd.f32 %v850, 1.0
        %v854 = vadd.f32 %v852, 1.0
        %v855 = vrcp.pop %v853
        %v856 = vmul.f32 1.0, %v855
        %v857 = vrcp.pop %v854
        %v858 = vmul.f32 1.0, %v857
        %v859 = vxor.u32 %v840, 2147483648
        %v860 = vxor.u32 %v844, 2147483648
        %v861 = vmul.f32 %v859, 1.442695
        %v862 = vpow.pop %v861
        %v863 = vmul.f32 %v860, 1.442695
        %v864 = vpow.pop %v863
        %v865 = vadd.f32 %v862, 1.0
        %v866 = vadd.f32 %v864, 1.0
        %v867 = vrcp.pop %v865
        %v868 = vmul.f32 1.0, %v867
        %v869 = vrcp.pop %v866
        %v870 = vmul.f32 1.0, %v869
        %v871 = vtanh.pop %v841
        %v872 = vtanh.pop %v845
        %v873 = vxor.u32 %v842, 2147483648
        %v874 = vxor.u32 %v846, 2147483648
        %v875 = vmul.f32 %v873, 1.442695
        %v876 = vpow.pop %v875
        %v877 = vmul.f32 %v874, 1.442695
        %v878 = vpow.pop %v877
        %v879 = vadd.f32 %v876, 1.0
        %v880 = vadd.f32 %v878, 1.0
        %v881 = vrcp.pop %v879
        %v882 = vmul.f32 1.0, %v881
        %v883 = vrcp.pop %v880
        %v884 = vmul.f32 1.0, %v883
        %v885 = vmul.f32 %v868, %v733
        %v886 = vmul.f32 %v870, %v734
        %v887 = vmul.f32 %v856, %v871
        %v888 = vmul.f32 %v858, %v872
        %v889 = vadd.f32 %v885, %v887
        %v890 = vadd.f32 %v886, %v888
        %v891 = vtanh.pop %v889
        %v892 = vtanh.pop %v890
        %v893 = vmul.f32 %v882, %v891
        %v894 = vmul.f32 %v884, %v892
        %s895 = scalar_lea.vmem %s195, 96 [#allocation4]
        %v896 = vld [vmem:[%s895] sm:$0xff]
        %v897 = vld [vmem:[%s895 + $0x8] sm:$0xff]
        %v898 = vld [vmem:[%s895 + $0x10] sm:$0xff]
        %v899 = vld [vmem:[%s895 + $0x18] sm:$0xff]
        %v900 = vunpack.c.l.bf16 %v896
        %v901 = vunpack.c.h.bf16 %v896
        %v902 = vunpack.c.l.bf16 %v897
        %v903 = vunpack.c.h.bf16 %v897
        %v904 = vunpack.c.l.bf16 %v898
        %v905 = vunpack.c.h.bf16 %v898
        %v906 = vunpack.c.l.bf16 %v899
        %v907 = vunpack.c.h.bf16 %v899
        %v908 = vpack.c.bf16 %v894, %v893
        %909 = vmatprep.subr.bf16.mxu0 %v406
        %910 = vmatpush1.bf16.msra.mxu0 %v405
        %911 = vmatprep.subr.bf16.mxu0 %v402
        %912 = vmatpush1.bf16.msra.mxu0 %v401
        %913 = vmatprep.subr.bf16.mxu0 %v398
        %914 = vmatpush1.bf16.msra.mxu0 %v397
        %915 = vmatprep.subr.bf16.mxu0 %v394
        %916 = vmatpush1.bf16.msra.mxu0 %v393
        %917 = vmatprep.subr.bf16.mxu0 %v390
        %918 = vmatpush1.bf16.msra.mxu0 %v389
        %919 = vmatprep.subr.bf16.mxu0 %v386
        %920 = vmatpush1.bf16.msra.mxu0 %v385
        %921 = vmatprep.subr.bf16.mxu0 %v382
        %922 = vmatpush1.bf16.msra.mxu0 %v381
        %923 = vmatprep.subr.bf16.mxu0 %v378
        %924 = vmatpush1.bf16.msra.mxu0 %v377
        %925 = vmatprep.subr.bf16.mxu0 0
        %926 = vmatpush2.bf16.msra.mxu0 0
        %927 = vmatprep.subr.bf16.mxu0 0
        %928 = vmatpush2.bf16.msra.mxu0 0
        %929 = vmatprep.subr.bf16.mxu0 0
        %930 = vmatpush2.bf16.msra.mxu0 0
        %931 = vmatprep.subr.bf16.mxu0 0
        %932 = vmatpush2.bf16.msra.mxu0 0
        %933 = vmatprep.subr.bf16.mxu0 0
        %934 = vmatpush2.bf16.msra.mxu0 0
        %935 = vmatprep.subr.bf16.mxu0 0
        %936 = vmatpush2.bf16.msra.mxu0 0
        %937 = vmatprep.subr.bf16.mxu0 0
        %938 = vmatpush2.bf16.msra.mxu0 0
        %939 = vmatprep.subr.bf16.mxu0 0
        %940 = vmatpush2.bf16.msra.mxu0 0
        %941 = vmatprep.mubr.bf16.mxu0 0
        %942 = vmatmul.mubr.bf16.gmra.mxu0 %v908
        %v943 = vpop.f32.mrf.mxu0
        %v944 = vadd.f32 0.0, %v943
        %v945 = vpop.f32.mrf.mxu0
        %v946 = vadd.f32 0.0, %v945
        %v947 = vpop.f32.mrf.mxu0
        %v948 = vadd.f32 0.0, %v947
        %v949 = vpop.f32.mrf.mxu0
        %v950 = vadd.f32 0.0, %v949
        %951 = vdwg.mxu0
        %952 = vmatprep.subr.bf16.mxu0 %v408
        %953 = vmatpush1.bf16.msra.mxu0 %v407
        %954 = vmatprep.subr.bf16.mxu0 %v404
        %955 = vmatpush1.bf16.msra.mxu0 %v403
        %956 = vmatprep.subr.bf16.mxu0 %v400
        %957 = vmatpush1.bf16.msra.mxu0 %v399
        %958 = vmatprep.subr.bf16.mxu0 %v396
        %959 = vmatpush1.bf16.msra.mxu0 %v395
        %960 = vmatprep.subr.bf16.mxu0 %v392
        %961 = vmatpush1.bf16.msra.mxu0 %v391
        %962 = vmatprep.subr.bf16.mxu0 %v388
        %963 = vmatpush1.bf16.msra.mxu0 %v387
        %964 = vmatprep.subr.bf16.mxu0 %v384
        %965 = vmatpush1.bf16.msra.mxu0 %v383
        %966 = vmatprep.subr.bf16.mxu0 %v380
        %967 = vmatpush1.bf16.msra.mxu0 %v379
        %968 = vmatprep.subr.bf16.mxu0 0
        %969 = vmatpush2.bf16.msra.mxu0 0
        %970 = vmatprep.subr.bf16.mxu0 0
        %971 = vmatpush2.bf16.msra.mxu0 0
        %972 = vmatprep.subr.bf16.mxu0 0
        %973 = vmatpush2.bf16.msra.mxu0 0
        %974 = vmatprep.subr.bf16.mxu0 0
        %975 = vmatpush2.bf16.msra.mxu0 0
        %976 = vmatprep.subr.bf16.mxu0 0
        %977 = vmatpush2.bf16.msra.mxu0 0
        %978 = vmatprep.subr.bf16.mxu0 0
        %979 = vmatpush2.bf16.msra.mxu0 0
        %980 = vmatprep.subr.bf16.mxu0 0
        %981 = vmatpush2.bf16.msra.mxu0 0
        %982 = vmatprep.subr.bf16.mxu0 0
        %983 = vmatpush2.bf16.msra.mxu0 0
        %984 = vmatprep.mubr.bf16.mxu0 0
        %985 = vmatmul.mubr.bf16.gmra.mxu0 %v908
        %v986 = vpop.f32.mrf.mxu0
        %v987 = vadd.f32 0.0, %v986
        %v988 = vpop.f32.mrf.mxu0
        %v989 = vadd.f32 0.0, %v988
        %v990 = vpop.f32.mrf.mxu0
        %v991 = vadd.f32 0.0, %v990
        %v992 = vpop.f32.mrf.mxu0
        %v993 = vadd.f32 0.0, %v992
        %994 = vdwg.mxu0
        %v995 = vadd.f32 %v900, %v944
        %v996 = vadd.f32 %v901, %v946
        %v997 = vadd.f32 %v902, %v987
        %v998 = vadd.f32 %v903, %v989
        %v999 = vadd.f32 %v904, %v948
        %v1000 = vadd.f32 %v905, %v950
        %v1001 = vadd.f32 %v906, %v991
        %v1002 = vadd.f32 %v907, %v993
        %v1003 = vxor.u32 %v995, 2147483648
        %v1004 = vxor.u32 %v999, 2147483648
        %v1005 = vmul.f32 %v1003, 1.442695
        %v1006 = vpow.pop %v1005
        %v1007 = vmul.f32 %v1004, 1.442695
        %v1008 = vpow.pop %v1007
        %v1009 = vadd.f32 %v1006, 1.0
        %v1010 = vadd.f32 %v1008, 1.0
        %v1011 = vrcp.pop %v1009
        %v1012 = vmul.f32 1.0, %v1011
        %v1013 = vrcp.pop %v1010
        %v1014 = vmul.f32 1.0, %v1013
        %v1015 = vxor.u32 %v996, 2147483648
        %v1016 = vxor.u32 %v1000, 2147483648
        %v1017 = vmul.f32 %v1015, 1.442695
        %v1018 = vpow.pop %v1017
        %v1019 = vmul.f32 %v1016, 1.442695
        %v1020 = vpow.pop %v1019
        %v1021 = vadd.f32 %v1018, 1.0
        %v1022 = vadd.f32 %v1020, 1.0
        %v1023 = vrcp.pop %v1021
        %v1024 = vmul.f32 1.0, %v1023
        %v1025 = vrcp.pop %v1022
        %v1026 = vmul.f32 1.0, %v1025
        %v1027 = vtanh.pop %v997
        %v1028 = vtanh.pop %v1001
        %v1029 = vxor.u32 %v998, 2147483648
        %v1030 = vxor.u32 %v1002, 2147483648
        %v1031 = vmul.f32 %v1029, 1.442695
        %v1032 = vpow.pop %v1031
        %v1033 = vmul.f32 %v1030, 1.442695
        %v1034 = vpow.pop %v1033
        %v1035 = vadd.f32 %v1032, 1.0
        %v1036 = vadd.f32 %v1034, 1.0
        %v1037 = vrcp.pop %v1035
        %v1038 = vmul.f32 1.0, %v1037
        %v1039 = vrcp.pop %v1036
        %v1040 = vmul.f32 1.0, %v1039
        %v1041 = vmul.f32 %v1024, %v889
        %v1042 = vmul.f32 %v1026, %v890
        %v1043 = vmul.f32 %v1012, %v1027
        %v1044 = vmul.f32 %v1014, %v1028
        %v1045 = vadd.f32 %v1041, %v1043
        %v1046 = vadd.f32 %v1042, %v1044
        %v1047 = vtanh.pop %v1045
        %v1048 = vtanh.pop %v1046
        %v1049 = vmul.f32 %v1038, %v1047
        %v1050 = vmul.f32 %v1040, %v1048
        %s1051 = scalar_lea.vmem %s195, 128 [#allocation4]
        %v1052 = vld [vmem:[%s1051] sm:$0xff]
        %v1053 = vld [vmem:[%s1051 + $0x8] sm:$0xff]
        %v1054 = vld [vmem:[%s1051 + $0x10] sm:$0xff]
        %v1055 = vld [vmem:[%s1051 + $0x18] sm:$0xff]
        %v1056 = vunpack.c.l.bf16 %v1052
        %v1057 = vunpack.c.h.bf16 %v1052
        %v1058 = vunpack.c.l.bf16 %v1053
        %v1059 = vunpack.c.h.bf16 %v1053
        %v1060 = vunpack.c.l.bf16 %v1054
        %v1061 = vunpack.c.h.bf16 %v1054
        %v1062 = vunpack.c.l.bf16 %v1055
        %v1063 = vunpack.c.h.bf16 %v1055
        %v1064 = vpack.c.bf16 %v1050, %v1049
        %1065 = vmatprep.subr.bf16.mxu0 %v406
        %1066 = vmatpush1.bf16.msra.mxu0 %v405
        %1067 = vmatprep.subr.bf16.mxu0 %v402
        %1068 = vmatpush1.bf16.msra.mxu0 %v401
        %1069 = vmatprep.subr.bf16.mxu0 %v398
        %1070 = vmatpush1.bf16.msra.mxu0 %v397
        %1071 = vmatprep.subr.bf16.mxu0 %v394
        %1072 = vmatpush1.bf16.msra.mxu0 %v393
        %1073 = vmatprep.subr.bf16.mxu0 %v390
        %1074 = vmatpush1.bf16.msra.mxu0 %v389
        %1075 = vmatprep.subr.bf16.mxu0 %v386
        %1076 = vmatpush1.bf16.msra.mxu0 %v385
        %1077 = vmatprep.subr.bf16.mxu0 %v382
        %1078 = vmatpush1.bf16.msra.mxu0 %v381
        %1079 = vmatprep.subr.bf16.mxu0 %v378
        %1080 = vmatpush1.bf16.msra.mxu0 %v377
        %1081 = vmatprep.subr.bf16.mxu0 0
        %1082 = vmatpush2.bf16.msra.mxu0 0
        %1083 = vmatprep.subr.bf16.mxu0 0
        %1084 = vmatpush2.bf16.msra.mxu0 0
        %1085 = vmatprep.subr.bf16.mxu0 0
        %1086 = vmatpush2.bf16.msra.mxu0 0
        %1087 = vmatprep.subr.bf16.mxu0 0
        %1088 = vmatpush2.bf16.msra.mxu0 0
        %1089 = vmatprep.subr.bf16.mxu0 0
        %1090 = vmatpush2.bf16.msra.mxu0 0
        %1091 = vmatprep.subr.bf16.mxu0 0
        %1092 = vmatpush2.bf16.msra.mxu0 0
        %1093 = vmatprep.subr.bf16.mxu0 0
        %1094 = vmatpush2.bf16.msra.mxu0 0
        %1095 = vmatprep.subr.bf16.mxu0 0
        %1096 = vmatpush2.bf16.msra.mxu0 0
        %1097 = vmatprep.mubr.bf16.mxu0 0
        %1098 = vmatmul.mubr.bf16.gmra.mxu0 %v1064
        %v1099 = vpop.f32.mrf.mxu0
        %v1100 = vadd.f32 0.0, %v1099
        %v1101 = vpop.f32.mrf.mxu0
        %v1102 = vadd.f32 0.0, %v1101
        %v1103 = vpop.f32.mrf.mxu0
        %v1104 = vadd.f32 0.0, %v1103
        %v1105 = vpop.f32.mrf.mxu0
        %v1106 = vadd.f32 0.0, %v1105
        %1107 = vdwg.mxu0
        %1108 = vmatprep.subr.bf16.mxu0 %v408
        %1109 = vmatpush1.bf16.msra.mxu0 %v407
        %1110 = vmatprep.subr.bf16.mxu0 %v404
        %1111 = vmatpush1.bf16.msra.mxu0 %v403
        %1112 = vmatprep.subr.bf16.mxu0 %v400
        %1113 = vmatpush1.bf16.msra.mxu0 %v399
        %1114 = vmatprep.subr.bf16.mxu0 %v396
        %1115 = vmatpush1.bf16.msra.mxu0 %v395
        %1116 = vmatprep.subr.bf16.mxu0 %v392
        %1117 = vmatpush1.bf16.msra.mxu0 %v391
        %1118 = vmatprep.subr.bf16.mxu0 %v388
        %1119 = vmatpush1.bf16.msra.mxu0 %v387
        %1120 = vmatprep.subr.bf16.mxu0 %v384
        %1121 = vmatpush1.bf16.msra.mxu0 %v383
        %1122 = vmatprep.subr.bf16.mxu0 %v380
        %1123 = vmatpush1.bf16.msra.mxu0 %v379
        %1124 = vmatprep.subr.bf16.mxu0 0
        %1125 = vmatpush2.bf16.msra.mxu0 0
        %1126 = vmatprep.subr.bf16.mxu0 0
        %1127 = vmatpush2.bf16.msra.mxu0 0
        %1128 = vmatprep.subr.bf16.mxu0 0
        %1129 = vmatpush2.bf16.msra.mxu0 0
        %1130 = vmatprep.subr.bf16.mxu0 0
        %1131 = vmatpush2.bf16.msra.mxu0 0
        %1132 = vmatprep.subr.bf16.mxu0 0
        %1133 = vmatpush2.bf16.msra.mxu0 0
        %1134 = vmatprep.subr.bf16.mxu0 0
        %1135 = vmatpush2.bf16.msra.mxu0 0
        %1136 = vmatprep.subr.bf16.mxu0 0
        %1137 = vmatpush2.bf16.msra.mxu0 0
        %1138 = vmatprep.subr.bf16.mxu0 0
        %1139 = vmatpush2.bf16.msra.mxu0 0
        %1140 = vmatprep.mubr.bf16.mxu0 0
        %1141 = vmatmul.mubr.bf16.gmra.mxu0 %v1064
        %v1142 = vpop.f32.mrf.mxu0
        %v1143 = vadd.f32 0.0, %v1142
        %v1144 = vpop.f32.mrf.mxu0
        %v1145 = vadd.f32 0.0, %v1144
        %v1146 = vpop.f32.mrf.mxu0
        %v1147 = vadd.f32 0.0, %v1146
        %v1148 = vpop.f32.mrf.mxu0
        %v1149 = vadd.f32 0.0, %v1148
        %1150 = vdwg.mxu0
        %v1151 = vadd.f32 %v1056, %v1100
        %v1152 = vadd.f32 %v1057, %v1102
        %v1153 = vadd.f32 %v1058, %v1143
        %v1154 = vadd.f32 %v1059, %v1145
        %v1155 = vadd.f32 %v1060, %v1104
        %v1156 = vadd.f32 %v1061, %v1106
        %v1157 = vadd.f32 %v1062, %v1147
        %v1158 = vadd.f32 %v1063, %v1149
        %v1159 = vxor.u32 %v1151, 2147483648
        %v1160 = vxor.u32 %v1155, 2147483648
        %v1161 = vmul.f32 %v1159, 1.442695
        %v1162 = vpow.pop %v1161
        %v1163 = vmul.f32 %v1160, 1.442695
        %v1164 = vpow.pop %v1163
        %v1165 = vadd.f32 %v1162, 1.0
        %v1166 = vadd.f32 %v1164, 1.0
        %v1167 = vrcp.pop %v1165
        %v1168 = vmul.f32 1.0, %v1167
        %v1169 = vrcp.pop %v1166
        %v1170 = vmul.f32 1.0, %v1169
        %v1171 = vxor.u32 %v1152, 2147483648
        %v1172 = vxor.u32 %v1156, 2147483648
        %v1173 = vmul.f32 %v1171, 1.442695
        %v1174 = vpow.pop %v1173
        %v1175 = vmul.f32 %v1172, 1.442695
        %v1176 = vpow.pop %v1175
        %v1177 = vadd.f32 %v1174, 1.0
        %v1178 = vadd.f32 %v1176, 1.0
        %v1179 = vrcp.pop %v1177
        %v1180 = vmul.f32 1.0, %v1179
        %v1181 = vrcp.pop %v1178
        %v1182 = vmul.f32 1.0, %v1181
        %v1183 = vtanh.pop %v1153
        %v1184 = vtanh.pop %v1157
        %v1185 = vxor.u32 %v1154, 2147483648
        %v1186 = vxor.u32 %v1158, 2147483648
        %v1187 = vmul.f32 %v1185, 1.442695
        %v1188 = vpow.pop %v1187
        %v1189 = vmul.f32 %v1186, 1.442695
        %v1190 = vpow.pop %v1189
        %v1191 = vadd.f32 %v1188, 1.0
        %v1192 = vadd.f32 %v1190, 1.0
        %v1193 = vrcp.pop %v1191
        %v1194 = vmul.f32 1.0, %v1193
        %v1195 = vrcp.pop %v1192
        %v1196 = vmul.f32 1.0, %v1195
        %v1197 = vmul.f32 %v1180, %v1045
        %v1198 = vmul.f32 %v1182, %v1046
        %v1199 = vmul.f32 %v1168, %v1183
        %v1200 = vmul.f32 %v1170, %v1184
        %v1201 = vadd.f32 %v1197, %v1199
        %v1202 = vadd.f32 %v1198, %v1200
        %v1203 = vtanh.pop %v1201
        %v1204 = vtanh.pop %v1202
        %v1205 = vmul.f32 %v1194, %v1203
        %v1206 = vmul.f32 %v1196, %v1204
        %s1207 = scalar_lea.vmem %s195, 160 [#allocation4]
        %v1208 = vld [vmem:[%s1207] sm:$0xff]
        %v1209 = vld [vmem:[%s1207 + $0x8] sm:$0xff]
        %v1210 = vld [vmem:[%s1207 + $0x10] sm:$0xff]
        %v1211 = vld [vmem:[%s1207 + $0x18] sm:$0xff]
        %v1212 = vunpack.c.l.bf16 %v1208
        %v1213 = vunpack.c.h.bf16 %v1208
        %v1214 = vunpack.c.l.bf16 %v1209
        %v1215 = vunpack.c.h.bf16 %v1209
        %v1216 = vunpack.c.l.bf16 %v1210
        %v1217 = vunpack.c.h.bf16 %v1210
        %v1218 = vunpack.c.l.bf16 %v1211
        %v1219 = vunpack.c.h.bf16 %v1211
        %v1220 = vpack.c.bf16 %v1206, %v1205
        %1221 = vmatprep.subr.bf16.mxu0 %v406
        %1222 = vmatpush1.bf16.msra.mxu0 %v405
        %1223 = vmatprep.subr.bf16.mxu0 %v402
        %1224 = vmatpush1.bf16.msra.mxu0 %v401
        %1225 = vmatprep.subr.bf16.mxu0 %v398
        %1226 = vmatpush1.bf16.msra.mxu0 %v397
        %1227 = vmatprep.subr.bf16.mxu0 %v394
        %1228 = vmatpush1.bf16.msra.mxu0 %v393
        %1229 = vmatprep.subr.bf16.mxu0 %v390
        %1230 = vmatpush1.bf16.msra.mxu0 %v389
        %1231 = vmatprep.subr.bf16.mxu0 %v386
        %1232 = vmatpush1.bf16.msra.mxu0 %v385
        %1233 = vmatprep.subr.bf16.mxu0 %v382
        %1234 = vmatpush1.bf16.msra.mxu0 %v381
        %1235 = vmatprep.subr.bf16.mxu0 %v378
        %1236 = vmatpush1.bf16.msra.mxu0 %v377
        %1237 = vmatprep.subr.bf16.mxu0 0
        %1238 = vmatpush2.bf16.msra.mxu0 0
        %1239 = vmatprep.subr.bf16.mxu0 0
        %1240 = vmatpush2.bf16.msra.mxu0 0
        %1241 = vmatprep.subr.bf16.mxu0 0
        %1242 = vmatpush2.bf16.msra.mxu0 0
        %1243 = vmatprep.subr.bf16.mxu0 0
        %1244 = vmatpush2.bf16.msra.mxu0 0
        %1245 = vmatprep.subr.bf16.mxu0 0
        %1246 = vmatpush2.bf16.msra.mxu0 0
        %1247 = vmatprep.subr.bf16.mxu0 0
        %1248 = vmatpush2.bf16.msra.mxu0 0
        %1249 = vmatprep.subr.bf16.mxu0 0
        %1250 = vmatpush2.bf16.msra.mxu0 0
        %1251 = vmatprep.subr.bf16.mxu0 0
        %1252 = vmatpush2.bf16.msra.mxu0 0
        %1253 = vmatprep.mubr.bf16.mxu0 0
        %1254 = vmatmul.mubr.bf16.gmra.mxu0 %v1220
        %v1255 = vpop.f32.mrf.mxu0
        %v1256 = vadd.f32 0.0, %v1255
        %v1257 = vpop.f32.mrf.mxu0
        %v1258 = vadd.f32 0.0, %v1257
        %v1259 = vpop.f32.mrf.mxu0
        %v1260 = vadd.f32 0.0, %v1259
        %v1261 = vpop.f32.mrf.mxu0
        %v1262 = vadd.f32 0.0, %v1261
        %1263 = vdwg.mxu0
        %1264 = vmatprep.subr.bf16.mxu0 %v408
        %1265 = vmatpush1.bf16.msra.mxu0 %v407
        %1266 = vmatprep.subr.bf16.mxu0 %v404
        %1267 = vmatpush1.bf16.msra.mxu0 %v403
        %1268 = vmatprep.subr.bf16.mxu0 %v400
        %1269 = vmatpush1.bf16.msra.mxu0 %v399
        %1270 = vmatprep.subr.bf16.mxu0 %v396
        %1271 = vmatpush1.bf16.msra.mxu0 %v395
        %1272 = vmatprep.subr.bf16.mxu0 %v392
        %1273 = vmatpush1.bf16.msra.mxu0 %v391
        %1274 = vmatprep.subr.bf16.mxu0 %v388
        %1275 = vmatpush1.bf16.msra.mxu0 %v387
        %1276 = vmatprep.subr.bf16.mxu0 %v384
        %1277 = vmatpush1.bf16.msra.mxu0 %v383
        %1278 = vmatprep.subr.bf16.mxu0 %v380
        %1279 = vmatpush1.bf16.msra.mxu0 %v379
        %1280 = vmatprep.subr.bf16.mxu0 0
        %1281 = vmatpush2.bf16.msra.mxu0 0
        %1282 = vmatprep.subr.bf16.mxu0 0
        %1283 = vmatpush2.bf16.msra.mxu0 0
        %1284 = vmatprep.subr.bf16.mxu0 0
        %1285 = vmatpush2.bf16.msra.mxu0 0
        %1286 = vmatprep.subr.bf16.mxu0 0
        %1287 = vmatpush2.bf16.msra.mxu0 0
        %1288 = vmatprep.subr.bf16.mxu0 0
        %1289 = vmatpush2.bf16.msra.mxu0 0
        %1290 = vmatprep.subr.bf16.mxu0 0
        %1291 = vmatpush2.bf16.msra.mxu0 0
        %1292 = vmatprep.subr.bf16.mxu0 0
        %1293 = vmatpush2.bf16.msra.mxu0 0
        %1294 = vmatprep.subr.bf16.mxu0 0
        %1295 = vmatpush2.bf16.msra.mxu0 0
        %1296 = vmatprep.mubr.bf16.mxu0 0
        %1297 = vmatmul.mubr.bf16.gmra.mxu0 %v1220
        %v1298 = vpop.f32.mrf.mxu0
        %v1299 = vadd.f32 0.0, %v1298
        %v1300 = vpop.f32.mrf.mxu0
        %v1301 = vadd.f32 0.0, %v1300
        %v1302 = vpop.f32.mrf.mxu0
        %v1303 = vadd.f32 0.0, %v1302
        %v1304 = vpop.f32.mrf.mxu0
        %v1305 = vadd.f32 0.0, %v1304
        %1306 = vdwg.mxu0
        %v1307 = vadd.f32 %v1212, %v1256
        %v1308 = vadd.f32 %v1213, %v1258
        %v1309 = vadd.f32 %v1214, %v1299
        %v1310 = vadd.f32 %v1215, %v1301
        %v1311 = vadd.f32 %v1216, %v1260
        %v1312 = vadd.f32 %v1217, %v1262
        %v1313 = vadd.f32 %v1218, %v1303
        %v1314 = vadd.f32 %v1219, %v1305
        %v1315 = vxor.u32 %v1307, 2147483648
        %v1316 = vxor.u32 %v1311, 2147483648
        %v1317 = vmul.f32 %v1315, 1.442695
        %v1318 = vpow.pop %v1317
        %v1319 = vmul.f32 %v1316, 1.442695
        %v1320 = vpow.pop %v1319
        %v1321 = vadd.f32 %v1318, 1.0
        %v1322 = vadd.f32 %v1320, 1.0
        %v1323 = vrcp.pop %v1321
        %v1324 = vmul.f32 1.0, %v1323
        %v1325 = vrcp.pop %v1322
        %v1326 = vmul.f32 1.0, %v1325
        %v1327 = vxor.u32 %v1308, 2147483648
        %v1328 = vxor.u32 %v1312, 2147483648
        %v1329 = vmul.f32 %v1327, 1.442695
        %v1330 = vpow.pop %v1329
        %v1331 = vmul.f32 %v1328, 1.442695
        %v1332 = vpow.pop %v1331
        %v1333 = vadd.f32 %v1330, 1.0
        %v1334 = vadd.f32 %v1332, 1.0
        %v1335 = vrcp.pop %v1333
        %v1336 = vmul.f32 1.0, %v1335
        %v1337 = vrcp.pop %v1334
        %v1338 = vmul.f32 1.0, %v1337
        %v1339 = vtanh.pop %v1309
        %v1340 = vtanh.pop %v1313
        %v1341 = vxor.u32 %v1310, 2147483648
        %v1342 = vxor.u32 %v1314, 2147483648
        %v1343 = vmul.f32 %v1341, 1.442695
        %v1344 = vpow.pop %v1343
        %v1345 = vmul.f32 %v1342, 1.442695
        %v1346 = vpow.pop %v1345
        %v1347 = vadd.f32 %v1344, 1.0
        %v1348 = vadd.f32 %v1346, 1.0
        %v1349 = vrcp.pop %v1347
        %v1350 = vmul.f32 1.0, %v1349
        %v1351 = vrcp.pop %v1348
        %v1352 = vmul.f32 1.0, %v1351
        %v1353 = vmul.f32 %v1336, %v1201
        %v1354 = vmul.f32 %v1338, %v1202
        %v1355 = vmul.f32 %v1324, %v1339
        %v1356 = vmul.f32 %v1326, %v1340
        %v1357 = vadd.f32 %v1353, %v1355
        %v1358 = vadd.f32 %v1354, %v1356
        %v1359 = vtanh.pop %v1357
        %v1360 = vtanh.pop %v1358
        %v1361 = vmul.f32 %v1350, %v1359
        %v1362 = vmul.f32 %v1352, %v1360
        %s1363 = scalar_lea.vmem %s195, 192 [#allocation4]
        %v1364 = vld [vmem:[%s1363] sm:$0xff]
        %v1365 = vld [vmem:[%s1363 + $0x8] sm:$0xff]
        %v1366 = vld [vmem:[%s1363 + $0x10] sm:$0xff]
        %v1367 = vld [vmem:[%s1363 + $0x18] sm:$0xff]
        %v1368 = vunpack.c.l.bf16 %v1364
        %v1369 = vunpack.c.h.bf16 %v1364
        %v1370 = vunpack.c.l.bf16 %v1365
        %v1371 = vunpack.c.h.bf16 %v1365
        %v1372 = vunpack.c.l.bf16 %v1366
        %v1373 = vunpack.c.h.bf16 %v1366
        %v1374 = vunpack.c.l.bf16 %v1367
        %v1375 = vunpack.c.h.bf16 %v1367
        %v1376 = vpack.c.bf16 %v1362, %v1361
        %1377 = vmatprep.subr.bf16.mxu0 %v406
        %1378 = vmatpush1.bf16.msra.mxu0 %v405
        %1379 = vmatprep.subr.bf16.mxu0 %v402
        %1380 = vmatpush1.bf16.msra.mxu0 %v401
        %1381 = vmatprep.subr.bf16.mxu0 %v398
        %1382 = vmatpush1.bf16.msra.mxu0 %v397
        %1383 = vmatprep.subr.bf16.mxu0 %v394
        %1384 = vmatpush1.bf16.msra.mxu0 %v393
        %1385 = vmatprep.subr.bf16.mxu0 %v390
        %1386 = vmatpush1.bf16.msra.mxu0 %v389
        %1387 = vmatprep.subr.bf16.mxu0 %v386
        %1388 = vmatpush1.bf16.msra.mxu0 %v385
        %1389 = vmatprep.subr.bf16.mxu0 %v382
        %1390 = vmatpush1.bf16.msra.mxu0 %v381
        %1391 = vmatprep.subr.bf16.mxu0 %v378
        %1392 = vmatpush1.bf16.msra.mxu0 %v377
        %1393 = vmatprep.subr.bf16.mxu0 0
        %1394 = vmatpush2.bf16.msra.mxu0 0
        %1395 = vmatprep.subr.bf16.mxu0 0
        %1396 = vmatpush2.bf16.msra.mxu0 0
        %1397 = vmatprep.subr.bf16.mxu0 0
        %1398 = vmatpush2.bf16.msra.mxu0 0
        %1399 = vmatprep.subr.bf16.mxu0 0
        %1400 = vmatpush2.bf16.msra.mxu0 0
        %1401 = vmatprep.subr.bf16.mxu0 0
        %1402 = vmatpush2.bf16.msra.mxu0 0
        %1403 = vmatprep.subr.bf16.mxu0 0
        %1404 = vmatpush2.bf16.msra.mxu0 0
        %1405 = vmatprep.subr.bf16.mxu0 0
        %1406 = vmatpush2.bf16.msra.mxu0 0
        %1407 = vmatprep.subr.bf16.mxu0 0
        %1408 = vmatpush2.bf16.msra.mxu0 0
        %1409 = vmatprep.mubr.bf16.mxu0 0
        %1410 = vmatmul.mubr.bf16.gmra.mxu0 %v1376
        %v1411 = vpop.f32.mrf.mxu0
        %v1412 = vadd.f32 0.0, %v1411
        %v1413 = vpop.f32.mrf.mxu0
        %v1414 = vadd.f32 0.0, %v1413
        %v1415 = vpop.f32.mrf.mxu0
        %v1416 = vadd.f32 0.0, %v1415
        %v1417 = vpop.f32.mrf.mxu0
        %v1418 = vadd.f32 0.0, %v1417
        %1419 = vdwg.mxu0
        %1420 = vmatprep.subr.bf16.mxu0 %v408
        %1421 = vmatpush1.bf16.msra.mxu0 %v407
        %1422 = vmatprep.subr.bf16.mxu0 %v404
        %1423 = vmatpush1.bf16.msra.mxu0 %v403
        %1424 = vmatprep.subr.bf16.mxu0 %v400
        %1425 = vmatpush1.bf16.msra.mxu0 %v399
        %1426 = vmatprep.subr.bf16.mxu0 %v396
        %1427 = vmatpush1.bf16.msra.mxu0 %v395
        %1428 = vmatprep.subr.bf16.mxu0 %v392
        %1429 = vmatpush1.bf16.msra.mxu0 %v391
        %1430 = vmatprep.subr.bf16.mxu0 %v388
        %1431 = vmatpush1.bf16.msra.mxu0 %v387
        %1432 = vmatprep.subr.bf16.mxu0 %v384
        %1433 = vmatpush1.bf16.msra.mxu0 %v383
        %1434 = vmatprep.subr.bf16.mxu0 %v380
        %1435 = vmatpush1.bf16.msra.mxu0 %v379
        %1436 = vmatprep.subr.bf16.mxu0 0
        %1437 = vmatpush2.bf16.msra.mxu0 0
        %1438 = vmatprep.subr.bf16.mxu0 0
        %1439 = vmatpush2.bf16.msra.mxu0 0
        %1440 = vmatprep.subr.bf16.mxu0 0
        %1441 = vmatpush2.bf16.msra.mxu0 0
        %1442 = vmatprep.subr.bf16.mxu0 0
        %1443 = vmatpush2.bf16.msra.mxu0 0
        %1444 = vmatprep.subr.bf16.mxu0 0
        %1445 = vmatpush2.bf16.msra.mxu0 0
        %1446 = vmatprep.subr.bf16.mxu0 0
        %1447 = vmatpush2.bf16.msra.mxu0 0
        %1448 = vmatprep.subr.bf16.mxu0 0
        %1449 = vmatpush2.bf16.msra.mxu0 0
        %1450 = vmatprep.subr.bf16.mxu0 0
        %1451 = vmatpush2.bf16.msra.mxu0 0
        %1452 = vmatprep.mubr.bf16.mxu0 0
        %1453 = vmatmul.mubr.bf16.gmra.mxu0 %v1376
        %v1454 = vpop.f32.mrf.mxu0
        %v1455 = vadd.f32 0.0, %v1454
        %v1456 = vpop.f32.mrf.mxu0
        %v1457 = vadd.f32 0.0, %v1456
        %v1458 = vpop.f32.mrf.mxu0
        %v1459 = vadd.f32 0.0, %v1458
        %v1460 = vpop.f32.mrf.mxu0
        %v1461 = vadd.f32 0.0, %v1460
        %1462 = vdwg.mxu0
        %v1463 = vadd.f32 %v1368, %v1412
        %v1464 = vadd.f32 %v1369, %v1414
        %v1465 = vadd.f32 %v1370, %v1455
        %v1466 = vadd.f32 %v1371, %v1457
        %v1467 = vadd.f32 %v1372, %v1416
        %v1468 = vadd.f32 %v1373, %v1418
        %v1469 = vadd.f32 %v1374, %v1459
        %v1470 = vadd.f32 %v1375, %v1461
        %v1471 = vxor.u32 %v1463, 2147483648
        %v1472 = vxor.u32 %v1467, 2147483648
        %v1473 = vmul.f32 %v1471, 1.442695
        %v1474 = vpow.pop %v1473
        %v1475 = vmul.f32 %v1472, 1.442695
        %v1476 = vpow.pop %v1475
        %v1477 = vadd.f32 %v1474, 1.0
        %v1478 = vadd.f32 %v1476, 1.0
        %v1479 = vrcp.pop %v1477
        %v1480 = vmul.f32 1.0, %v1479
        %v1481 = vrcp.pop %v1478
        %v1482 = vmul.f32 1.0, %v1481
        %v1483 = vxor.u32 %v1464, 2147483648
        %v1484 = vxor.u32 %v1468, 2147483648
        %v1485 = vmul.f32 %v1483, 1.442695
        %v1486 = vpow.pop %v1485
        %v1487 = vmul.f32 %v1484, 1.442695
        %v1488 = vpow.pop %v1487
        %v1489 = vadd.f32 %v1486, 1.0
        %v1490 = vadd.f32 %v1488, 1.0
        %v1491 = vrcp.pop %v1489
        %v1492 = vmul.f32 1.0, %v1491
        %v1493 = vrcp.pop %v1490
        %v1494 = vmul.f32 1.0, %v1493
        %v1495 = vtanh.pop %v1465
        %v1496 = vtanh.pop %v1469
        %v1497 = vxor.u32 %v1466, 2147483648
        %v1498 = vxor.u32 %v1470, 2147483648
        %v1499 = vmul.f32 %v1497, 1.442695
        %v1500 = vpow.pop %v1499
        %v1501 = vmul.f32 %v1498, 1.442695
        %v1502 = vpow.pop %v1501
        %v1503 = vadd.f32 %v1500, 1.0
        %v1504 = vadd.f32 %v1502, 1.0
        %v1505 = vrcp.pop %v1503
        %v1506 = vmul.f32 1.0, %v1505
        %v1507 = vrcp.pop %v1504
        %v1508 = vmul.f32 1.0, %v1507
        %v1509 = vmul.f32 %v1492, %v1357
        %v1510 = vmul.f32 %v1494, %v1358
        %v1511 = vmul.f32 %v1480, %v1495
        %v1512 = vmul.f32 %v1482, %v1496
        %v1513 = vadd.f32 %v1509, %v1511
        %v1514 = vadd.f32 %v1510, %v1512
        %v1515 = vtanh.pop %v1513
        %v1516 = vtanh.pop %v1514
        %v1517 = vmul.f32 %v1506, %v1515
        %v1518 = vmul.f32 %v1508, %v1516
        %s1519 = scalar_lea.vmem %s195, 224 [#allocation4]
        %v1520 = vld [vmem:[%s1519] sm:$0xff]
        %v1521 = vld [vmem:[%s1519 + $0x8] sm:$0xff]
        %v1522 = vld [vmem:[%s1519 + $0x10] sm:$0xff]
        %v1523 = vld [vmem:[%s1519 + $0x18] sm:$0xff]
        %v1524 = vunpack.c.l.bf16 %v1520
        %v1525 = vunpack.c.h.bf16 %v1520
        %v1526 = vunpack.c.l.bf16 %v1521
        %v1527 = vunpack.c.h.bf16 %v1521
        %v1528 = vunpack.c.l.bf16 %v1522
        %v1529 = vunpack.c.h.bf16 %v1522
        %v1530 = vunpack.c.l.bf16 %v1523
        %v1531 = vunpack.c.h.bf16 %v1523
        %v1532 = vpack.c.bf16 %v1518, %v1517
        %1533 = vmatprep.subr.bf16.mxu0 %v406
        %1534 = vmatpush1.bf16.msra.mxu0 %v405
        %1535 = vmatprep.subr.bf16.mxu0 %v402
        %1536 = vmatpush1.bf16.msra.mxu0 %v401
        %1537 = vmatprep.subr.bf16.mxu0 %v398
        %1538 = vmatpush1.bf16.msra.mxu0 %v397
        %1539 = vmatprep.subr.bf16.mxu0 %v394
        %1540 = vmatpush1.bf16.msra.mxu0 %v393
        %1541 = vmatprep.subr.bf16.mxu0 %v390
        %1542 = vmatpush1.bf16.msra.mxu0 %v389
        %1543 = vmatprep.subr.bf16.mxu0 %v386
        %1544 = vmatpush1.bf16.msra.mxu0 %v385
        %1545 = vmatprep.subr.bf16.mxu0 %v382
        %1546 = vmatpush1.bf16.msra.mxu0 %v381
        %1547 = vmatprep.subr.bf16.mxu0 %v378
        %1548 = vmatpush1.bf16.msra.mxu0 %v377
        %1549 = vmatprep.subr.bf16.mxu0 0
        %1550 = vmatpush2.bf16.msra.mxu0 0
        %1551 = vmatprep.subr.bf16.mxu0 0
        %1552 = vmatpush2.bf16.msra.mxu0 0
        %1553 = vmatprep.subr.bf16.mxu0 0
        %1554 = vmatpush2.bf16.msra.mxu0 0
        %1555 = vmatprep.subr.bf16.mxu0 0
        %1556 = vmatpush2.bf16.msra.mxu0 0
        %1557 = vmatprep.subr.bf16.mxu0 0
        %1558 = vmatpush2.bf16.msra.mxu0 0
        %1559 = vmatprep.subr.bf16.mxu0 0
        %1560 = vmatpush2.bf16.msra.mxu0 0
        %1561 = vmatprep.subr.bf16.mxu0 0
        %1562 = vmatpush2.bf16.msra.mxu0 0
        %1563 = vmatprep.subr.bf16.mxu0 0
        %1564 = vmatpush2.bf16.msra.mxu0 0
        %1565 = vmatprep.mubr.bf16.mxu0 0
        %1566 = vmatmul.mubr.bf16.gmra.mxu0 %v1532
        %v1567 = vpop.f32.mrf.mxu0
        %v1568 = vadd.f32 0.0, %v1567
        %v1569 = vpop.f32.mrf.mxu0
        %v1570 = vadd.f32 0.0, %v1569
        %v1571 = vpop.f32.mrf.mxu0
        %v1572 = vadd.f32 0.0, %v1571
        %v1573 = vpop.f32.mrf.mxu0
        %v1574 = vadd.f32 0.0, %v1573
        %1575 = vdwg.mxu0
        %1576 = vmatprep.subr.bf16.mxu0 %v408
        %1577 = vmatpush1.bf16.msra.mxu0 %v407
        %1578 = vmatprep.subr.bf16.mxu0 %v404
        %1579 = vmatpush1.bf16.msra.mxu0 %v403
        %1580 = vmatprep.subr.bf16.mxu0 %v400
        %1581 = vmatpush1.bf16.msra.mxu0 %v399
        %1582 = vmatprep.subr.bf16.mxu0 %v396
        %1583 = vmatpush1.bf16.msra.mxu0 %v395
        %1584 = vmatprep.subr.bf16.mxu0 %v392
        %1585 = vmatpush1.bf16.msra.mxu0 %v391
        %1586 = vmatprep.subr.bf16.mxu0 %v388
        %1587 = vmatpush1.bf16.msra.mxu0 %v387
        %1588 = vmatprep.subr.bf16.mxu0 %v384
        %1589 = vmatpush1.bf16.msra.mxu0 %v383
        %1590 = vmatprep.subr.bf16.mxu0 %v380
        %1591 = vmatpush1.bf16.msra.mxu0 %v379
        %1592 = vmatprep.subr.bf16.mxu0 0
        %1593 = vmatpush2.bf16.msra.mxu0 0
        %1594 = vmatprep.subr.bf16.mxu0 0
        %1595 = vmatpush2.bf16.msra.mxu0 0
        %1596 = vmatprep.subr.bf16.mxu0 0
        %1597 = vmatpush2.bf16.msra.mxu0 0
        %1598 = vmatprep.subr.bf16.mxu0 0
        %1599 = vmatpush2.bf16.msra.mxu0 0
        %1600 = vmatprep.subr.bf16.mxu0 0
        %1601 = vmatpush2.bf16.msra.mxu0 0
        %1602 = vmatprep.subr.bf16.mxu0 0
        %1603 = vmatpush2.bf16.msra.mxu0 0
        %1604 = vmatprep.subr.bf16.mxu0 0
        %1605 = vmatpush2.bf16.msra.mxu0 0
        %1606 = vmatprep.subr.bf16.mxu0 0
        %1607 = vmatpush2.bf16.msra.mxu0 0
        %1608 = vmatprep.mubr.bf16.mxu0 0
        %1609 = vmatmul.mubr.bf16.gmra.mxu0 %v1532
        %v1610 = vpop.f32.mrf.mxu0
        %v1611 = vadd.f32 0.0, %v1610
        %v1612 = vpop.f32.mrf.mxu0
        %v1613 = vadd.f32 0.0, %v1612
        %v1614 = vpop.f32.mrf.mxu0
        %v1615 = vadd.f32 0.0, %v1614
        %v1616 = vpop.f32.mrf.mxu0
        %v1617 = vadd.f32 0.0, %v1616
        %1618 = vdwg.mxu0
        %v1619 = vadd.f32 %v1524, %v1568
        %v1620 = vadd.f32 %v1525, %v1570
        %v1621 = vadd.f32 %v1526, %v1611
        %v1622 = vadd.f32 %v1527, %v1613
        %v1623 = vadd.f32 %v1528, %v1572
        %v1624 = vadd.f32 %v1529, %v1574
        %v1625 = vadd.f32 %v1530, %v1615
        %v1626 = vadd.f32 %v1531, %v1617
        %v1627 = vxor.u32 %v1619, 2147483648
        %v1628 = vxor.u32 %v1623, 2147483648
        %v1629 = vmul.f32 %v1627, 1.442695
        %v1630 = vpow.pop %v1629
        %v1631 = vmul.f32 %v1628, 1.442695
        %v1632 = vpow.pop %v1631
        %v1633 = vadd.f32 %v1630, 1.0
        %v1634 = vadd.f32 %v1632, 1.0
        %v1635 = vrcp.pop %v1633
        %v1636 = vmul.f32 1.0, %v1635
        %v1637 = vrcp.pop %v1634
        %v1638 = vmul.f32 1.0, %v1637
        %v1639 = vxor.u32 %v1620, 2147483648
        %v1640 = vxor.u32 %v1624, 2147483648
        %v1641 = vmul.f32 %v1639, 1.442695
        %v1642 = vpow.pop %v1641
        %v1643 = vmul.f32 %v1640, 1.442695
        %v1644 = vpow.pop %v1643
        %v1645 = vadd.f32 %v1642, 1.0
        %v1646 = vadd.f32 %v1644, 1.0
        %v1647 = vrcp.pop %v1645
        %v1648 = vmul.f32 1.0, %v1647
        %v1649 = vrcp.pop %v1646
        %v1650 = vmul.f32 1.0, %v1649
        %v1651 = vtanh.pop %v1621
        %v1652 = vtanh.pop %v1625
        %v1653 = vxor.u32 %v1622, 2147483648
        %v1654 = vxor.u32 %v1626, 2147483648
        %v1655 = vmul.f32 %v1653, 1.442695
        %v1656 = vpow.pop %v1655
        %v1657 = vmul.f32 %v1654, 1.442695
        %v1658 = vpow.pop %v1657
        %v1659 = vadd.f32 %v1656, 1.0
        %v1660 = vadd.f32 %v1658, 1.0
        %v1661 = vrcp.pop %v1659
        %v1662 = vmul.f32 1.0, %v1661
        %v1663 = vrcp.pop %v1660
        %v1664 = vmul.f32 1.0, %v1663
        %v1665 = vmul.f32 %v1648, %v1513
        %v1666 = vmul.f32 %v1650, %v1514
        %v1667 = vmul.f32 %v1636, %v1651
        %v1668 = vmul.f32 %v1638, %v1652
        %v1669 = vadd.f32 %v1665, %v1667
        %v1670 = vadd.f32 %v1666, %v1668
        %v1671 = vtanh.pop %v1669
        %v1672 = vtanh.pop %v1670
        %v1673 = vmul.f32 %v1662, %v1671
        %v1674 = vmul.f32 %v1664, %v1672
        %1675 = vst [vmem:[#allocation2] sm:$0xff] %v1673
        %1676 = vst [vmem:[#allocation2 + $0x8] sm:$0xff] %v1674
        %1677 = vst [vmem:[#allocation3] sm:$0xff] %v1669
        %1678 = vst [vmem:[#allocation3 + $0x8] sm:$0xff] %v1670
        %p1679 = scmp.eq.s32.totalorder %s25, 1
        // Predicated region
        $region41: #{tpu_custom_call.1} parent=27 // pred_check
          %p1680 = pneg %p1679
        $region42: #{tpu_custom_call.1} parent=27 // pred_check_branch
          %1682 = sbr.rel (%p1680) target = $region44
        $region43: #{tpu_custom_call.1} parent=27 // pred_region
          %v1683 = vpack.c.bf16 %v1674, %v1673
          %v1685 = vunpack.c.l.b16 %v1683
          %v1686 = vunpack.c.h.b16 %v1683
          %v1687 = vpack.c.b16 %v1685, %v1685
          %v1688 = vpack.c.b16 %v1686, %v1686
          %1691 = vst [vmem:[%s219] sm:$0xf] %v1687
          %1692 = vst [vmem:[%s219 + $0x4] sm:$0xf] %v1688
        $region44: #{tpu_custom_call.1} parent=27 // pred_fallthru
          _
        %s1693 = sand.u32 %s89, 1
        %s1694 = scalar_lea.sflag [#allocation6], %s1693
        %s1695 = sand.u32 %s89, 1
        %s1696 = smul.addr %s1695, 8
        %s1697 = scalar_lea.vmem [#allocation9], %s1696
        // Predicated region
        $region45: #{tpu_custom_call.1} parent=27 // pred_check
          %p1698 = pneg %p99
        $region46: #{tpu_custom_call.1} parent=27 // pred_check_branch
          %1700 = sbr.rel (%p1698) target = $region48
        $region47: #{tpu_custom_call.1} parent=27 // pred_region
          %s1701 = smul.u32 2, %s24
          %s1703 = ssub.s32 128, 128
          %1704 = vsyncadd %s1694, %s1703
          %s1705 = smul.addr %s1701, 64
          %s1706 = scalar_lea.hbm %s2, %s1705
          %s1707 = sshll.u32 %s1697, 4
          %s1708 = int_to_ptr.vmem [resolvable:$true] %s1707
          %1713 = dma.vmem_to_hbm [thread:$0]  %s1708, 128, %s1706, %s1694, 64, 64, 4
        $region48: #{tpu_custom_call.1} parent=27 // pred_fallthru
          _
      $region28: #{tpu_custom_call.1} parent=5 // pred_fallthru
        _
      %p1714 = scmp.le.s32.totalorder 2, %s15
      // Predicated region
      $region49: #{tpu_custom_call.1} parent=5 // pred_check
        %p1715 = pneg %p1714
      $region50: #{tpu_custom_call.1} parent=5 // pred_check_branch
        %1717 = sbr.rel (%p1715) target = $region52
      $region51: #{tpu_custom_call.1} parent=5 // pred_region
        %s1718 = ssub.s32 %s15, 2
        // Predicated region
        $region53: #{tpu_custom_call.1} parent=51 // pred_check
          %p1719 = pneg %p105
        $region54: #{tpu_custom_call.1} parent=51 // pred_check_branch
          %1721 = sbr.rel (%p1719) target = $region56
        $region55: #{tpu_custom_call.1} parent=51 // pred_region
          %s1722 = sand.u32 %s90, 1
          %s1723 = scalar_lea.sflag [#allocation6], %s1722
          %s1724 = sand.u32 %s90, 1
          %s1725 = smul.addr %s1724, 8
          %s1726 = scalar_lea.vmem [#allocation9], %s1725
          %1727 = dma.done %s1723, 128
        $region56: #{tpu_custom_call.1} parent=51 // pred_fallthru
          _
      $region52: #{tpu_custom_call.1} parent=5 // pred_fallthru
        _
    $region6: #{tpu_custom_call.1} parent=1 // loop_footer
      %s19 = sadd.s32 1, %s15
    $region7: #{tpu_custom_call.1} parent=1 // loop_footer_branch
      %14 = sbr.rel target = $region3
    $region8: #{tpu_custom_call.1} parent=1 // loop_exit
      _
    %1728 = vsyncpa [#allocation5], 1
    %s1729 = scalar_lea.sflag [#allocation5], 1
    %1730 = vsyncpa %s1729, 1
    %1731 = vsyncpa [#allocation8], 1
    %1732 = vsyncpa [#allocation6], 1
    %s1733 = scalar_lea.sflag [#allocation6], 1
    %1734 = vsyncpa %s1733, 1

// kernel: tpu_custom_call.1
$region0: #{tpu_custom_call.1}
  #allocation0 [shape = 'u32[]', space=smem, size = 0x4, offset = 0x4, fixed_abs, tag = 'smem constant byte address 0x4 - core index']
  #allocation1 [shape = 'u32[144,128]{1,0:T(1,128)}', space=vmem, size = 0x12000, scoped, tag = 'internal scratch']
  #allocation2 [shape = 'f32[16,128]{1,0:T(8,128)}', space=vmem, size = 0x2000, scoped, tag = 'scratch operand']
  #allocation3 [shape = 'f32[16,128]{1,0:T(8,128)}', space=vmem, size = 0x2000, scoped, tag = 'scratch operand']
  #allocation10 [shape = 's32[]', space=sflag, size = 0x4, offset = 0, fixed_abs, tag = 'sflag constant byte address 0x0 - dummy sync flag']
  %s0 = inlined_call_operand.hbm [shape: bf16[16,32,512], index: 0, kind: input, shape index: {}]
  %s1 = inlined_call_operand.hbm [shape: bf16[128,512], index: 1, kind: input, shape index: {}]
  %s2 = inlined_call_operand.hbm [shape: bf16[32,128], index: 2, kind: output, shape index: {}]
  %s3 = sld [smem:[#allocation0]]
  $region57: #{tpu_custom_call.1} parent=0
    _
  %s5 = ssub.s32 1, %s3
  %s6 = scalar_select 0, %s5, %s3
  $region1: #{tpu_custom_call.1} parent=0
    #allocation4 [shape = 'u8[262144]{0}', space=vmem, size = 0x40000, scoped, tag = 'input window, operand 0']
    #allocation5 [shape = 's32[2]{0}', space=sflag, size = 0x8, scoped, tag = 'scoped memory for tpu_custom_call.1']
    #allocation6 [shape = 's32[2]{0}', space=sflag, size = 0x8, scoped, tag = 'scoped memory for tpu_custom_call.1']
    #allocation7 [shape = 'u8[131072]{0}', space=vmem, size = 0x20000, scoped, tag = 'input window, operand 1, single buffered']
    #allocation8 [shape = 's32[1]{0}', space=sflag, size = 0x4, scoped, tag = 'scoped memory for tpu_custom_call.1']
    #allocation9 [shape = 'u8[8192]{0}', space=vmem, size = 0x2000, scoped, tag = 'output window, operand 0']
    %7 = vsyncpa [#allocation5], 0
    %s8 = scalar_lea.sflag [#allocation5], 1
    %9 = vsyncpa %s8, 0
    %10 = vsyncpa [#allocation8], 0
    %11 = vsyncpa [#allocation6], 0
    %s12 = scalar_lea.sflag [#allocation6], 1
    %13 = vsyncpa %s12, 0
    loop: start=0, step=1, limit=6
    $region2: #{tpu_custom_call.1} parent=1 // loop_pre_header
      _
    $region3: #{tpu_custom_call.1} parent=1 // loop_header
      %s15 = sphi 0, %s19
      %p16 = scmp.ge.s32.totalorder %s15, 6
      %s22 = sphi 0, %s34
      %s23 = sphi 0, %s30
      %s24 = sphi 0, %s22
      %s25 = sphi 0, %s23
      %s26 = sphi 0, %s24
      %s27 = sphi 0, %s25
      %s39 = sphi 0, %s41
      %s42 = sphi 0, %s39
      %s43 = sphi 0, %s42
      %s59 = sphi 0, %s43
      %s63 = sphi 0, %s63
      %s65 = sphi 0, %s63
      %s66 = sphi 0, %s65
      %s80 = sphi 0, %s66
      %s86 = sphi 0, %s88
      %s89 = sphi 0, %s86
      %s90 = sphi 0, %s89
      %s106 = sphi 0, %s90
    $region4: #{tpu_custom_call.1} parent=1 // loop_header_branch
      %18 = sbr.rel (%p16) target = $region8
    $region5: #{tpu_custom_call.1} parent=1 // loop_body
      %s20 = ssub.s32 %s15, 1
      %s21 = ssub.s32 %s15, 2
      %s28 = sadd.s32 1, %s23
      %p29 = scmp.ge.s32.totalorder %s28, 2
      %s30 = scalar_select %p29, 0, %s28
      %s31 = sadd.s32 1, %s22
      %s32 = scalar_select %p29, %s31, %s22
      %p33 = scmp.ge.s32.totalorder %s32, 2
      %s34 = scalar_select %p33, 0, %s32
      %s35 = ssub.s32 %s23, %s30
      %s36 = ssub.s32 %s22, %s34
      %s37 = sor.u32 %s35, %s36
      %p38 = scmp.eq.s32.totalorder %s37, 0
      %s40 = sadd.s32 %s39, 1
      %s41 = scalar_select %p38, %s39, %s40
      %p44 = pneg %p38
      %p45 = scmp.eq.s32.totalorder %s15, 3
      %p46 = por %p44, %p45
      %p47 = scmp.ne.s32.totalorder %s39, %s42
      %p48 = scmp.eq.s32.totalorder %s15, 0
      %p49 = por %p47, %p48
      %p50 = scmp.ne.s32.totalorder %s39, %s42
      %p51 = scmp.eq.s32.totalorder %s20, 3
      %p52 = por %p50, %p51
      %p53 = scmp.ne.s32.totalorder %s42, %s43
      %p54 = scmp.eq.s32.totalorder %s20, 0
      %p55 = por %p53, %p54
      %p56 = scmp.ne.s32.totalorder %s42, %s43
      %p57 = scmp.eq.s32.totalorder %s21, 3
      %p58 = por %p56, %p57
      %p60 = scmp.ne.s32.totalorder %s43, %s59
      %p61 = scmp.eq.s32.totalorder %s21, 0
      %p62 = por %p60, %p61
      %s64 = sadd.s32 %s63, 1
      %p67 = scmp.eq.s32.totalorder %s15, 3
      %p68 = scmp.ne.s32.totalorder %s63, %s65
      %p69 = scmp.eq.s32.totalorder %s15, 0
      %p70 = por %p68, %p69
      %p71 = scmp.ne.s32.totalorder %s63, %s65
      %p72 = scmp.eq.s32.totalorder %s20, 3
      %p73 = por %p71, %p72
      %p74 = scmp.ne.s32.totalorder %s65, %s66
      %p75 = scmp.eq.s32.totalorder %s20, 0
      %p76 = por %p74, %p75
      %p77 = scmp.ne.s32.totalorder %s65, %s66
      %p78 = scmp.eq.s32.totalorder %s21, 3
      %p79 = por %p77, %p78
      %p81 = scmp.ne.s32.totalorder %s66, %s80
      %p82 = scmp.eq.s32.totalorder %s21, 0
      %p83 = por %p81, %p82
      %s84 = ssub.s32 %s22, %s34
      %p85 = scmp.eq.s32.totalorder %s84, 0
      %s87 = sadd.s32 %s86, 1
      %s88 = scalar_select %p85, %s86, %s87
      %p91 = pneg %p85
      %p92 = scmp.eq.s32.totalorder %s15, 3
      %p93 = por %p91, %p92
      %p94 = scmp.ne.s32.totalorder %s86, %s89
      %p95 = scmp.eq.s32.totalorder %s15, 0
      %p96 = por %p94, %p95
      %p97 = scmp.ne.s32.totalorder %s86, %s89
      %p98 = scmp.eq.s32.totalorder %s20, 3
      %p99 = por %p97, %p98
      %p100 = scmp.ne.s32.totalorder %s89, %s90
      %p101 = scmp.eq.s32.totalorder %s20, 0
      %p102 = por %p100, %p101
      %p103 = scmp.ne.s32.totalorder %s89, %s90
      %p104 = scmp.eq.s32.totalorder %s21, 3
      %p105 = por %p103, %p104
      %p107 = scmp.ne.s32.totalorder %s90, %s106
      %p108 = scmp.eq.s32.totalorder %s21, 0
      %p109 = por %p107, %p108
      %p110 = scmp.le.s32.totalorder 1, %s15
      %p111 = scmp.lt.s32.totalorder %s15, 5
      %p112 = pnand %p110, %p111
      %p113 = pneg %p112
      // Predicated region
      $region9: #{tpu_custom_call.1} parent=5 // pred_check
        _
      $region10: #{tpu_custom_call.1} parent=5 // pred_check_branch
        %115 = sbr.rel (%p112) target = $region12
      $region11: #{tpu_custom_call.1} parent=5 // pred_region
        %s116 = ssub.s32 %s15, 1
        // Predicated region
        $region13: #{tpu_custom_call.1} parent=11 // pred_check
          %p117 = pneg %p76
        $region14: #{tpu_custom_call.1} parent=11 // pred_check_branch
          %119 = sbr.rel (%p117) target = $region16
        $region15: #{tpu_custom_call.1} parent=11 // pred_region
          %s121 = ssub.s32 4096, 4096
          %122 = vsyncadd [#allocation8], %s121
          %s123 = sshll.u32 [#allocation7], 4
          %s124 = int_to_ptr.vmem [resolvable:$true] %s123
          %129 = dma.hbm_to_vmem [thread:$0]  %s1, 4096, %s124, [#allocation8], 256, 256, 16
        $region16: #{tpu_custom_call.1} parent=11 // pred_fallthru
          _
      $region12: #{tpu_custom_call.1} parent=5 // pred_fallthru
        _
      %p130 = scmp.lt.s32.totalorder %s15, 4
      // Predicated region
      $region17: #{tpu_custom_call.1} parent=5 // pred_check
        %p131 = pneg %p130
      $region18: #{tpu_custom_call.1} parent=5 // pred_check_branch
        %133 = sbr.rel (%p131) target = $region20
      $region19: #{tpu_custom_call.1} parent=5 // pred_region
        // Predicated region
        $region21: #{tpu_custom_call.1} parent=19 // pred_check
          %p134 = pneg %p49
        $region22: #{tpu_custom_call.1} parent=19 // pred_check_branch
          %136 = sbr.rel (%p134) target = $region24
        $region23: #{tpu_custom_call.1} parent=19 // pred_region
          #allocation11 [shape = 'u32[6]{0}', space=smem, size = 0x18, scoped, tag = 'DMA stride descriptor']
          %s137 = sand.u32 %s39, 1
          %s138 = scalar_lea.sflag [#allocation5], %s137
          %s139 = sand.u32 %s39, 1
          %s140 = smul.addr %s139, 256
          %s141 = scalar_lea.vmem [#allocation4], %s140
          %s142 = smul.u32 8, %s23
          %s143 = smul.u32 2, %s22
          %s145 = ssub.s32 4096, 4096
          %146 = vsyncadd %s138, %s145
          %s147 = smul.addr %s143, 4
          %s148 = smul.addr %s142, 16
          %s149 = sadd.s32 %s147, %s148
          %s150 = smul.addr %s149, 64
          %s151 = scalar_lea.hbm %s0, %s150
          %s153 = sshll.u32 1, 14
          %s154 = sxor.u32 4294967295, %s153
          %s156 = sld [smem:[#allocation0]]
          %s157 = sadd.s32 2, %s156
          %s159 = sshll.u32 7, 26
          %s160 = sxor.u32 4294967295, %s159
          %s161 = sand.u32 0, %s160
          %s162 = sshll.u32 %s157, 26
          %s163 = sor.u32 %s161, %s162
          %s164 = sshll.u32 %s141, 4
          %s165 = int_to_ptr.vmem [resolvable:$true] %s164
          %171 = sst [smem:[#allocation11]] 1024
          %s172 = scalar_lea.smem [#allocation11], 1
          %173 = sst [smem:[%s172]] 512
          %s174 = scalar_lea.smem [#allocation11], 2
          %175 = sst [smem:[%s174]] 2
          %s176 = scalar_lea.smem [#allocation11], 3
          %177 = sst [smem:[%s176]] 256
          %s178 = scalar_lea.smem [#allocation11], 4
          %179 = sst [smem:[%s178]] 256
          %s180 = scalar_lea.smem [#allocation11], 5
          %181 = sst [smem:[%s180]] 16
          %183 = dma.general %s151, 4096, %s165, %s138, 131072, [#allocation11], %s163, 0
        $region24: #{tpu_custom_call.1} parent=19 // pred_fallthru
          _
      $region20: #{tpu_custom_call.1} parent=5 // pred_fallthru
        _
      %p184 = scmp.le.s32.totalorder 1, %s15
      %p185 = scmp.lt.s32.totalorder %s15, 5
      %p186 = pnand %p184, %p185
      %p187 = pneg %p186
      // Predicated region
      $region25: #{tpu_custom_call.1} parent=5 // pred_check
        _
      $region26: #{tpu_custom_call.1} parent=5 // pred_check_branch
        %189 = sbr.rel (%p186) target = $region28
      $region27: #{tpu_custom_call.1} parent=5 // pred_region
        %s190 = ssub.s32 %s15, 1
        %s191 = sand.u32 %s42, 1
        %s192 = scalar_lea.sflag [#allocation5], %s191
        %s193 = sand.u32 %s42, 1
        %s194 = smul.addr %s193, 256
        %s195 = scalar_lea.vmem [#allocation4], %s194
        // Predicated region
        $region29: #{tpu_custom_call.1} parent=27 // pred_check
          %p196 = pneg %p55
        $region30: #{tpu_custom_call.1} parent=27 // pred_check_branch
          %198 = sbr.rel (%p196) target = $region32
        $region31: #{tpu_custom_call.1} parent=27 // pred_region
          %199 = dma.done %s192, 4096
        $region32: #{tpu_custom_call.1} parent=27 // pred_fallthru
          _
        // Predicated region
        $region33: #{tpu_custom_call.1} parent=27 // pred_check
          %p200 = pneg %p76
        $region34: #{tpu_custom_call.1} parent=27 // pred_check_branch
          %202 = sbr.rel (%p200) target = $region36
        $region35: #{tpu_custom_call.1} parent=27 // pred_region
          %203 = dma.done [#allocation8], 4096
        $region36: #{tpu_custom_call.1} parent=27 // pred_fallthru
          _
        %s204 = sand.u32 %s42, 1
        %s205 = scalar_lea.sflag [#allocation5], %s204
        %s206 = sand.u32 %s42, 1
        %s207 = smul.addr %s206, 256
        %s208 = scalar_lea.vmem [#allocation4], %s207
        %p209 = pneg %p55
        %p210 = pneg %p52
        %p211 = pneg %p76
        %p212 = pneg %p73
        %p213 = pneg %p102
        %p214 = pneg %p99
        %s215 = sand.u32 %s89, 1
        %s216 = scalar_lea.sflag [#allocation6], %s215
        %s217 = sand.u32 %s89, 1
        %s218 = smul.addr %s217, 8
        %s219 = scalar_lea.vmem [#allocation9], %s218
        %s220 = smul.u32 8, %s25
        %s221 = smul.u32 2, %s24
        %s222 = smul.u32 2, %s24
        %p224 = scmp.eq.s32.totalorder %s25, 0
        // Predicated region
        $region37: #{tpu_custom_call.1} parent=27 // pred_check
          %p225 = pneg %p224
        $region38: #{tpu_custom_call.1} parent=27 // pred_check_branch
          %227 = sbr.rel (%p225) target = $region40
        $region39: #{tpu_custom_call.1} parent=27 // pred_region
          %228 = vst [vmem:[#allocation2] sm:$0xff] 0.0
          %229 = vst [vmem:[#allocation2 + $0x8] sm:$0xff] 0.0
          %230 = vst [vmem:[#allocation3] sm:$0xff] 0.0
          %231 = vst [vmem:[#allocation3 + $0x8] sm:$0xff] 0.0
        $region40: #{tpu_custom_call.1} parent=27 // pred_fallthru
          _
        %v232 = vld [vmem:[#allocation7] sm:$0xff]
        %v233 = vld [vmem:[#allocation7 + $0x8] sm:$0xff]
        %v234 = vld [vmem:[#allocation7 + $0x10] sm:$0xff]
        %v235 = vld [vmem:[#allocation7 + $0x18] sm:$0xff]
        %v236 = vld [vmem:[#allocation7 + $0x20] sm:$0xff]
        %v237 = vld [vmem:[#allocation7 + $0x28] sm:$0xff]
        %v238 = vld [vmem:[#allocation7 + $0x30] sm:$0xff]
        %v239 = vld [vmem:[#allocation7 + $0x38] sm:$0xff]
        %v240 = vld [vmem:[#allocation7 + $0x40] sm:$0xff]
        %v241 = vld [vmem:[#allocation7 + $0x48] sm:$0xff]
        %v242 = vld [vmem:[#allocation7 + $0x50] sm:$0xff]
        %v243 = vld [vmem:[#allocation7 + $0x58] sm:$0xff]
        %v244 = vld [vmem:[#allocation7 + $0x60] sm:$0xff]
        %v245 = vld [vmem:[#allocation7 + $0x68] sm:$0xff]
        %v246 = vld [vmem:[#allocation7 + $0x70] sm:$0xff]
        %v247 = vld [vmem:[#allocation7 + $0x78] sm:$0xff]
        %v248 = vld [vmem:[#allocation7 + $0x80] sm:$0xff]
        %v249 = vld [vmem:[#allocation7 + $0x88] sm:$0xff]
        %v250 = vld [vmem:[#allocation7 + $0x90] sm:$0xff]
        %v251 = vld [vmem:[#allocation7 + $0x98] sm:$0xff]
        %v252 = vld [vmem:[#allocation7 + $0xa0] sm:$0xff]
        %v253 = vld [vmem:[#allocation7 + $0xa8] sm:$0xff]
        %v254 = vld [vmem:[#allocation7 + $0xb0] sm:$0xff]
        %v255 = vld [vmem:[#allocation7 + $0xb8] sm:$0xff]
        %v256 = vld [vmem:[#allocation7 + $0xc0] sm:$0xff]
        %v257 = vld [vmem:[#allocation7 + $0xc8] sm:$0xff]
        %v258 = vld [vmem:[#allocation7 + $0xd0] sm:$0xff]
        %v259 = vld [vmem:[#allocation7 + $0xd8] sm:$0xff]
        %v260 = vld [vmem:[#allocation7 + $0xe0] sm:$0xff]
        %v261 = vld [vmem:[#allocation7 + $0xe8] sm:$0xff]
        %v262 = vld [vmem:[#allocation7 + $0xf0] sm:$0xff]
        %v263 = vld [vmem:[#allocation7 + $0xf8] sm:$0xff]
        %v264 = vld [vmem:[#allocation2] sm:$0xff]
        %v265 = vld [vmem:[#allocation2 + $0x8] sm:$0xff]
        %v266 = vld [vmem:[#allocation3] sm:$0xff]
        %v267 = vld [vmem:[#allocation3 + $0x8] sm:$0xff]
        %v268 = vld [vmem:[%s195] sm:$0xff]
        %v269 = vld [vmem:[%s195 + $0x8] sm:$0xff]
        %v270 = vld [vmem:[%s195 + $0x10] sm:$0xff]
        %v271 = vld [vmem:[%s195 + $0x18] sm:$0xff]
        %v272 = vunpack.c.l.bf16 %v268
        %v273 = vunpack.c.h.bf16 %v268
        %v274 = vunpack.c.l.bf16 %v269
        %v275 = vunpack.c.h.bf16 %v269
        %v276 = vunpack.c.l.bf16 %v270
        %v277 = vunpack.c.h.bf16 %v270
        %v278 = vunpack.c.l.bf16 %v271
        %v279 = vunpack.c.h.bf16 %v271
        %v280 = vpack.c.bf16 %v265, %v264
        %v313 = vunpack.c.l.b16 %v232
        %v314 = vunpack.c.h.b16 %v232
        %v315 = vunpack.c.l.b16 %v233
        %v316 = vunpack.c.h.b16 %v233
        %v317 = vunpack.c.l.b16 %v234
        %v318 = vunpack.c.h.b16 %v234
        %v319 = vunpack.c.l.b16 %v235
        %v320 = vunpack.c.h.b16 %v235
        %v321 = vunpack.c.l.b16 %v236
        %v322 = vunpack.c.h.b16 %v236
        %v323 = vunpack.c.l.b16 %v237
        %v324 = vunpack.c.h.b16 %v237
        %v325 = vunpack.c.l.b16 %v238
        %v326 = vunpack.c.h.b16 %v238
        %v327 = vunpack.c.l.b16 %v239
        %v328 = vunpack.c.h.b16 %v239
        %v329 = vunpack.c.l.b16 %v240
        %v330 = vunpack.c.h.b16 %v240
        %v331 = vunpack.c.l.b16 %v241
        %v332 = vunpack.c.h.b16 %v241
        %v333 = vunpack.c.l.b16 %v242
        %v334 = vunpack.c.h.b16 %v242
        %v335 = vunpack.c.l.b16 %v243
        %v336 = vunpack.c.h.b16 %v243
        %v337 = vunpack.c.l.b16 %v244
        %v338 = vunpack.c.h.b16 %v244
        %v339 = vunpack.c.l.b16 %v245
        %v340 = vunpack.c.h.b16 %v245
        %v341 = vunpack.c.l.b16 %v246
        %v342 = vunpack.c.h.b16 %v246
        %v343 = vunpack.c.l.b16 %v247
        %v344 = vunpack.c.h.b16 %v247
        %v345 = vunpack.c.l.b16 %v248
        %v346 = vunpack.c.h.b16 %v248
        %v347 = vunpack.c.l.b16 %v249
        %v348 = vunpack.c.h.b16 %v249
        %v349 = vunpack.c.l.b16 %v250
        %v350 = vunpack.c.h.b16 %v250
        %v351 = vunpack.c.l.b16 %v251
        %v352 = vunpack.c.h.b16 %v251
        %v353 = vunpack.c.l.b16 %v252
        %v354 = vunpack.c.h.b16 %v252
        %v355 = vunpack.c.l.b16 %v253
        %v356 = vunpack.c.h.b16 %v253
        %v357 = vunpack.c.l.b16 %v254
        %v358 = vunpack.c.h.b16 %v254
        %v359 = vunpack.c.l.b16 %v255
        %v360 = vunpack.c.h.b16 %v255
        %v361 = vunpack.c.l.b16 %v256
        %v362 = vunpack.c.h.b16 %v256
        %v363 = vunpack.c.l.b16 %v257
        %v364 = vunpack.c.h.b16 %v257
        %v365 = vunpack.c.l.b16 %v258
        %v366 = vunpack.c.h.b16 %v258
        %v367 = vunpack.c.l.b16 %v259
        %v368 = vunpack.c.h.b16 %v259
        %v369 = vunpack.c.l.b16 %v260
        %v370 = vunpack.c.h.b16 %v260
        %v371 = vunpack.c.l.b16 %v261
        %v372 = vunpack.c.h.b16 %v261
        %v373 = vunpack.c.l.b16 %v262
        %v374 = vunpack.c.h.b16 %v262
        %v375 = vunpack.c.l.b16 %v263
        %v376 = vunpack.c.h.b16 %v263
        %v377 = vpack.c.b16 %v317, %v313
        %v378 = vpack.c.b16 %v318, %v314
        %v379 = vpack.c.b16 %v319, %v315
        %v380 = vpack.c.b16 %v320, %v316
        %v381 = vpack.c.b16 %v325, %v321
        %v382 = vpack.c.b16 %v326, %v322
        %v383 = vpack.c.b16 %v327, %v323
        %v384 = vpack.c.b16 %v328, %v324
        %v385 = vpack.c.b16 %v333, %v329
        %v386 = vpack.c.b16 %v334, %v330
        %v387 = vpack.c.b16 %v335, %v331
        %v388 = vpack.c.b16 %v336, %v332
        %v389 = vpack.c.b16 %v341, %v337
        %v390 = vpack.c.b16 %v342, %v338
        %v391 = vpack.c.b16 %v343, %v339
        %v392 = vpack.c.b16 %v344, %v340
        %v393 = vpack.c.b16 %v349, %v345
        %v394 = vpack.c.b16 %v350, %v346
        %v395 = vpack.c.b16 %v351, %v347
        %v396 = vpack.c.b16 %v352, %v348
        %v397 = vpack.c.b16 %v357, %v353
        %v398 = vpack.c.b16 %v358, %v354
        %v399 = vpack.c.b16 %v359, %v355
        %v400 = vpack.c.b16 %v360, %v356
        %v401 = vpack.c.b16 %v365, %v361
        %v402 = vpack.c.b16 %v366, %v362
        %v403 = vpack.c.b16 %v367, %v363
        %v404 = vpack.c.b16 %v368, %v364
        %v405 = vpack.c.b16 %v373, %v369
        %v406 = vpack.c.b16 %v374, %v370
        %v407 = vpack.c.b16 %v375, %v371
        %v408 = vpack.c.b16 %v376, %v372
        %441 = vmatprep.subr.bf16.mxu0 %v406
        %442 = vmatpush1.bf16.msra.mxu0 %v405
        %443 = vmatprep.subr.bf16.mxu0 %v402
        %444 = vmatpush1.bf16.msra.mxu0 %v401
        %445 = vmatprep.subr.bf16.mxu0 %v398
        %446 = vmatpush1.bf16.msra.mxu0 %v397
        %447 = vmatprep.subr.bf16.mxu0 %v394
        %448 = vmatpush1.bf16.msra.mxu0 %v393
        %449 = vmatprep.subr.bf16.mxu0 %v390
        %450 = vmatpush1.bf16.msra.mxu0 %v389
        %451 = vmatprep.subr.bf16.mxu0 %v386
        %452 = vmatpush1.bf16.msra.mxu0 %v385
        %453 = vmatprep.subr.bf16.mxu0 %v382
        %454 = vmatpush1.bf16.msra.mxu0 %v381
        %455 = vmatprep.subr.bf16.mxu0 %v378
        %456 = vmatpush1.bf16.msra.mxu0 %v377
        %457 = vmatprep.subr.bf16.mxu0 0
        %458 = vmatpush2.bf16.msra.mxu0 0
        %459 = vmatprep.subr.bf16.mxu0 0
        %460 = vmatpush2.bf16.msra.mxu0 0
        %461 = vmatprep.subr.bf16.mxu0 0
        %462 = vmatpush2.bf16.msra.mxu0 0
        %463 = vmatprep.subr.bf16.mxu0 0
        %464 = vmatpush2.bf16.msra.mxu0 0
        %465 = vmatprep.subr.bf16.mxu0 0
        %466 = vmatpush2.bf16.msra.mxu0 0
        %467 = vmatprep.subr.bf16.mxu0 0
        %468 = vmatpush2.bf16.msra.mxu0 0
        %469 = vmatprep.subr.bf16.mxu0 0
        %470 = vmatpush2.bf16.msra.mxu0 0
        %471 = vmatprep.subr.bf16.mxu0 0
        %472 = vmatpush2.bf16.msra.mxu0 0
        %473 = vmatprep.mubr.bf16.mxu0 0
        %474 = vmatmul.mubr.bf16.gmra.mxu0 %v280
        %v475 = vpop.f32.mrf.mxu0
        %v476 = vadd.f32 0.0, %v475
        %v477 = vpop.f32.mrf.mxu0
        %v478 = vadd.f32 0.0, %v477
        %v479 = vpop.f32.mrf.mxu0
        %v480 = vadd.f32 0.0, %v479
        %v481 = vpop.f32.mrf.mxu0
        %v482 = vadd.f32 0.0, %v481
        %483 = vdwg.mxu0
        %484 = vmatprep.subr.bf16.mxu0 %v408
        %485 = vmatpush1.bf16.msra.mxu0 %v407
        %486 = vmatprep.subr.bf16.mxu0 %v404
        %487 = vmatpush1.bf16.msra.mxu0 %v403
        %488 = vmatprep.subr.bf16.mxu0 %v400
        %489 = vmatpush1.bf16.msra.mxu0 %v399
        %490 = vmatprep.subr.bf16.mxu0 %v396
        %491 = vmatpush1.bf16.msra.mxu0 %v395
        %492 = vmatprep.subr.bf16.mxu0 %v392
        %493 = vmatpush1.bf16.msra.mxu0 %v391
        %494 = vmatprep.subr.bf16.mxu0 %v388
        %495 = vmatpush1.bf16.msra.mxu0 %v387
        %496 = vmatprep.subr.bf16.mxu0 %v384
        %497 = vmatpush1.bf16.msra.mxu0 %v383
        %498 = vmatprep.subr.bf16.mxu0 %v380
        %499 = vmatpush1.bf16.msra.mxu0 %v379
        %500 = vmatprep.subr.bf16.mxu0 0
        %501 = vmatpush2.bf16.msra.mxu0 0
        %502 = vmatprep.subr.bf16.mxu0 0
        %503 = vmatpush2.bf16.msra.mxu0 0
        %504 = vmatprep.subr.bf16.mxu0 0
        %505 = vmatpush2.bf16.msra.mxu0 0
        %506 = vmatprep.subr.bf16.mxu0 0
        %507 = vmatpush2.bf16.msra.mxu0 0
        %508 = vmatprep.subr.bf16.mxu0 0
        %509 = vmatpush2.bf16.msra.mxu0 0
        %510 = vmatprep.subr.bf16.mxu0 0
        %511 = vmatpush2.bf16.msra.mxu0 0
        %512 = vmatprep.subr.bf16.mxu0 0
        %513 = vmatpush2.bf16.msra.mxu0 0
        %514 = vmatprep.subr.bf16.mxu0 0
        %515 = vmatpush2.bf16.msra.mxu0 0
        %516 = vmatprep.mubr.bf16.mxu0 0
        %517 = vmatmul.mubr.bf16.gmra.mxu0 %v280
        %v518 = vpop.f32.mrf.mxu0
        %v519 = vadd.f32 0.0, %v518
        %v520 = vpop.f32.mrf.mxu0
        %v521 = vadd.f32 0.0, %v520
        %v522 = vpop.f32.mrf.mxu0
        %v523 = vadd.f32 0.0, %v522
        %v524 = vpop.f32.mrf.mxu0
        %v525 = vadd.f32 0.0, %v524
        %526 = vdwg.mxu0
        %v527 = vadd.f32 %v272, %v476
        %v528 = vadd.f32 %v273, %v478
        %v529 = vadd.f32 %v274, %v519
        %v530 = vadd.f32 %v275, %v521
        %v531 = vadd.f32 %v276, %v480
        %v532 = vadd.f32 %v277, %v482
        %v533 = vadd.f32 %v278, %v523
        %v534 = vadd.f32 %v279, %v525
        %v535 = vxor.u32 %v527, 2147483648
        %v536 = vxor.u32 %v531, 2147483648
        %v537 = vmul.f32 %v535, 1.442695
        %v538 = vpow.pop %v537
        %v539 = vmul.f32 %v536, 1.442695
        %v540 = vpow.pop %v539
        %v541 = vadd.f32 %v538, 1.0
        %v542 = vadd.f32 %v540, 1.0
        %v543 = vrcp.pop %v541
        %v544 = vmul.f32 1.0, %v543
        %v545 = vrcp.pop %v542
        %v546 = vmul.f32 1.0, %v545
        %v547 = vxor.u32 %v528, 2147483648
        %v548 = vxor.u32 %v532, 2147483648
        %v549 = vmul.f32 %v547, 1.442695
        %v550 = vpow.pop %v549
        %v551 = vmul.f32 %v548, 1.442695
        %v552 = vpow.pop %v551
        %v553 = vadd.f32 %v550, 1.0
        %v554 = vadd.f32 %v552, 1.0
        %v555 = vrcp.pop %v553
        %v556 = vmul.f32 1.0, %v555
        %v557 = vrcp.pop %v554
        %v558 = vmul.f32 1.0, %v557
        %v559 = vtanh.pop %v529
        %v560 = vtanh.pop %v533
        %v561 = vxor.u32 %v530, 2147483648
        %v562 = vxor.u32 %v534, 2147483648
        %v563 = vmul.f32 %v561, 1.442695
        %v564 = vpow.pop %v563
        %v565 = vmul.f32 %v562, 1.442695
        %v566 = vpow.pop %v565
        %v567 = vadd.f32 %v564, 1.0
        %v568 = vadd.f32 %v566, 1.0
        %v569 = vrcp.pop %v567
        %v570 = vmul.f32 1.0, %v569
        %v571 = vrcp.pop %v568
        %v572 = vmul.f32 1.0, %v571
        %v573 = vmul.f32 %v556, %v266
        %v574 = vmul.f32 %v558, %v267
        %v575 = vmul.f32 %v544, %v559
        %v576 = vmul.f32 %v546, %v560
        %v577 = vadd.f32 %v573, %v575
        %v578 = vadd.f32 %v574, %v576
        %v579 = vtanh.pop %v577
        %v580 = vtanh.pop %v578
        %v581 = vmul.f32 %v570, %v579
        %v582 = vmul.f32 %v572, %v580
        %s583 = scalar_lea.vmem %s195, 32 [#allocation4]
        %v584 = vld [vmem:[%s583] sm:$0xff]
        %v585 = vld [vmem:[%s583 + $0x8] sm:$0xff]
        %v586 = vld [vmem:[%s583 + $0x10] sm:$0xff]
        %v587 = vld [vmem:[%s583 + $0x18] sm:$0xff]
        %v588 = vunpack.c.l.bf16 %v584
        %v589 = vunpack.c.h.bf16 %v584
        %v590 = vunpack.c.l.bf16 %v585
        %v591 = vunpack.c.h.bf16 %v585
        %v592 = vunpack.c.l.bf16 %v586
        %v593 = vunpack.c.h.bf16 %v586
        %v594 = vunpack.c.l.bf16 %v587
        %v595 = vunpack.c.h.bf16 %v587
        %v596 = vpack.c.bf16 %v582, %v581
        %597 = vmatprep.subr.bf16.mxu0 %v406
        %598 = vmatpush1.bf16.msra.mxu0 %v405
        %599 = vmatprep.subr.bf16.mxu0 %v402
        %600 = vmatpush1.bf16.msra.mxu0 %v401
        %601 = vmatprep.subr.bf16.mxu0 %v398
        %602 = vmatpush1.bf16.msra.mxu0 %v397
        %603 = vmatprep.subr.bf16.mxu0 %v394
        %604 = vmatpush1.bf16.msra.mxu0 %v393
        %605 = vmatprep.subr.bf16.mxu0 %v390
        %606 = vmatpush1.bf16.msra.mxu0 %v389
        %607 = vmatprep.subr.bf16.mxu0 %v386
        %608 = vmatpush1.bf16.msra.mxu0 %v385
        %609 = vmatprep.subr.bf16.mxu0 %v382
        %610 = vmatpush1.bf16.msra.mxu0 %v381
        %611 = vmatprep.subr.bf16.mxu0 %v378
        %612 = vmatpush1.bf16.msra.mxu0 %v377
        %613 = vmatprep.subr.bf16.mxu0 0
        %614 = vmatpush2.bf16.msra.mxu0 0
        %615 = vmatprep.subr.bf16.mxu0 0
        %616 = vmatpush2.bf16.msra.mxu0 0
        %617 = vmatprep.subr.bf16.mxu0 0
        %618 = vmatpush2.bf16.msra.mxu0 0
        %619 = vmatprep.subr.bf16.mxu0 0
        %620 = vmatpush2.bf16.msra.mxu0 0
        %621 = vmatprep.subr.bf16.mxu0 0
        %622 = vmatpush2.bf16.msra.mxu0 0
        %623 = vmatprep.subr.bf16.mxu0 0
        %624 = vmatpush2.bf16.msra.mxu0 0
        %625 = vmatprep.subr.bf16.mxu0 0
        %626 = vmatpush2.bf16.msra.mxu0 0
        %627 = vmatprep.subr.bf16.mxu0 0
        %628 = vmatpush2.bf16.msra.mxu0 0
        %629 = vmatprep.mubr.bf16.mxu0 0
        %630 = vmatmul.mubr.bf16.gmra.mxu0 %v596
        %v631 = vpop.f32.mrf.mxu0
        %v632 = vadd.f32 0.0, %v631
        %v633 = vpop.f32.mrf.mxu0
        %v634 = vadd.f32 0.0, %v633
        %v635 = vpop.f32.mrf.mxu0
        %v636 = vadd.f32 0.0, %v635
        %v637 = vpop.f32.mrf.mxu0
        %v638 = vadd.f32 0.0, %v637
        %639 = vdwg.mxu0
        %640 = vmatprep.subr.bf16.mxu0 %v408
        %641 = vmatpush1.bf16.msra.mxu0 %v407
        %642 = vmatprep.subr.bf16.mxu0 %v404
        %643 = vmatpush1.bf16.msra.mxu0 %v403
        %644 = vmatprep.subr.bf16.mxu0 %v400
        %645 = vmatpush1.bf16.msra.mxu0 %v399
        %646 = vmatprep.subr.bf16.mxu0 %v396
        %647 = vmatpush1.bf16.msra.mxu0 %v395
        %648 = vmatprep.subr.bf16.mxu0 %v392
        %649 = vmatpush1.bf16.msra.mxu0 %v391
        %650 = vmatprep.subr.bf16.mxu0 %v388
        %651 = vmatpush1.bf16.msra.mxu0 %v387
        %652 = vmatprep.subr.bf16.mxu0 %v384
        %653 = vmatpush1.bf16.msra.mxu0 %v383
        %654 = vmatprep.subr.bf16.mxu0 %v380
        %655 = vmatpush1.bf16.msra.mxu0 %v379
        %656 = vmatprep.subr.bf16.mxu0 0
        %657 = vmatpush2.bf16.msra.mxu0 0
        %658 = vmatprep.subr.bf16.mxu0 0
        %659 = vmatpush2.bf16.msra.mxu0 0
        %660 = vmatprep.subr.bf16.mxu0 0
        %661 = vmatpush2.bf16.msra.mxu0 0
        %662 = vmatprep.subr.bf16.mxu0 0
        %663 = vmatpush2.bf16.msra.mxu0 0
        %664 = vmatprep.subr.bf16.mxu0 0
        %665 = vmatpush2.bf16.msra.mxu0 0
        %666 = vmatprep.subr.bf16.mxu0 0
        %667 = vmatpush2.bf16.msra.mxu0 0
        %668 = vmatprep.subr.bf16.mxu0 0
        %669 = vmatpush2.bf16.msra.mxu0 0
        %670 = vmatprep.subr.bf16.mxu0 0
        %671 = vmatpush2.bf16.msra.mxu0 0
        %672 = vmatprep.mubr.bf16.mxu0 0
        %673 = vmatmul.mubr.bf16.gmra.mxu0 %v596
        %v674 = vpop.f32.mrf.mxu0
        %v675 = vadd.f32 0.0, %v674
        %v676 = vpop.f32.mrf.mxu0
        %v677 = vadd.f32 0.0, %v676
        %v678 = vpop.f32.mrf.mxu0
        %v679 = vadd.f32 0.0, %v678
        %v680 = vpop.f32.mrf.mxu0
        %v681 = vadd.f32 0.0, %v680
        %682 = vdwg.mxu0
        %v683 = vadd.f32 %v588, %v632
        %v684 = vadd.f32 %v589, %v634
        %v685 = vadd.f32 %v590, %v675
        %v686 = vadd.f32 %v591, %v677
        %v687 = vadd.f32 %v592, %v636
        %v688 = vadd.f32 %v593, %v638
        %v689 = vadd.f32 %v594, %v679
        %v690 = vadd.f32 %v595, %v681
        %v691 = vxor.u32 %v683, 2147483648
        %v692 = vxor.u32 %v687, 2147483648
        %v693 = vmul.f32 %v691, 1.442695
        %v694 = vpow.pop %v693
        %v695 = vmul.f32 %v692, 1.442695
        %v696 = vpow.pop %v695
        %v697 = vadd.f32 %v694, 1.0
        %v698 = vadd.f32 %v696, 1.0
        %v699 = vrcp.pop %v697
        %v700 = vmul.f32 1.0, %v699
        %v701 = vrcp.pop %v698
        %v702 = vmul.f32 1.0, %v701
        %v703 = vxor.u32 %v684, 2147483648
        %v704 = vxor.u32 %v688, 2147483648
        %v705 = vmul.f32 %v703, 1.442695
        %v706 = vpow.pop %v705
        %v707 = vmul.f32 %v704, 1.442695
        %v708 = vpow.pop %v707
        %v709 = vadd.f32 %v706, 1.0
        %v710 = vadd.f32 %v708, 1.0
        %v711 = vrcp.pop %v709
        %v712 = vmul.f32 1.0, %v711
        %v713 = vrcp.pop %v710
        %v714 = vmul.f32 1.0, %v713
        %v715 = vtanh.pop %v685
        %v716 = vtanh.pop %v689
        %v717 = vxor.u32 %v686, 2147483648
        %v718 = vxor.u32 %v690, 2147483648
        %v719 = vmul.f32 %v717, 1.442695
        %v720 = vpow.pop %v719
        %v721 = vmul.f32 %v718, 1.442695
        %v722 = vpow.pop %v721
        %v723 = vadd.f32 %v720, 1.0
        %v724 = vadd.f32 %v722, 1.0
        %v725 = vrcp.pop %v723
        %v726 = vmul.f32 1.0, %v725
        %v727 = vrcp.pop %v724
        %v728 = vmul.f32 1.0, %v727
        %v729 = vmul.f32 %v712, %v577
        %v730 = vmul.f32 %v714, %v578
        %v731 = vmul.f32 %v700, %v715
        %v732 = vmul.f32 %v702, %v716
        %v733 = vadd.f32 %v729, %v731
        %v734 = vadd.f32 %v730, %v732
        %v735 = vtanh.pop %v733
        %v736 = vtanh.pop %v734
        %v737 = vmul.f32 %v726, %v735
        %v738 = vmul.f32 %v728, %v736
        %s739 = scalar_lea.vmem %s195, 64 [#allocation4]
        %v740 = vld [vmem:[%s739] sm:$0xff]
        %v741 = vld [vmem:[%s739 + $0x8] sm:$0xff]
        %v742 = vld [vmem:[%s739 + $0x10] sm:$0xff]
        %v743 = vld [vmem:[%s739 + $0x18] sm:$0xff]
        %v744 = vunpack.c.l.bf16 %v740
        %v745 = vunpack.c.h.bf16 %v740
        %v746 = vunpack.c.l.bf16 %v741
        %v747 = vunpack.c.h.bf16 %v741
        %v748 = vunpack.c.l.bf16 %v742
        %v749 = vunpack.c.h.bf16 %v742
        %v750 = vunpack.c.l.bf16 %v743
        %v751 = vunpack.c.h.bf16 %v743
        %v752 = vpack.c.bf16 %v738, %v737
        %753 = vmatprep.subr.bf16.mxu0 %v406
        %754 = vmatpush1.bf16.msra.mxu0 %v405
        %755 = vmatprep.subr.bf16.mxu0 %v402
        %756 = vmatpush1.bf16.msra.mxu0 %v401
        %757 = vmatprep.subr.bf16.mxu0 %v398
        %758 = vmatpush1.bf16.msra.mxu0 %v397
        %759 = vmatprep.subr.bf16.mxu0 %v394
        %760 = vmatpush1.bf16.msra.mxu0 %v393
        %761 = vmatprep.subr.bf16.mxu0 %v390
        %762 = vmatpush1.bf16.msra.mxu0 %v389
        %763 = vmatprep.subr.bf16.mxu0 %v386
        %764 = vmatpush1.bf16.msra.mxu0 %v385
        %765 = vmatprep.subr.bf16.mxu0 %v382
        %766 = vmatpush1.bf16.msra.mxu0 %v381
        %767 = vmatprep.subr.bf16.mxu0 %v378
        %768 = vmatpush1.bf16.msra.mxu0 %v377
        %769 = vmatprep.subr.bf16.mxu0 0
        %770 = vmatpush2.bf16.msra.mxu0 0
        %771 = vmatprep.subr.bf16.mxu0 0
        %772 = vmatpush2.bf16.msra.mxu0 0
        %773 = vmatprep.subr.bf16.mxu0 0
        %774 = vmatpush2.bf16.msra.mxu0 0
        %775 = vmatprep.subr.bf16.mxu0 0
        %776 = vmatpush2.bf16.msra.mxu0 0
        %777 = vmatprep.subr.bf16.mxu0 0
        %778 = vmatpush2.bf16.msra.mxu0 0
        %779 = vmatprep.subr.bf16.mxu0 0
        %780 = vmatpush2.bf16.msra.mxu0 0
        %781 = vmatprep.subr.bf16.mxu0 0
        %782 = vmatpush2.bf16.msra.mxu0 0
        %783 = vmatprep.subr.bf16.mxu0 0
        %784 = vmatpush2.bf16.msra.mxu0 0
        %785 = vmatprep.mubr.bf16.mxu0 0
        %786 = vmatmul.mubr.bf16.gmra.mxu0 %v752
        %v787 = vpop.f32.mrf.mxu0
        %v788 = vadd.f32 0.0, %v787
        %v789 = vpop.f32.mrf.mxu0
        %v790 = vadd.f32 0.0, %v789
        %v791 = vpop.f32.mrf.mxu0
        %v792 = vadd.f32 0.0, %v791
        %v793 = vpop.f32.mrf.mxu0
        %v794 = vadd.f32 0.0, %v793
        %795 = vdwg.mxu0
        %796 = vmatprep.subr.bf16.mxu0 %v408
        %797 = vmatpush1.bf16.msra.mxu0 %v407
        %798 = vmatprep.subr.bf16.mxu0 %v404
        %799 = vmatpush1.bf16.msra.mxu0 %v403
        %800 = vmatprep.subr.bf16.mxu0 %v400
        %801 = vmatpush1.bf16.msra.mxu0 %v399
        %802 = vmatprep.subr.bf16.mxu0 %v396
        %803 = vmatpush1.bf16.msra.mxu0 %v395
        %804 = vmatprep.subr.bf16.mxu0 %v392
        %805 = vmatpush1.bf16.msra.mxu0 %v391
        %806 = vmatprep.subr.bf16.mxu0 %v388
        %807 = vmatpush1.bf16.msra.mxu0 %v387
        %808 = vmatprep.subr.bf16.mxu0 %v384
        %809 = vmatpush1.bf16.msra.mxu0 %v383
        %810 = vmatprep.subr.bf16.mxu0 %v380
        %811 = vmatpush1.bf16.msra.mxu0 %v379
        %812 = vmatprep.subr.bf16.mxu0 0
        %813 = vmatpush2.bf16.msra.mxu0 0
        %814 = vmatprep.subr.bf16.mxu0 0
        %815 = vmatpush2.bf16.msra.mxu0 0
        %816 = vmatprep.subr.bf16.mxu0 0
        %817 = vmatpush2.bf16.msra.mxu0 0
        %818 = vmatprep.subr.bf16.mxu0 0
        %819 = vmatpush2.bf16.msra.mxu0 0
        %820 = vmatprep.subr.bf16.mxu0 0
        %821 = vmatpush2.bf16.msra.mxu0 0
        %822 = vmatprep.subr.bf16.mxu0 0
        %823 = vmatpush2.bf16.msra.mxu0 0
        %824 = vmatprep.subr.bf16.mxu0 0
        %825 = vmatpush2.bf16.msra.mxu0 0
        %826 = vmatprep.subr.bf16.mxu0 0
        %827 = vmatpush2.bf16.msra.mxu0 0
        %828 = vmatprep.mubr.bf16.mxu0 0
        %829 = vmatmul.mubr.bf16.gmra.mxu0 %v752
        %v830 = vpop.f32.mrf.mxu0
        %v831 = vadd.f32 0.0, %v830
        %v832 = vpop.f32.mrf.mxu0
        %v833 = vadd.f32 0.0, %v832
        %v834 = vpop.f32.mrf.mxu0
        %v835 = vadd.f32 0.0, %v834
        %v836 = vpop.f32.mrf.mxu0
        %v837 = vadd.f32 0.0, %v836
        %838 = vdwg.mxu0
        %v839 = vadd.f32 %v744, %v788
        %v840 = vadd.f32 %v745, %v790
        %v841 = vadd.f32 %v746, %v831
        %v842 = vadd.f32 %v747, %v833
        %v843 = vadd.f32 %v748, %v792
        %v844 = vadd.f32 %v749, %v794
        %v845 = vadd.f32 %v750, %v835
        %v846 = vadd.f32 %v751, %v837
        %v847 = vxor.u32 %v839, 2147483648
        %v848 = vxor.u32 %v843, 2147483648
        %v849 = vmul.f32 %v847, 1.442695
        %v850 = vpow.pop %v849
        %v851 = vmul.f32 %v848, 1.442695
        %v852 = vpow.pop %v851
        %v853 = vadd.f32 %v850, 1.0
        %v854 = vadd.f32 %v852, 1.0
        %v855 = vrcp.pop %v853
        %v856 = vmul.f32 1.0, %v855
        %v857 = vrcp.pop %v854
        %v858 = vmul.f32 1.0, %v857
        %v859 = vxor.u32 %v840, 2147483648
        %v860 = vxor.u32 %v844, 2147483648
        %v861 = vmul.f32 %v859, 1.442695
        %v862 = vpow.pop %v861
        %v863 = vmul.f32 %v860, 1.442695
        %v864 = vpow.pop %v863
        %v865 = vadd.f32 %v862, 1.0
        %v866 = vadd.f32 %v864, 1.0
        %v867 = vrcp.pop %v865
        %v868 = vmul.f32 1.0, %v867
        %v869 = vrcp.pop %v866
        %v870 = vmul.f32 1.0, %v869
        %v871 = vtanh.pop %v841
        %v872 = vtanh.pop %v845
        %v873 = vxor.u32 %v842, 2147483648
        %v874 = vxor.u32 %v846, 2147483648
        %v875 = vmul.f32 %v873, 1.442695
        %v876 = vpow.pop %v875
        %v877 = vmul.f32 %v874, 1.442695
        %v878 = vpow.pop %v877
        %v879 = vadd.f32 %v876, 1.0
        %v880 = vadd.f32 %v878, 1.0
        %v881 = vrcp.pop %v879
        %v882 = vmul.f32 1.0, %v881
        %v883 = vrcp.pop %v880
        %v884 = vmul.f32 1.0, %v883
        %v885 = vmul.f32 %v868, %v733
        %v886 = vmul.f32 %v870, %v734
        %v887 = vmul.f32 %v856, %v871
        %v888 = vmul.f32 %v858, %v872
        %v889 = vadd.f32 %v885, %v887
        %v890 = vadd.f32 %v886, %v888
        %v891 = vtanh.pop %v889
        %v892 = vtanh.pop %v890
        %v893 = vmul.f32 %v882, %v891
        %v894 = vmul.f32 %v884, %v892
        %s895 = scalar_lea.vmem %s195, 96 [#allocation4]
        %v896 = vld [vmem:[%s895] sm:$0xff]
        %v897 = vld [vmem:[%s895 + $0x8] sm:$0xff]
        %v898 = vld [vmem:[%s895 + $0x10] sm:$0xff]
        %v899 = vld [vmem:[%s895 + $0x18] sm:$0xff]
        %v900 = vunpack.c.l.bf16 %v896
        %v901 = vunpack.c.h.bf16 %v896
        %v902 = vunpack.c.l.bf16 %v897
        %v903 = vunpack.c.h.bf16 %v897
        %v904 = vunpack.c.l.bf16 %v898
        %v905 = vunpack.c.h.bf16 %v898
        %v906 = vunpack.c.l.bf16 %v899
        %v907 = vunpack.c.h.bf16 %v899
        %v908 = vpack.c.bf16 %v894, %v893
        %909 = vmatprep.subr.bf16.mxu0 %v406
        %910 = vmatpush1.bf16.msra.mxu0 %v405
        %911 = vmatprep.subr.bf16.mxu0 %v402
        %912 = vmatpush1.bf16.msra.mxu0 %v401
        %913 = vmatprep.subr.bf16.mxu0 %v398
        %914 = vmatpush1.bf16.msra.mxu0 %v397
        %915 = vmatprep.subr.bf16.mxu0 %v394
        %916 = vmatpush1.bf16.msra.mxu0 %v393
        %917 = vmatprep.subr.bf16.mxu0 %v390
        %918 = vmatpush1.bf16.msra.mxu0 %v389
        %919 = vmatprep.subr.bf16.mxu0 %v386
        %920 = vmatpush1.bf16.msra.mxu0 %v385
        %921 = vmatprep.subr.bf16.mxu0 %v382
        %922 = vmatpush1.bf16.msra.mxu0 %v381
        %923 = vmatprep.subr.bf16.mxu0 %v378
        %924 = vmatpush1.bf16.msra.mxu0 %v377
        %925 = vmatprep.subr.bf16.mxu0 0
        %926 = vmatpush2.bf16.msra.mxu0 0
        %927 = vmatprep.subr.bf16.mxu0 0
        %928 = vmatpush2.bf16.msra.mxu0 0
        %929 = vmatprep.subr.bf16.mxu0 0
        %930 = vmatpush2.bf16.msra.mxu0 0
        %931 = vmatprep.subr.bf16.mxu0 0
        %932 = vmatpush2.bf16.msra.mxu0 0
        %933 = vmatprep.subr.bf16.mxu0 0
        %934 = vmatpush2.bf16.msra.mxu0 0
        %935 = vmatprep.subr.bf16.mxu0 0
        %936 = vmatpush2.bf16.msra.mxu0 0
        %937 = vmatprep.subr.bf16.mxu0 0
        %938 = vmatpush2.bf16.msra.mxu0 0
        %939 = vmatprep.subr.bf16.mxu0 0
        %940 = vmatpush2.bf16.msra.mxu0 0
        %941 = vmatprep.mubr.bf16.mxu0 0
        %942 = vmatmul.mubr.bf16.gmra.mxu0 %v908
        %v943 = vpop.f32.mrf.mxu0
        %v944 = vadd.f32 0.0, %v943
        %v945 = vpop.f32.mrf.mxu0
        %v946 = vadd.f32 0.0, %v945
        %v947 = vpop.f32.mrf.mxu0
        %v948 = vadd.f32 0.0, %v947
        %v949 = vpop.f32.mrf.mxu0
        %v950 = vadd.f32 0.0, %v949
        %951 = vdwg.mxu0
        %952 = vmatprep.subr.bf16.mxu0 %v408
        %953 = vmatpush1.bf16.msra.mxu0 %v407
        %954 = vmatprep.subr.bf16.mxu0 %v404
        %955 = vmatpush1.bf16.msra.mxu0 %v403
        %956 = vmatprep.subr.bf16.mxu0 %v400
        %957 = vmatpush1.bf16.msra.mxu0 %v399
        %958 = vmatprep.subr.bf16.mxu0 %v396
        %959 = vmatpush1.bf16.msra.mxu0 %v395
        %960 = vmatprep.subr.bf16.mxu0 %v392
        %961 = vmatpush1.bf16.msra.mxu0 %v391
        %962 = vmatprep.subr.bf16.mxu0 %v388
        %963 = vmatpush1.bf16.msra.mxu0 %v387
        %964 = vmatprep.subr.bf16.mxu0 %v384
        %965 = vmatpush1.bf16.msra.mxu0 %v383
        %966 = vmatprep.subr.bf16.mxu0 %v380
        %967 = vmatpush1.bf16.msra.mxu0 %v379
        %968 = vmatprep.subr.bf16.mxu0 0
        %969 = vmatpush2.bf16.msra.mxu0 0
        %970 = vmatprep.subr.bf16.mxu0 0
        %971 = vmatpush2.bf16.msra.mxu0 0
        %972 = vmatprep.subr.bf16.mxu0 0
        %973 = vmatpush2.bf16.msra.mxu0 0
        %974 = vmatprep.subr.bf16.mxu0 0
        %975 = vmatpush2.bf16.msra.mxu0 0
        %976 = vmatprep.subr.bf16.mxu0 0
        %977 = vmatpush2.bf16.msra.mxu0 0
        %978 = vmatprep.subr.bf16.mxu0 0
        %979 = vmatpush2.bf16.msra.mxu0 0
        %980 = vmatprep.subr.bf16.mxu0 0
        %981 = vmatpush2.bf16.msra.mxu0 0
        %982 = vmatprep.subr.bf16.mxu0 0
        %983 = vmatpush2.bf16.msra.mxu0 0
        %984 = vmatprep.mubr.bf16.mxu0 0
        %985 = vmatmul.mubr.bf16.gmra.mxu0 %v908
        %v986 = vpop.f32.mrf.mxu0
        %v987 = vadd.f32 0.0, %v986
        %v988 = vpop.f32.mrf.mxu0
        %v989 = vadd.f32 0.0, %v988
        %v990 = vpop.f32.mrf.mxu0
        %v991 = vadd.f32 0.0, %v990
        %v992 = vpop.f32.mrf.mxu0
        %v993 = vadd.f32 0.0, %v992
        %994 = vdwg.mxu0
        %v995 = vadd.f32 %v900, %v944
        %v996 = vadd.f32 %v901, %v946
        %v997 = vadd.f32 %v902, %v987
        %v998 = vadd.f32 %v903, %v989
        %v999 = vadd.f32 %v904, %v948
        %v1000 = vadd.f32 %v905, %v950
        %v1001 = vadd.f32 %v906, %v991
        %v1002 = vadd.f32 %v907, %v993
        %v1003 = vxor.u32 %v995, 2147483648
        %v1004 = vxor.u32 %v999, 2147483648
        %v1005 = vmul.f32 %v1003, 1.442695
        %v1006 = vpow.pop %v1005
        %v1007 = vmul.f32 %v1004, 1.442695
        %v1008 = vpow.pop %v1007
        %v1009 = vadd.f32 %v1006, 1.0
        %v1010 = vadd.f32 %v1008, 1.0
        %v1011 = vrcp.pop %v1009
        %v1012 = vmul.f32 1.0, %v1011
        %v1013 = vrcp.pop %v1010
        %v1014 = vmul.f32 1.0, %v1013
        %v1015 = vxor.u32 %v996, 2147483648
        %v1016 = vxor.u32 %v1000, 2147483648
        %v1017 = vmul.f32 %v1015, 1.442695
        %v1018 = vpow.pop %v1017
        %v1019 = vmul.f32 %v1016, 1.442695
        %v1020 = vpow.pop %v1019
        %v1021 = vadd.f32 %v1018, 1.0
        %v1022 = vadd.f32 %v1020, 1.0
        %v1023 = vrcp.pop %v1021
        %v1024 = vmul.f32 1.0, %v1023
        %v1025 = vrcp.pop %v1022
        %v1026 = vmul.f32 1.0, %v1025
        %v1027 = vtanh.pop %v997
        %v1028 = vtanh.pop %v1001
        %v1029 = vxor.u32 %v998, 2147483648
        %v1030 = vxor.u32 %v1002, 2147483648
        %v1031 = vmul.f32 %v1029, 1.442695
        %v1032 = vpow.pop %v1031
        %v1033 = vmul.f32 %v1030, 1.442695
        %v1034 = vpow.pop %v1033
        %v1035 = vadd.f32 %v1032, 1.0
        %v1036 = vadd.f32 %v1034, 1.0
        %v1037 = vrcp.pop %v1035
        %v1038 = vmul.f32 1.0, %v1037
        %v1039 = vrcp.pop %v1036
        %v1040 = vmul.f32 1.0, %v1039
        %v1041 = vmul.f32 %v1024, %v889
        %v1042 = vmul.f32 %v1026, %v890
        %v1043 = vmul.f32 %v1012, %v1027
        %v1044 = vmul.f32 %v1014, %v1028
        %v1045 = vadd.f32 %v1041, %v1043
        %v1046 = vadd.f32 %v1042, %v1044
        %v1047 = vtanh.pop %v1045
        %v1048 = vtanh.pop %v1046
        %v1049 = vmul.f32 %v1038, %v1047
        %v1050 = vmul.f32 %v1040, %v1048
        %s1051 = scalar_lea.vmem %s195, 128 [#allocation4]
        %v1052 = vld [vmem:[%s1051] sm:$0xff]
        %v1053 = vld [vmem:[%s1051 + $0x8] sm:$0xff]
        %v1054 = vld [vmem:[%s1051 + $0x10] sm:$0xff]
        %v1055 = vld [vmem:[%s1051 + $0x18] sm:$0xff]
        %v1056 = vunpack.c.l.bf16 %v1052
        %v1057 = vunpack.c.h.bf16 %v1052
        %v1058 = vunpack.c.l.bf16 %v1053
        %v1059 = vunpack.c.h.bf16 %v1053
        %v1060 = vunpack.c.l.bf16 %v1054
        %v1061 = vunpack.c.h.bf16 %v1054
        %v1062 = vunpack.c.l.bf16 %v1055
        %v1063 = vunpack.c.h.bf16 %v1055
        %v1064 = vpack.c.bf16 %v1050, %v1049
        %1065 = vmatprep.subr.bf16.mxu0 %v406
        %1066 = vmatpush1.bf16.msra.mxu0 %v405
        %1067 = vmatprep.subr.bf16.mxu0 %v402
        %1068 = vmatpush1.bf16.msra.mxu0 %v401
        %1069 = vmatprep.subr.bf16.mxu0 %v398
        %1070 = vmatpush1.bf16.msra.mxu0 %v397
        %1071 = vmatprep.subr.bf16.mxu0 %v394
        %1072 = vmatpush1.bf16.msra.mxu0 %v393
        %1073 = vmatprep.subr.bf16.mxu0 %v390
        %1074 = vmatpush1.bf16.msra.mxu0 %v389
        %1075 = vmatprep.subr.bf16.mxu0 %v386
        %1076 = vmatpush1.bf16.msra.mxu0 %v385
        %1077 = vmatprep.subr.bf16.mxu0 %v382
        %1078 = vmatpush1.bf16.msra.mxu0 %v381
        %1079 = vmatprep.subr.bf16.mxu0 %v378
        %1080 = vmatpush1.bf16.msra.mxu0 %v377
        %1081 = vmatprep.subr.bf16.mxu0 0
        %1082 = vmatpush2.bf16.msra.mxu0 0
        %1083 = vmatprep.subr.bf16.mxu0 0
        %1084 = vmatpush2.bf16.msra.mxu0 0
        %1085 = vmatprep.subr.bf16.mxu0 0
        %1086 = vmatpush2.bf16.msra.mxu0 0
        %1087 = vmatprep.subr.bf16.mxu0 0
        %1088 = vmatpush2.bf16.msra.mxu0 0
        %1089 = vmatprep.subr.bf16.mxu0 0
        %1090 = vmatpush2.bf16.msra.mxu0 0
        %1091 = vmatprep.subr.bf16.mxu0 0
        %1092 = vmatpush2.bf16.msra.mxu0 0
        %1093 = vmatprep.subr.bf16.mxu0 0
        %1094 = vmatpush2.bf16.msra.mxu0 0
        %1095 = vmatprep.subr.bf16.mxu0 0
        %1096 = vmatpush2.bf16.msra.mxu0 0
        %1097 = vmatprep.mubr.bf16.mxu0 0
        %1098 = vmatmul.mubr.bf16.gmra.mxu0 %v1064
        %v1099 = vpop.f32.mrf.mxu0
        %v1100 = vadd.f32 0.0, %v1099
        %v1101 = vpop.f32.mrf.mxu0
        %v1102 = vadd.f32 0.0, %v1101
        %v1103 = vpop.f32.mrf.mxu0
        %v1104 = vadd.f32 0.0, %v1103
        %v1105 = vpop.f32.mrf.mxu0
        %v1106 = vadd.f32 0.0, %v1105
        %1107 = vdwg.mxu0
        %1108 = vmatprep.subr.bf16.mxu0 %v408
        %1109 = vmatpush1.bf16.msra.mxu0 %v407
        %1110 = vmatprep.subr.bf16.mxu0 %v404
        %1111 = vmatpush1.bf16.msra.mxu0 %v403
        %1112 = vmatprep.subr.bf16.mxu0 %v400
        %1113 = vmatpush1.bf16.msra.mxu0 %v399
        %1114 = vmatprep.subr.bf16.mxu0 %v396
        %1115 = vmatpush1.bf16.msra.mxu0 %v395
        %1116 = vmatprep.subr.bf16.mxu0 %v392
        %1117 = vmatpush1.bf16.msra.mxu0 %v391
        %1118 = vmatprep.subr.bf16.mxu0 %v388
        %1119 = vmatpush1.bf16.msra.mxu0 %v387
        %1120 = vmatprep.subr.bf16.mxu0 %v384
        %1121 = vmatpush1.bf16.msra.mxu0 %v383
        %1122 = vmatprep.subr.bf16.mxu0 %v380
        %1123 = vmatpush1.bf16.msra.mxu0 %v379
        %1124 = vmatprep.subr.bf16.mxu0 0
        %1125 = vmatpush2.bf16.msra.mxu0 0
        %1126 = vmatprep.subr.bf16.mxu0 0
        %1127 = vmatpush2.bf16.msra.mxu0 0
        %1128 = vmatprep.subr.bf16.mxu0 0
        %1129 = vmatpush2.bf16.msra.mxu0 0
        %1130 = vmatprep.subr.bf16.mxu0 0
        %1131 = vmatpush2.bf16.msra.mxu0 0
        %1132 = vmatprep.subr.bf16.mxu0 0
        %1133 = vmatpush2.bf16.msra.mxu0 0
        %1134 = vmatprep.subr.bf16.mxu0 0
        %1135 = vmatpush2.bf16.msra.mxu0 0
        %1136 = vmatprep.subr.bf16.mxu0 0
        %1137 = vmatpush2.bf16.msra.mxu0 0
        %1138 = vmatprep.subr.bf16.mxu0 0
        %1139 = vmatpush2.bf16.msra.mxu0 0
        %1140 = vmatprep.mubr.bf16.mxu0 0
        %1141 = vmatmul.mubr.bf16.gmra.mxu0 %v1064
        %v1142 = vpop.f32.mrf.mxu0
        %v1143 = vadd.f32 0.0, %v1142
        %v1144 = vpop.f32.mrf.mxu0
        %v1145 = vadd.f32 0.0, %v1144
        %v1146 = vpop.f32.mrf.mxu0
        %v1147 = vadd.f32 0.0, %v1146
        %v1148 = vpop.f32.mrf.mxu0
        %v1149 = vadd.f32 0.0, %v1148
        %1150 = vdwg.mxu0
        %v1151 = vadd.f32 %v1056, %v1100
        %v1152 = vadd.f32 %v1057, %v1102
        %v1153 = vadd.f32 %v1058, %v1143
        %v1154 = vadd.f32 %v1059, %v1145
        %v1155 = vadd.f32 %v1060, %v1104
        %v1156 = vadd.f32 %v1061, %v1106
        %v1157 = vadd.f32 %v1062, %v1147
        %v1158 = vadd.f32 %v1063, %v1149
        %v1159 = vxor.u32 %v1151, 2147483648
        %v1160 = vxor.u32 %v1155, 2147483648
        %v1161 = vmul.f32 %v1159, 1.442695
        %v1162 = vpow.pop %v1161
        %v1163 = vmul.f32 %v1160, 1.442695
        %v1164 = vpow.pop %v1163
        %v1165 = vadd.f32 %v1162, 1.0
        %v1166 = vadd.f32 %v1164, 1.0
        %v1167 = vrcp.pop %v1165
        %v1168 = vmul.f32 1.0, %v1167
        %v1169 = vrcp.pop %v1166
        %v1170 = vmul.f32 1.0, %v1169
        %v1171 = vxor.u32 %v1152, 2147483648
        %v1172 = vxor.u32 %v1156, 2147483648
        %v1173 = vmul.f32 %v1171, 1.442695
        %v1174 = vpow.pop %v1173
        %v1175 = vmul.f32 %v1172, 1.442695
        %v1176 = vpow.pop %v1175
        %v1177 = vadd.f32 %v1174, 1.0
        %v1178 = vadd.f32 %v1176, 1.0
        %v1179 = vrcp.pop %v1177
        %v1180 = vmul.f32 1.0, %v1179
        %v1181 = vrcp.pop %v1178
        %v1182 = vmul.f32 1.0, %v1181
        %v1183 = vtanh.pop %v1153
        %v1184 = vtanh.pop %v1157
        %v1185 = vxor.u32 %v1154, 2147483648
        %v1186 = vxor.u32 %v1158, 2147483648
        %v1187 = vmul.f32 %v1185, 1.442695
        %v1188 = vpow.pop %v1187
        %v1189 = vmul.f32 %v1186, 1.442695
        %v1190 = vpow.pop %v1189
        %v1191 = vadd.f32 %v1188, 1.0
        %v1192 = vadd.f32 %v1190, 1.0
        %v1193 = vrcp.pop %v1191
        %v1194 = vmul.f32 1.0, %v1193
        %v1195 = vrcp.pop %v1192
        %v1196 = vmul.f32 1.0, %v1195
        %v1197 = vmul.f32 %v1180, %v1045
        %v1198 = vmul.f32 %v1182, %v1046
        %v1199 = vmul.f32 %v1168, %v1183
        %v1200 = vmul.f32 %v1170, %v1184
        %v1201 = vadd.f32 %v1197, %v1199
        %v1202 = vadd.f32 %v1198, %v1200
        %v1203 = vtanh.pop %v1201
        %v1204 = vtanh.pop %v1202
        %v1205 = vmul.f32 %v1194, %v1203
        %v1206 = vmul.f32 %v1196, %v1204
        %s1207 = scalar_lea.vmem %s195, 160 [#allocation4]
        %v1208 = vld [vmem:[%s1207] sm:$0xff]
        %v1209 = vld [vmem:[%s1207 + $0x8] sm:$0xff]
        %v1210 = vld [vmem:[%s1207 + $0x10] sm:$0xff]
        %v1211 = vld [vmem:[%s1207 + $0x18] sm:$0xff]
        %v1212 = vunpack.c.l.bf16 %v1208
        %v1213 = vunpack.c.h.bf16 %v1208
        %v1214 = vunpack.c.l.bf16 %v1209
        %v1215 = vunpack.c.h.bf16 %v1209
        %v1216 = vunpack.c.l.bf16 %v1210
        %v1217 = vunpack.c.h.bf16 %v1210
        %v1218 = vunpack.c.l.bf16 %v1211
        %v1219 = vunpack.c.h.bf16 %v1211
        %v1220 = vpack.c.bf16 %v1206, %v1205
        %1221 = vmatprep.subr.bf16.mxu0 %v406
        %1222 = vmatpush1.bf16.msra.mxu0 %v405
        %1223 = vmatprep.subr.bf16.mxu0 %v402
        %1224 = vmatpush1.bf16.msra.mxu0 %v401
        %1225 = vmatprep.subr.bf16.mxu0 %v398
        %1226 = vmatpush1.bf16.msra.mxu0 %v397
        %1227 = vmatprep.subr.bf16.mxu0 %v394
        %1228 = vmatpush1.bf16.msra.mxu0 %v393
        %1229 = vmatprep.subr.bf16.mxu0 %v390
        %1230 = vmatpush1.bf16.msra.mxu0 %v389
        %1231 = vmatprep.subr.bf16.mxu0 %v386
        %1232 = vmatpush1.bf16.msra.mxu0 %v385
        %1233 = vmatprep.subr.bf16.mxu0 %v382
        %1234 = vmatpush1.bf16.msra.mxu0 %v381
        %1235 = vmatprep.subr.bf16.mxu0 %v378
        %1236 = vmatpush1.bf16.msra.mxu0 %v377
        %1237 = vmatprep.subr.bf16.mxu0 0
        %1238 = vmatpush2.bf16.msra.mxu0 0
        %1239 = vmatprep.subr.bf16.mxu0 0
        %1240 = vmatpush2.bf16.msra.mxu0 0
        %1241 = vmatprep.subr.bf16.mxu0 0
        %1242 = vmatpush2.bf16.msra.mxu0 0
        %1243 = vmatprep.subr.bf16.mxu0 0
        %1244 = vmatpush2.bf16.msra.mxu0 0
        %1245 = vmatprep.subr.bf16.mxu0 0
        %1246 = vmatpush2.bf16.msra.mxu0 0
        %1247 = vmatprep.subr.bf16.mxu0 0
        %1248 = vmatpush2.bf16.msra.mxu0 0
        %1249 = vmatprep.subr.bf16.mxu0 0
        %1250 = vmatpush2.bf16.msra.mxu0 0
        %1251 = vmatprep.subr.bf16.mxu0 0
        %1252 = vmatpush2.bf16.msra.mxu0 0
        %1253 = vmatprep.mubr.bf16.mxu0 0
        %1254 = vmatmul.mubr.bf16.gmra.mxu0 %v1220
        %v1255 = vpop.f32.mrf.mxu0
        %v1256 = vadd.f32 0.0, %v1255
        %v1257 = vpop.f32.mrf.mxu0
        %v1258 = vadd.f32 0.0, %v1257
        %v1259 = vpop.f32.mrf.mxu0
        %v1260 = vadd.f32 0.0, %v1259
        %v1261 = vpop.f32.mrf.mxu0
        %v1262 = vadd.f32 0.0, %v1261
        %1263 = vdwg.mxu0
        %1264 = vmatprep.subr.bf16.mxu0 %v408
        %1265 = vmatpush1.bf16.msra.mxu0 %v407
        %1266 = vmatprep.subr.bf16.mxu0 %v404
        %1267 = vmatpush1.bf16.msra.mxu0 %v403
        %1268 = vmatprep.subr.bf16.mxu0 %v400
        %1269 = vmatpush1.bf16.msra.mxu0 %v399
        %1270 = vmatprep.subr.bf16.mxu0 %v396
        %1271 = vmatpush1.bf16.msra.mxu0 %v395
        %1272 = vmatprep.subr.bf16.mxu0 %v392
        %1273 = vmatpush1.bf16.msra.mxu0 %v391
        %1274 = vmatprep.subr.bf16.mxu0 %v388
        %1275 = vmatpush1.bf16.msra.mxu0 %v387
        %1276 = vmatprep.subr.bf16.mxu0 %v384
        %1277 = vmatpush1.bf16.msra.mxu0 %v383
        %1278 = vmatprep.subr.bf16.mxu0 %v380
        %1279 = vmatpush1.bf16.msra.mxu0 %v379
        %1280 = vmatprep.subr.bf16.mxu0 0
        %1281 = vmatpush2.bf16.msra.mxu0 0
        %1282 = vmatprep.subr.bf16.mxu0 0
        %1283 = vmatpush2.bf16.msra.mxu0 0
        %1284 = vmatprep.subr.bf16.mxu0 0
        %1285 = vmatpush2.bf16.msra.mxu0 0
        %1286 = vmatprep.subr.bf16.mxu0 0
        %1287 = vmatpush2.bf16.msra.mxu0 0
        %1288 = vmatprep.subr.bf16.mxu0 0
        %1289 = vmatpush2.bf16.msra.mxu0 0
        %1290 = vmatprep.subr.bf16.mxu0 0
        %1291 = vmatpush2.bf16.msra.mxu0 0
        %1292 = vmatprep.subr.bf16.mxu0 0
        %1293 = vmatpush2.bf16.msra.mxu0 0
        %1294 = vmatprep.subr.bf16.mxu0 0
        %1295 = vmatpush2.bf16.msra.mxu0 0
        %1296 = vmatprep.mubr.bf16.mxu0 0
        %1297 = vmatmul.mubr.bf16.gmra.mxu0 %v1220
        %v1298 = vpop.f32.mrf.mxu0
        %v1299 = vadd.f32 0.0, %v1298
        %v1300 = vpop.f32.mrf.mxu0
        %v1301 = vadd.f32 0.0, %v1300
        %v1302 = vpop.f32.mrf.mxu0
        %v1303 = vadd.f32 0.0, %v1302
        %v1304 = vpop.f32.mrf.mxu0
        %v1305 = vadd.f32 0.0, %v1304
        %1306 = vdwg.mxu0
        %v1307 = vadd.f32 %v1212, %v1256
        %v1308 = vadd.f32 %v1213, %v1258
        %v1309 = vadd.f32 %v1214, %v1299
        %v1310 = vadd.f32 %v1215, %v1301
        %v1311 = vadd.f32 %v1216, %v1260
        %v1312 = vadd.f32 %v1217, %v1262
        %v1313 = vadd.f32 %v1218, %v1303
        %v1314 = vadd.f32 %v1219, %v1305
        %v1315 = vxor.u32 %v1307, 2147483648
        %v1316 = vxor.u32 %v1311, 2147483648
        %v1317 = vmul.f32 %v1315, 1.442695
        %v1318 = vpow.pop %v1317
        %v1319 = vmul.f32 %v1316, 1.442695
        %v1320 = vpow.pop %v1319
        %v1321 = vadd.f32 %v1318, 1.0
        %v1322 = vadd.f32 %v1320, 1.0
        %v1323 = vrcp.pop %v1321
        %v1324 = vmul.f32 1.0, %v1323
        %v1325 = vrcp.pop %v1322
        %v1326 = vmul.f32 1.0, %v1325
        %v1327 = vxor.u32 %v1308, 2147483648
        %v1328 = vxor.u32 %v1312, 2147483648
        %v1329 = vmul.f32 %v1327, 1.442695
        %v1330 = vpow.pop %v1329
        %v1331 = vmul.f32 %v1328, 1.442695
        %v1332 = vpow.pop %v1331
        %v1333 = vadd.f32 %v1330, 1.0
        %v1334 = vadd.f32 %v1332, 1.0
        %v1335 = vrcp.pop %v1333
        %v1336 = vmul.f32 1.0, %v1335
        %v1337 = vrcp.pop %v1334
        %v1338 = vmul.f32 1.0, %v1337
        %v1339 = vtanh.pop %v1309
        %v1340 = vtanh.pop %v1313
        %v1341 = vxor.u32 %v1310, 2147483648
        %v1342 = vxor.u32 %v1314, 2147483648
        %v1343 = vmul.f32 %v1341, 1.442695
        %v1344 = vpow.pop %v1343
        %v1345 = vmul.f32 %v1342, 1.442695
        %v1346 = vpow.pop %v1345
        %v1347 = vadd.f32 %v1344, 1.0
        %v1348 = vadd.f32 %v1346, 1.0
        %v1349 = vrcp.pop %v1347
        %v1350 = vmul.f32 1.0, %v1349
        %v1351 = vrcp.pop %v1348
        %v1352 = vmul.f32 1.0, %v1351
        %v1353 = vmul.f32 %v1336, %v1201
        %v1354 = vmul.f32 %v1338, %v1202
        %v1355 = vmul.f32 %v1324, %v1339
        %v1356 = vmul.f32 %v1326, %v1340
        %v1357 = vadd.f32 %v1353, %v1355
        %v1358 = vadd.f32 %v1354, %v1356
        %v1359 = vtanh.pop %v1357
        %v1360 = vtanh.pop %v1358
        %v1361 = vmul.f32 %v1350, %v1359
        %v1362 = vmul.f32 %v1352, %v1360
        %s1363 = scalar_lea.vmem %s195, 192 [#allocation4]
        %v1364 = vld [vmem:[%s1363] sm:$0xff]
        %v1365 = vld [vmem:[%s1363 + $0x8] sm:$0xff]
        %v1366 = vld [vmem:[%s1363 + $0x10] sm:$0xff]
        %v1367 = vld [vmem:[%s1363 + $0x18] sm:$0xff]
        %v1368 = vunpack.c.l.bf16 %v1364
        %v1369 = vunpack.c.h.bf16 %v1364
        %v1370 = vunpack.c.l.bf16 %v1365
        %v1371 = vunpack.c.h.bf16 %v1365
        %v1372 = vunpack.c.l.bf16 %v1366
        %v1373 = vunpack.c.h.bf16 %v1366
        %v1374 = vunpack.c.l.bf16 %v1367
        %v1375 = vunpack.c.h.bf16 %v1367
        %v1376 = vpack.c.bf16 %v1362, %v1361
        %1377 = vmatprep.subr.bf16.mxu0 %v406
        %1378 = vmatpush1.bf16.msra.mxu0 %v405
        %1379 = vmatprep.subr.bf16.mxu0 %v402
        %1380 = vmatpush1.bf16.msra.mxu0 %v401
        %1381 = vmatprep.subr.bf16.mxu0 %v398
        %1382 = vmatpush1.bf16.msra.mxu0 %v397
        %1383 = vmatprep.subr.bf16.mxu0 %v394
        %1384 = vmatpush1.bf16.msra.mxu0 %v393
        %1385 = vmatprep.subr.bf16.mxu0 %v390
        %1386 = vmatpush1.bf16.msra.mxu0 %v389
        %1387 = vmatprep.subr.bf16.mxu0 %v386
        %1388 = vmatpush1.bf16.msra.mxu0 %v385
        %1389 = vmatprep.subr.bf16.mxu0 %v382
        %1390 = vmatpush1.bf16.msra.mxu0 %v381
        %1391 = vmatprep.subr.bf16.mxu0 %v378
        %1392 = vmatpush1.bf16.msra.mxu0 %v377
        %1393 = vmatprep.subr.bf16.mxu0 0
        %1394 = vmatpush2.bf16.msra.mxu0 0
        %1395 = vmatprep.subr.bf16.mxu0 0
        %1396 = vmatpush2.bf16.msra.mxu0 0
        %1397 = vmatprep.subr.bf16.mxu0 0
        %1398 = vmatpush2.bf16.msra.mxu0 0
        %1399 = vmatprep.subr.bf16.mxu0 0
        %1400 = vmatpush2.bf16.msra.mxu0 0
        %1401 = vmatprep.subr.bf16.mxu0 0
        %1402 = vmatpush2.bf16.msra.mxu0 0
        %1403 = vmatprep.subr.bf16.mxu0 0
        %1404 = vmatpush2.bf16.msra.mxu0 0
        %1405 = vmatprep.subr.bf16.mxu0 0
        %1406 = vmatpush2.bf16.msra.mxu0 0
        %1407 = vmatprep.subr.bf16.mxu0 0
        %1408 = vmatpush2.bf16.msra.mxu0 0
        %1409 = vmatprep.mubr.bf16.mxu0 0
        %1410 = vmatmul.mubr.bf16.gmra.mxu0 %v1376
        %v1411 = vpop.f32.mrf.mxu0
        %v1412 = vadd.f32 0.0, %v1411
        %v1413 = vpop.f32.mrf.mxu0
        %v1414 = vadd.f32 0.0, %v1413
        %v1415 = vpop.f32.mrf.mxu0
        %v1416 = vadd.f32 0.0, %v1415
        %v1417 = vpop.f32.mrf.mxu0
        %v1418 = vadd.f32 0.0, %v1417
        %1419 = vdwg.mxu0
        %1420 = vmatprep.subr.bf16.mxu0 %v408
        %1421 = vmatpush1.bf16.msra.mxu0 %v407
        %1422 = vmatprep.subr.bf16.mxu0 %v404
        %1423 = vmatpush1.bf16.msra.mxu0 %v403
        %1424 = vmatprep.subr.bf16.mxu0 %v400
        %1425 = vmatpush1.bf16.msra.mxu0 %v399
        %1426 = vmatprep.subr.bf16.mxu0 %v396
        %1427 = vmatpush1.bf16.msra.mxu0 %v395
        %1428 = vmatprep.subr.bf16.mxu0 %v392
        %1429 = vmatpush1.bf16.msra.mxu0 %v391
        %1430 = vmatprep.subr.bf16.mxu0 %v388
        %1431 = vmatpush1.bf16.msra.mxu0 %v387
        %1432 = vmatprep.subr.bf16.mxu0 %v384
        %1433 = vmatpush1.bf16.msra.mxu0 %v383
        %1434 = vmatprep.subr.bf16.mxu0 %v380
        %1435 = vmatpush1.bf16.msra.mxu0 %v379
        %1436 = vmatprep.subr.bf16.mxu0 0
        %1437 = vmatpush2.bf16.msra.mxu0 0
        %1438 = vmatprep.subr.bf16.mxu0 0
        %1439 = vmatpush2.bf16.msra.mxu0 0
        %1440 = vmatprep.subr.bf16.mxu0 0
        %1441 = vmatpush2.bf16.msra.mxu0 0
        %1442 = vmatprep.subr.bf16.mxu0 0
        %1443 = vmatpush2.bf16.msra.mxu0 0
        %1444 = vmatprep.subr.bf16.mxu0 0
        %1445 = vmatpush2.bf16.msra.mxu0 0
        %1446 = vmatprep.subr.bf16.mxu0 0
        %1447 = vmatpush2.bf16.msra.mxu0 0
        %1448 = vmatprep.subr.bf16.mxu0 0
        %1449 = vmatpush2.bf16.msra.mxu0 0
        %1450 = vmatprep.subr.bf16.mxu0 0
        %1451 = vmatpush2.bf16.msra.mxu0 0
        %1452 = vmatprep.mubr.bf16.mxu0 0
        %1453 = vmatmul.mubr.bf16.gmra.mxu0 %v1376
        %v1454 = vpop.f32.mrf.mxu0
        %v1455 = vadd.f32 0.0, %v1454
        %v1456 = vpop.f32.mrf.mxu0
        %v1457 = vadd.f32 0.0, %v1456
        %v1458 = vpop.f32.mrf.mxu0
        %v1459 = vadd.f32 0.0, %v1458
        %v1460 = vpop.f32.mrf.mxu0
        %v1461 = vadd.f32 0.0, %v1460
        %1462 = vdwg.mxu0
        %v1463 = vadd.f32 %v1368, %v1412
        %v1464 = vadd.f32 %v1369, %v1414
        %v1465 = vadd.f32 %v1370, %v1455
        %v1466 = vadd.f32 %v1371, %v1457
        %v1467 = vadd.f32 %v1372, %v1416
        %v1468 = vadd.f32 %v1373, %v1418
        %v1469 = vadd.f32 %v1374, %v1459
        %v1470 = vadd.f32 %v1375, %v1461
        %v1471 = vxor.u32 %v1463, 2147483648
        %v1472 = vxor.u32 %v1467, 2147483648
        %v1473 = vmul.f32 %v1471, 1.442695
        %v1474 = vpow.pop %v1473
        %v1475 = vmul.f32 %v1472, 1.442695
        %v1476 = vpow.pop %v1475
        %v1477 = vadd.f32 %v1474, 1.0
        %v1478 = vadd.f32 %v1476, 1.0
        %v1479 = vrcp.pop %v1477
        %v1480 = vmul.f32 1.0, %v1479
        %v1481 = vrcp.pop %v1478
        %v1482 = vmul.f32 1.0, %v1481
        %v1483 = vxor.u32 %v1464, 2147483648
        %v1484 = vxor.u32 %v1468, 2147483648
        %v1485 = vmul.f32 %v1483, 1.442695
        %v1486 = vpow.pop %v1485
        %v1487 = vmul.f32 %v1484, 1.442695
        %v1488 = vpow.pop %v1487
        %v1489 = vadd.f32 %v1486, 1.0
        %v1490 = vadd.f32 %v1488, 1.0
        %v1491 = vrcp.pop %v1489
        %v1492 = vmul.f32 1.0, %v1491
        %v1493 = vrcp.pop %v1490
        %v1494 = vmul.f32 1.0, %v1493
        %v1495 = vtanh.pop %v1465
        %v1496 = vtanh.pop %v1469
        %v1497 = vxor.u32 %v1466, 2147483648
        %v1498 = vxor.u32 %v1470, 2147483648
        %v1499 = vmul.f32 %v1497, 1.442695
        %v1500 = vpow.pop %v1499
        %v1501 = vmul.f32 %v1498, 1.442695
        %v1502 = vpow.pop %v1501
        %v1503 = vadd.f32 %v1500, 1.0
        %v1504 = vadd.f32 %v1502, 1.0
        %v1505 = vrcp.pop %v1503
        %v1506 = vmul.f32 1.0, %v1505
        %v1507 = vrcp.pop %v1504
        %v1508 = vmul.f32 1.0, %v1507
        %v1509 = vmul.f32 %v1492, %v1357
        %v1510 = vmul.f32 %v1494, %v1358
        %v1511 = vmul.f32 %v1480, %v1495
        %v1512 = vmul.f32 %v1482, %v1496
        %v1513 = vadd.f32 %v1509, %v1511
        %v1514 = vadd.f32 %v1510, %v1512
        %v1515 = vtanh.pop %v1513
        %v1516 = vtanh.pop %v1514
        %v1517 = vmul.f32 %v1506, %v1515
        %v1518 = vmul.f32 %v1508, %v1516
        %s1519 = scalar_lea.vmem %s195, 224 [#allocation4]
        %v1520 = vld [vmem:[%s1519] sm:$0xff]
        %v1521 = vld [vmem:[%s1519 + $0x8] sm:$0xff]
        %v1522 = vld [vmem:[%s1519 + $0x10] sm:$0xff]
        %v1523 = vld [vmem:[%s1519 + $0x18] sm:$0xff]
        %v1524 = vunpack.c.l.bf16 %v1520
        %v1525 = vunpack.c.h.bf16 %v1520
        %v1526 = vunpack.c.l.bf16 %v1521
        %v1527 = vunpack.c.h.bf16 %v1521
        %v1528 = vunpack.c.l.bf16 %v1522
        %v1529 = vunpack.c.h.bf16 %v1522
        %v1530 = vunpack.c.l.bf16 %v1523
        %v1531 = vunpack.c.h.bf16 %v1523
        %v1532 = vpack.c.bf16 %v1518, %v1517
        %1533 = vmatprep.subr.bf16.mxu0 %v406
        %1534 = vmatpush1.bf16.msra.mxu0 %v405
        %1535 = vmatprep.subr.bf16.mxu0 %v402
        %1536 = vmatpush1.bf16.msra.mxu0 %v401
        %1537 = vmatprep.subr.bf16.mxu0 %v398
        %1538 = vmatpush1.bf16.msra.mxu0 %v397
        %1539 = vmatprep.subr.bf16.mxu0 %v394
        %1540 = vmatpush1.bf16.msra.mxu0 %v393
        %1541 = vmatprep.subr.bf16.mxu0 %v390
        %1542 = vmatpush1.bf16.msra.mxu0 %v389
        %1543 = vmatprep.subr.bf16.mxu0 %v386
        %1544 = vmatpush1.bf16.msra.mxu0 %v385
        %1545 = vmatprep.subr.bf16.mxu0 %v382
        %1546 = vmatpush1.bf16.msra.mxu0 %v381
        %1547 = vmatprep.subr.bf16.mxu0 %v378
        %1548 = vmatpush1.bf16.msra.mxu0 %v377
        %1549 = vmatprep.subr.bf16.mxu0 0
        %1550 = vmatpush2.bf16.msra.mxu0 0
        %1551 = vmatprep.subr.bf16.mxu0 0
        %1552 = vmatpush2.bf16.msra.mxu0 0
        %1553 = vmatprep.subr.bf16.mxu0 0
        %1554 = vmatpush2.bf16.msra.mxu0 0
        %1555 = vmatprep.subr.bf16.mxu0 0
        %1556 = vmatpush2.bf16.msra.mxu0 0
        %1557 = vmatprep.subr.bf16.mxu0 0
        %1558 = vmatpush2.bf16.msra.mxu0 0
        %1559 = vmatprep.subr.bf16.mxu0 0
        %1560 = vmatpush2.bf16.msra.mxu0 0
        %1561 = vmatprep.subr.bf16.mxu0 0
        %1562 = vmatpush2.bf16.msra.mxu0 0
        %1563 = vmatprep.subr.bf16.mxu0 0
        %1564 = vmatpush2.bf16.msra.mxu0 0
        %1565 = vmatprep.mubr.bf16.mxu0 0
        %1566 = vmatmul.mubr.bf16.gmra.mxu0 %v1532
        %v1567 = vpop.f32.mrf.mxu0
        %v1568 = vadd.f32 0.0, %v1567
        %v1569 = vpop.f32.mrf.mxu0
        %v1570 = vadd.f32 0.0, %v1569
        %v1571 = vpop.f32.mrf.mxu0
        %v1572 = vadd.f32 0.0, %v1571
        %v1573 = vpop.f32.mrf.mxu0
        %v1574 = vadd.f32 0.0, %v1573
        %1575 = vdwg.mxu0
        %1576 = vmatprep.subr.bf16.mxu0 %v408
        %1577 = vmatpush1.bf16.msra.mxu0 %v407
        %1578 = vmatprep.subr.bf16.mxu0 %v404
        %1579 = vmatpush1.bf16.msra.mxu0 %v403
        %1580 = vmatprep.subr.bf16.mxu0 %v400
        %1581 = vmatpush1.bf16.msra.mxu0 %v399
        %1582 = vmatprep.subr.bf16.mxu0 %v396
        %1583 = vmatpush1.bf16.msra.mxu0 %v395
        %1584 = vmatprep.subr.bf16.mxu0 %v392
        %1585 = vmatpush1.bf16.msra.mxu0 %v391
        %1586 = vmatprep.subr.bf16.mxu0 %v388
        %1587 = vmatpush1.bf16.msra.mxu0 %v387
        %1588 = vmatprep.subr.bf16.mxu0 %v384
        %1589 = vmatpush1.bf16.msra.mxu0 %v383
        %1590 = vmatprep.subr.bf16.mxu0 %v380
        %1591 = vmatpush1.bf16.msra.mxu0 %v379
        %1592 = vmatprep.subr.bf16.mxu0 0
        %1593 = vmatpush2.bf16.msra.mxu0 0
        %1594 = vmatprep.subr.bf16.mxu0 0
        %1595 = vmatpush2.bf16.msra.mxu0 0
        %1596 = vmatprep.subr.bf16.mxu0 0
        %1597 = vmatpush2.bf16.msra.mxu0 0
        %1598 = vmatprep.subr.bf16.mxu0 0
        %1599 = vmatpush2.bf16.msra.mxu0 0
        %1600 = vmatprep.subr.bf16.mxu0 0
        %1601 = vmatpush2.bf16.msra.mxu0 0
        %1602 = vmatprep.subr.bf16.mxu0 0
        %1603 = vmatpush2.bf16.msra.mxu0 0
        %1604 = vmatprep.subr.bf16.mxu0 0
        %1605 = vmatpush2.bf16.msra.mxu0 0
        %1606 = vmatprep.subr.bf16.mxu0 0
        %1607 = vmatpush2.bf16.msra.mxu0 0
        %1608 = vmatprep.mubr.bf16.mxu0 0
        %1609 = vmatmul.mubr.bf16.gmra.mxu0 %v1532
        %v1610 = vpop.f32.mrf.mxu0
        %v1611 = vadd.f32 0.0, %v1610
        %v1612 = vpop.f32.mrf.mxu0
        %v1613 = vadd.f32 0.0, %v1612
        %v1614 = vpop.f32.mrf.mxu0
        %v1615 = vadd.f32 0.0, %v1614
        %v1616 = vpop.f32.mrf.mxu0
        %v1617 = vadd.f32 0.0, %v1616
        %1618 = vdwg.mxu0
        %v1619 = vadd.f32 %v1524, %v1568
        %v1620 = vadd.f32 %v1525, %v1570
        %v1621 = vadd.f32 %v1526, %v1611
        %v1622 = vadd.f32 %v1527, %v1613
        %v1623 = vadd.f32 %v1528, %v1572
        %v1624 = vadd.f32 %v1529, %v1574
        %v1625 = vadd.f32 %v1530, %v1615
        %v1626 = vadd.f32 %v1531, %v1617
        %v1627 = vxor.u32 %v1619, 2147483648
        %v1628 = vxor.u32 %v1623, 2147483648
        %v1629 = vmul.f32 %v1627, 1.442695
        %v1630 = vpow.pop %v1629
        %v1631 = vmul.f32 %v1628, 1.442695
        %v1632 = vpow.pop %v1631
        %v1633 = vadd.f32 %v1630, 1.0
        %v1634 = vadd.f32 %v1632, 1.0
        %v1635 = vrcp.pop %v1633
        %v1636 = vmul.f32 1.0, %v1635
        %v1637 = vrcp.pop %v1634
        %v1638 = vmul.f32 1.0, %v1637
        %v1639 = vxor.u32 %v1620, 2147483648
        %v1640 = vxor.u32 %v1624, 2147483648
        %v1641 = vmul.f32 %v1639, 1.442695
        %v1642 = vpow.pop %v1641
        %v1643 = vmul.f32 %v1640, 1.442695
        %v1644 = vpow.pop %v1643
        %v1645 = vadd.f32 %v1642, 1.0
        %v1646 = vadd.f32 %v1644, 1.0
        %v1647 = vrcp.pop %v1645
        %v1648 = vmul.f32 1.0, %v1647
        %v1649 = vrcp.pop %v1646
        %v1650 = vmul.f32 1.0, %v1649
        %v1651 = vtanh.pop %v1621
        %v1652 = vtanh.pop %v1625
        %v1653 = vxor.u32 %v1622, 2147483648
        %v1654 = vxor.u32 %v1626, 2147483648
        %v1655 = vmul.f32 %v1653, 1.442695
        %v1656 = vpow.pop %v1655
        %v1657 = vmul.f32 %v1654, 1.442695
        %v1658 = vpow.pop %v1657
        %v1659 = vadd.f32 %v1656, 1.0
        %v1660 = vadd.f32 %v1658, 1.0
        %v1661 = vrcp.pop %v1659
        %v1662 = vmul.f32 1.0, %v1661
        %v1663 = vrcp.pop %v1660
        %v1664 = vmul.f32 1.0, %v1663
        %v1665 = vmul.f32 %v1648, %v1513
        %v1666 = vmul.f32 %v1650, %v1514
        %v1667 = vmul.f32 %v1636, %v1651
        %v1668 = vmul.f32 %v1638, %v1652
        %v1669 = vadd.f32 %v1665, %v1667
        %v1670 = vadd.f32 %v1666, %v1668
        %v1671 = vtanh.pop %v1669
        %v1672 = vtanh.pop %v1670
        %v1673 = vmul.f32 %v1662, %v1671
        %v1674 = vmul.f32 %v1664, %v1672
        %1675 = vst [vmem:[#allocation2] sm:$0xff] %v1673
        %1676 = vst [vmem:[#allocation2 + $0x8] sm:$0xff] %v1674
        %1677 = vst [vmem:[#allocation3] sm:$0xff] %v1669
        %1678 = vst [vmem:[#allocation3 + $0x8] sm:$0xff] %v1670
        %p1679 = scmp.eq.s32.totalorder %s25, 1
        // Predicated region
        $region41: #{tpu_custom_call.1} parent=27 // pred_check
          %p1680 = pneg %p1679
        $region42: #{tpu_custom_call.1} parent=27 // pred_check_branch
          %1682 = sbr.rel (%p1680) target = $region44
        $region43: #{tpu_custom_call.1} parent=27 // pred_region
          %v1683 = vpack.c.bf16 %v1674, %v1673
          %v1685 = vunpack.c.l.b16 %v1683
          %v1686 = vunpack.c.h.b16 %v1683
          %v1687 = vpack.c.b16 %v1685, %v1685
          %v1688 = vpack.c.b16 %v1686, %v1686
          %1691 = vst [vmem:[%s219] sm:$0xf] %v1687
          %1692 = vst [vmem:[%s219 + $0x4] sm:$0xf] %v1688
        $region44: #{tpu_custom_call.1} parent=27 // pred_fallthru
          _
        %s1693 = sand.u32 %s89, 1
        %s1694 = scalar_lea.sflag [#allocation6], %s1693
        %s1695 = sand.u32 %s89, 1
        %s1696 = smul.addr %s1695, 8
        %s1697 = scalar_lea.vmem [#allocation9], %s1696
        // Predicated region
        $region45: #{tpu_custom_call.1} parent=27 // pred_check
          %p1698 = pneg %p99
        $region46: #{tpu_custom_call.1} parent=27 // pred_check_branch
          %1700 = sbr.rel (%p1698) target = $region48
        $region47: #{tpu_custom_call.1} parent=27 // pred_region
          %s1701 = smul.u32 2, %s24
          %s1703 = ssub.s32 128, 128
          %1704 = vsyncadd %s1694, %s1703
          %s1705 = smul.addr %s1701, 64
          %s1706 = scalar_lea.hbm %s2, %s1705
          %s1707 = sshll.u32 %s1697, 4
          %s1708 = int_to_ptr.vmem [resolvable:$true] %s1707
          %1713 = dma.vmem_to_hbm [thread:$0]  %s1708, 128, %s1706, %s1694, 64, 64, 4
        $region48: #{tpu_custom_call.1} parent=27 // pred_fallthru
          _
      $region28: #{tpu_custom_call.1} parent=5 // pred_fallthru
        _
      %p1714 = scmp.le.s32.totalorder 2, %s15
      // Predicated region
      $region49: #{tpu_custom_call.1} parent=5 // pred_check
        %p1715 = pneg %p1714
      $region50: #{tpu_custom_call.1} parent=5 // pred_check_branch
        %1717 = sbr.rel (%p1715) target = $region52
      $region51: #{tpu_custom_call.1} parent=5 // pred_region
        %s1718 = ssub.s32 %s15, 2
        // Predicated region
        $region53: #{tpu_custom_call.1} parent=51 // pred_check
          %p1719 = pneg %p105
        $region54: #{tpu_custom_call.1} parent=51 // pred_check_branch
          %1721 = sbr.rel (%p1719) target = $region56
        $region55: #{tpu_custom_call.1} parent=51 // pred_region
          %s1722 = sand.u32 %s90, 1
          %s1723 = scalar_lea.sflag [#allocation6], %s1722
          %s1724 = sand.u32 %s90, 1
          %s1725 = smul.addr %s1724, 8
          %s1726 = scalar_lea.vmem [#allocation9], %s1725
          %1727 = dma.done %s1723, 128
        $region56: #{tpu_custom_call.1} parent=51 // pred_fallthru
          _
      $region52: #{tpu_custom_call.1} parent=5 // pred_fallthru
        _
    $region6: #{tpu_custom_call.1} parent=1 // loop_footer
      %s19 = sadd.s32 1, %s15
    $region7: #{tpu_custom_call.1} parent=1 // loop_footer_branch
      %14 = sbr.rel target = $region3
    $region8: #{tpu_custom_call.1} parent=1 // loop_exit
      _
    %1728 = vsyncpa [#allocation5], 1
    %s1729 = scalar_lea.sflag [#allocation5], 1
    %1730 = vsyncpa %s1729, 1
    %1731 = vsyncpa [#allocation8], 1
    %1732 = vsyncpa [#allocation6], 1
    %s1733 = scalar_lea.sflag [#allocation6], 1
    %1734 = vsyncpa %s1733, 1

</llo_original>
